<compile_context>
chip_gen: v7x
topology: tpu7x:2x2x1
jax: 0.10.0
libtpu: 0.0.40
codegen_flags: <defaults>
</compile_context>

<pallas_src>
import jax
import jax.numpy as jnp
from jax import lax
from jax.experimental import pallas as pl
from jax.experimental.pallas import tpu as pltpu

# Small shapes consistent with the forward pass.
B, T, DIN, H, DOUT = 2, 8, 4, 32, 4

# TPU-friendly padded shapes.
B_PAD = 8        # f32 sublane count
H_PAD = 128      # each gate occupies a full 128-lane span
DOUT_PAD = 128   # lane-dense output store


def seq2seq_kernel(x_ref, e_wih_ref, e_whh_ref, e_b_ref,
                   d_wih_ref, d_whh_ref, d_b_ref,
                   m_w_ref, m_b_ref, out_ref,
                   gx_s, hdec_s):
    HP4 = e_whh_ref.shape[1]      # 4 * H_PAD
    HP = HP4 // 4                 # H_PAD

    e_whh = e_whh_ref[...]
    d_wih = d_wih_ref[...]
    d_whh = d_whh_ref[...]

    # ---- (1) Encoder input projection for all T timesteps: one matmul, bias
    # folded in, stored off the recurrent path. ----
    gx_s[...] = (jnp.dot(x_ref[...], e_wih_ref[...],
                         preferred_element_type=jnp.float32)
                 + e_b_ref[...])

    def gate_act(gates):
        # Each gate sits in its own 128-lane span, so these are whole-vreg
        # slices (no cross-lane movement / masked VPU ops).
        i = jax.nn.sigmoid(gates[:, 0 * HP:1 * HP])
        f = jax.nn.sigmoid(gates[:, 1 * HP:2 * HP])
        g = jnp.tanh(gates[:, 2 * HP:3 * HP])
        o = jax.nn.sigmoid(gates[:, 3 * HP:4 * HP])
        return i, f, g, o

    # Zero initial hidden/cell state (PyTorch default when h0/c0 not given).
    h0 = jnp.zeros((B_PAD, HP), jnp.float32)
    c0 = jnp.zeros((B_PAD, HP), jnp.float32)

    # ---- (2) Encoder recurrence: only h @ W_hh on the serial chain. ----
    def enc_body(t, carry):
        h, c = carry
        row = pl.multiple_of(t * B_PAD, B_PAD)
        gates = (gx_s[pl.ds(row, B_PAD), :]
                 + jnp.dot(h, e_whh, preferred_element_type=jnp.float32))
        i, f, g, o = gate_act(gates)
        c = f * c + i * g
        h = o * jnp.tanh(c)
        return (h, c)

    h, c = lax.fori_loop(0, T, enc_body, (h0, c0), unroll=True)

    # decoder_input = encoder_output[:, -1] == final encoder hidden state h
    # (single-layer LSTM); decoder_hidden = (h1, c1) carried as (h, c).

    # Hoisted bias broadcast (done once, not per iteration).
    d_b = jnp.broadcast_to(d_b_ref[...], (B_PAD, HP4))

    # ---- (3) Decoder recurrence: stash hiddens to VMEM, no per-step MLP. ----
    def dec_body(t, carry):
        d_in, h, c = carry
        gates = (jnp.dot(d_in, d_wih, preferred_element_type=jnp.float32)
                 + jnp.dot(h, d_whh, preferred_element_type=jnp.float32)
                 + d_b)
        i, f, g, o = gate_act(gates)
        c = f * c + i * g
        h = o * jnp.tanh(c)
        row = pl.multiple_of(t * B_PAD, B_PAD)
        hdec_s[pl.ds(row, B_PAD), :] = h
        return (h, h, c)   # next decoder_input = decoder output

    _ = lax.fori_loop(0, T, dec_body, (h, h, c), unroll=True)

    # ---- (4) Per-step Linear hoisted out of the loop: one matmul + one
    # contiguous, lane-dense store. ----
    out_ref[...] = (jnp.dot(hdec_s[...], m_w_ref[...],
                            preferred_element_type=jnp.float32)
                    + m_b_ref[...])


def _pad_gate_cols(w, h):
    """(rows, 4*h) -> (rows, 4*H_PAD): gate k moves to lanes [k*H_PAD, k*H_PAD+h)."""
    rows = w.shape[0]
    w4 = w.reshape(rows, 4, h)
    out = jnp.zeros((rows, 4, H_PAD), w.dtype).at[:, :, :h].set(w4)
    return out.reshape(rows, 4 * H_PAD)


def _pad_rows(w, rows_pad):
    return jnp.zeros((rows_pad, w.shape[1]), w.dtype).at[:w.shape[0]].set(w)


def pad_params(p):
    """Host-side zero-padding into the lane/sublane-aligned kernel layout."""
    return {
        "e_wih": _pad_gate_cols(p["e_wih_t"], H),                    # (DIN, 4*H_PAD)
        "e_whh": _pad_rows(_pad_gate_cols(p["e_whh_t"], H), H_PAD),  # (H_PAD, 4*H_PAD)
        "e_b":   _pad_gate_cols(p["e_b"], H),                        # (1, 4*H_PAD)
        "d_wih": _pad_rows(_pad_gate_cols(p["d_wih_t"], H), H_PAD),
        "d_whh": _pad_rows(_pad_gate_cols(p["d_whh_t"], H), H_PAD),
        "d_b":   _pad_gate_cols(p["d_b"], H),
        "m_w":   jnp.zeros((H_PAD, DOUT_PAD), jnp.float32).at[:H, :DOUT].set(p["m_w_t"]),
        "m_b":   jnp.zeros((1, DOUT_PAD), jnp.float32).at[:, :DOUT].set(p["m_b"]),
    }


def seq2seq_forward(x, params):
    """x: (B, T, DIN) float32 -> (B, T, DOUT) float32."""
    pp = pad_params(params)
    x_tm = jnp.transpose(x, (1, 0, 2))                                  # (T, B, DIN)
    x_pad = jnp.zeros((T, B_PAD, DIN), jnp.float32).at[:, :B, :].set(x_tm)
    x_flat = x_pad.reshape(T * B_PAD, DIN)                              # time-major rows

    out_flat = pl.pallas_call(
        seq2seq_kernel,
        out_shape=jax.ShapeDtypeStruct((T * B_PAD, DOUT_PAD), jnp.float32),
        in_specs=[pl.BlockSpec(memory_space=pltpu.MemorySpace.VMEM)] * 9,
        out_specs=pl.BlockSpec(memory_space=pltpu.MemorySpace.VMEM),
        scratch_shapes=[
            pltpu.VMEM((T * B_PAD, 4 * H_PAD), jnp.float32),  # precomputed encoder x-gates
            pltpu.VMEM((T * B_PAD, H_PAD), jnp.float32),      # decoder hidden states
        ],
    )(x_flat,
      pp["e_wih"], pp["e_whh"], pp["e_b"],
      pp["d_wih"], pp["d_whh"], pp["d_b"],
      pp["m_w"], pp["m_b"])

    # Drop batch/lane padding before returning (B, T, DOUT).
    out = out_flat.reshape(T, B_PAD, DOUT_PAD)[:, :B, :DOUT]
    return jnp.transpose(out, (1, 0, 2))


def make_params(key):
    ks = jax.random.split(key, 8)
    s = 0.1
    return {
        # Encoder LSTM (weights stored transposed: x @ W_ih^T -> (DIN, 4H)).
        "e_wih_t": s * jax.random.normal(ks[0], (DIN, 4 * H), jnp.float32),
        "e_whh_t": s * jax.random.normal(ks[1], (H, 4 * H), jnp.float32),
        "e_b":     s * jax.random.normal(ks[2], (1, 4 * H), jnp.float32),  # b_ih + b_hh
        # Decoder LSTM.
        "d_wih_t": s * jax.random.normal(ks[3], (H, 4 * H), jnp.float32),
        "d_whh_t": s * jax.random.normal(ks[4], (H, 4 * H), jnp.float32),
        "d_b":     s * jax.random.normal(ks[5], (1, 4 * H), jnp.float32),
        # MLP (Linear H -> DOUT).
        "m_w_t":   s * jax.random.normal(ks[6], (H, DOUT), jnp.float32),
        "m_b":     s * jax.random.normal(ks[7], (1, DOUT), jnp.float32),
    }


def reference_forward(x, p):
    """Pure-JAX reference with identical semantics (for correctness check)."""
    def step(carry, x_t, wih, whh, b):
        h, c = carry
        gates = x_t @ wih + h @ whh + b
        i = jax.nn.sigmoid(gates[:, :H])
        f = jax.nn.sigmoid(gates[:, H:2 * H])
        g = jnp.tanh(gates[:, 2 * H:3 * H])
        o = jax.nn.sigmoid(gates[:, 3 * H:4 * H])
        c = f * c + i * g
        h = o * jnp.tanh(c)
        return (h, c), h

    h0 = jnp.zeros((B, H), jnp.float32)
    c0 = jnp.zeros((B, H), jnp.float32)
    (h1, c1), enc_out = lax.scan(
        lambda carry, xt: step(carry, xt, p["e_wih_t"], p["e_whh_t"], p["e_b"]),
        (h0, c0), jnp.transpose(x, (1, 0, 2)))
    dec_in = enc_out[-1]

    def dec_step(carry, _):
        d_in, h, c = carry
        (h, c), _ = step((h, c), d_in, p["d_wih_t"], p["d_whh_t"], p["d_b"])
        y = h @ p["m_w_t"] + p["m_b"]
        return (h, h, c), y

    _, ys = lax.scan(dec_step, (dec_in, h1, c1), None, length=T)
    return jnp.transpose(ys, (1, 0, 2))


if __name__ == "__main__":
    key = jax.random.PRNGKey(0)
    k_x, k_p = jax.random.split(key)
    x = jax.random.normal(k_x, (B, T, DIN), jnp.float32)
    params = make_params(k_p)

    out = seq2seq_forward(x, params)
    out = jax.block_until_ready(out)

    ref = jax.block_until_ready(reference_forward(x, params))
    assert out.shape == (B, T, DOUT)
    assert jnp.allclose(out, ref, atol=1e-5, rtol=1e-5), "mismatch vs reference"

    print("KERNEL_OK")
</pallas_src>

<mosaic_0001>
module attributes {stable_mosaic.version = 11 : i64} {
  func.func @seq2seq_kernel(%arg0: memref<64x4xf32, #tpu.memory_space<vmem>>, %arg1: memref<4x512xf32, #tpu.memory_space<vmem>>, %arg2: memref<128x512xf32, #tpu.memory_space<vmem>>, %arg3: memref<1x512xf32, #tpu.memory_space<vmem>>, %arg4: memref<128x512xf32, #tpu.memory_space<vmem>>, %arg5: memref<128x512xf32, #tpu.memory_space<vmem>>, %arg6: memref<1x512xf32, #tpu.memory_space<vmem>>, %arg7: memref<128x128xf32, #tpu.memory_space<vmem>>, %arg8: memref<1x128xf32, #tpu.memory_space<vmem>>, %arg9: memref<64x128xf32, #tpu.memory_space<vmem>>, %arg10: memref<64x512xf32, #tpu.memory_space<vmem>>, %arg11: memref<64x128xf32, #tpu.memory_space<vmem>>) attributes {dimension_semantics = [], scalar_prefetch = 0 : i64, scratch_operands = 2 : i64, tpu.core_type = #tpu.core_type<tc>} {
    %c0 = arith.constant 0 : index
    %c0_0 = arith.constant 0 : index
    %0 = vector.load %arg2[%c0, %c0_0] : memref<128x512xf32, #tpu.memory_space<vmem>>, vector<128x512xf32>
    %c0_1 = arith.constant 0 : index
    %c0_2 = arith.constant 0 : index
    %1 = vector.load %arg4[%c0_1, %c0_2] : memref<128x512xf32, #tpu.memory_space<vmem>>, vector<128x512xf32>
    %c0_3 = arith.constant 0 : index
    %c0_4 = arith.constant 0 : index
    %2 = vector.load %arg5[%c0_3, %c0_4] : memref<128x512xf32, #tpu.memory_space<vmem>>, vector<128x512xf32>
    %c0_5 = arith.constant 0 : index
    %c0_6 = arith.constant 0 : index
    %3 = vector.load %arg0[%c0_5, %c0_6] : memref<64x4xf32, #tpu.memory_space<vmem>>, vector<64x4xf32>
    %c0_7 = arith.constant 0 : index
    %c0_8 = arith.constant 0 : index
    %4 = vector.load %arg1[%c0_7, %c0_8] : memref<4x512xf32, #tpu.memory_space<vmem>>, vector<4x512xf32>
    %cst = arith.constant dense<0.000000e+00> : vector<64x512xf32>
    %5 = tpu.matmul %3, %4, %cst {dimension_numbers = #tpu.dot_dimension_numbers<[1], [0], [0], [1], [0, 0, 1, 1], [], []>} : vector<64x4xf32>, vector<4x512xf32>, vector<64x512xf32> -> vector<64x512xf32>
    %c0_9 = arith.constant 0 : index
    %c0_10 = arith.constant 0 : index
    %6 = vector.load %arg3[%c0_9, %c0_10] : memref<1x512xf32, #tpu.memory_space<vmem>>, vector<1x512xf32>
    %7 = vector.broadcast %6 : vector<1x512xf32> to vector<64x512xf32>
    %8 = arith.addf %5, %7 : vector<64x512xf32>
    %c0_11 = arith.constant 0 : index
    %c0_12 = arith.constant 0 : index
    %9 = vector.load %arg10[%c0_11, %c0_12] : memref<64x512xf32, #tpu.memory_space<vmem>>, vector<64x512xf32>
    tpu.vector_store %arg10[%c0_11, %c0_12], %8 {strides = array<i32>} : memref<64x512xf32, #tpu.memory_space<vmem>>, vector<64x512xf32>,
    %cst_13 = arith.constant 0.000000e+00 : f32
    %10 = vector.broadcast %cst_13 : f32 to vector<8x128xf32>
    %cst_14 = arith.constant 0.000000e+00 : f32
    %11 = vector.broadcast %cst_14 : f32 to vector<8x128xf32>
    %c0_i32 = arith.constant 0 : i32
    %c8_i32 = arith.constant 8 : i32
    %12 = arith.muli %c0_i32, %c8_i32 : i32
    %13 = tpu.assume_multiple %12, 8 : i32
    %14 = arith.index_cast %13 : i32 to index
    %c0_15 = arith.constant 0 : index
    %15 = vector.load %arg10[%14, %c0_15] : memref<64x512xf32, #tpu.memory_space<vmem>>, vector<8x512xf32>
    %cst_16 = arith.constant dense<0.000000e+00> : vector<8x512xf32>
    %16 = tpu.matmul %10, %0, %cst_16 {dimension_numbers = #tpu.dot_dimension_numbers<[1], [0], [0], [1], [0, 0, 1, 1], [], []>} : vector<8x128xf32>, vector<128x512xf32>, vector<8x512xf32> -> vector<8x512xf32>
    %17 = arith.addf %15, %16 : vector<8x512xf32>
    %18 = vector.extract_strided_slice %17 {offsets = [0, 0], sizes = [8, 128], strides = [1, 1]} : vector<8x512xf32> to vector<8x128xf32>
    %19 = arith.negf %18 : vector<8x128xf32>
    %20 = math.exp %19 : vector<8x128xf32>
    %cst_17 = arith.constant 1.000000e+00 : f32
    %21 = vector.broadcast %cst_17 : f32 to vector<8x128xf32>
    %22 = arith.addf %21, %20 : vector<8x128xf32>
    %23 = arith.divf %21, %22 : vector<8x128xf32>
    %24 = vector.extract_strided_slice %17 {offsets = [0, 128], sizes = [8, 128], strides = [1, 1]} : vector<8x512xf32> to vector<8x128xf32>
    %25 = arith.negf %24 : vector<8x128xf32>
    %26 = math.exp %25 : vector<8x128xf32>
    %cst_18 = arith.constant 1.000000e+00 : f32
    %27 = vector.broadcast %cst_18 : f32 to vector<8x128xf32>
    %28 = arith.addf %27, %26 : vector<8x128xf32>
    %29 = arith.divf %27, %28 : vector<8x128xf32>
    %30 = vector.extract_strided_slice %17 {offsets = [0, 256], sizes = [8, 128], strides = [1, 1]} : vector<8x512xf32> to vector<8x128xf32>
    %31 = math.tanh %30 : vector<8x128xf32>
    %32 = vector.extract_strided_slice %17 {offsets = [0, 384], sizes = [8, 128], strides = [1, 1]} : vector<8x512xf32> to vector<8x128xf32>
    %33 = arith.negf %32 : vector<8x128xf32>
    %34 = math.exp %33 : vector<8x128xf32>
    %cst_19 = arith.constant 1.000000e+00 : f32
    %35 = vector.broadcast %cst_19 : f32 to vector<8x128xf32>
    %36 = arith.addf %35, %34 : vector<8x128xf32>
    %37 = arith.divf %35, %36 : vector<8x128xf32>
    %38 = arith.mulf %29, %11 : vector<8x128xf32>
    %39 = arith.mulf %23, %31 : vector<8x128xf32>
    %40 = arith.addf %38, %39 : vector<8x128xf32>
    %41 = math.tanh %40 : vector<8x128xf32>
    %42 = arith.mulf %37, %41 : vector<8x128xf32>
    %c1_i32 = arith.constant 1 : i32
    %c8_i32_20 = arith.constant 8 : i32
    %43 = arith.muli %c1_i32, %c8_i32_20 : i32
    %44 = tpu.assume_multiple %43, 8 : i32
    %45 = arith.index_cast %44 : i32 to index
    %c0_21 = arith.constant 0 : index
    %46 = vector.load %arg10[%45, %c0_21] : memref<64x512xf32, #tpu.memory_space<vmem>>, vector<8x512xf32>
    %cst_22 = arith.constant dense<0.000000e+00> : vector<8x512xf32>
    %47 = tpu.matmul %42, %0, %cst_22 {dimension_numbers = #tpu.dot_dimension_numbers<[1], [0], [0], [1], [0, 0, 1, 1], [], []>} : vector<8x128xf32>, vector<128x512xf32>, vector<8x512xf32> -> vector<8x512xf32>
    %48 = arith.addf %46, %47 : vector<8x512xf32>
    %49 = vector.extract_strided_slice %48 {offsets = [0, 0], sizes = [8, 128], strides = [1, 1]} : vector<8x512xf32> to vector<8x128xf32>
    %50 = arith.negf %49 : vector<8x128xf32>
    %51 = math.exp %50 : vector<8x128xf32>
    %cst_23 = arith.constant 1.000000e+00 : f32
    %52 = vector.broadcast %cst_23 : f32 to vector<8x128xf32>
    %53 = arith.addf %52, %51 : vector<8x128xf32>
    %54 = arith.divf %52, %53 : vector<8x128xf32>
    %55 = vector.extract_strided_slice %48 {offsets = [0, 128], sizes = [8, 128], strides = [1, 1]} : vector<8x512xf32> to vector<8x128xf32>
    %56 = arith.negf %55 : vector<8x128xf32>
    %57 = math.exp %56 : vector<8x128xf32>
    %cst_24 = arith.constant 1.000000e+00 : f32
    %58 = vector.broadcast %cst_24 : f32 to vector<8x128xf32>
    %59 = arith.addf %58, %57 : vector<8x128xf32>
    %60 = arith.divf %58, %59 : vector<8x128xf32>
    %61 = vector.extract_strided_slice %48 {offsets = [0, 256], sizes = [8, 128], strides = [1, 1]} : vector<8x512xf32> to vector<8x128xf32>
    %62 = math.tanh %61 : vector<8x128xf32>
    %63 = vector.extract_strided_slice %48 {offsets = [0, 384], sizes = [8, 128], strides = [1, 1]} : vector<8x512xf32> to vector<8x128xf32>
    %64 = arith.negf %63 : vector<8x128xf32>
    %65 = math.exp %64 : vector<8x128xf32>
    %cst_25 = arith.constant 1.000000e+00 : f32
    %66 = vector.broadcast %cst_25 : f32 to vector<8x128xf32>
    %67 = arith.addf %66, %65 : vector<8x128xf32>
    %68 = arith.divf %66, %67 : vector<8x128xf32>
    %69 = arith.mulf %60, %40 : vector<8x128xf32>
    %70 = arith.mulf %54, %62 : vector<8x128xf32>
    %71 = arith.addf %69, %70 : vector<8x128xf32>
    %72 = math.tanh %71 : vector<8x128xf32>
    %73 = arith.mulf %68, %72 : vector<8x128xf32>
    %c2_i32 = arith.constant 2 : i32
    %c8_i32_26 = arith.constant 8 : i32
    %74 = arith.muli %c2_i32, %c8_i32_26 : i32
    %75 = tpu.assume_multiple %74, 8 : i32
    %76 = arith.index_cast %75 : i32 to index
    %c0_27 = arith.constant 0 : index
    %77 = vector.load %arg10[%76, %c0_27] : memref<64x512xf32, #tpu.memory_space<vmem>>, vector<8x512xf32>
    %cst_28 = arith.constant dense<0.000000e+00> : vector<8x512xf32>
    %78 = tpu.matmul %73, %0, %cst_28 {dimension_numbers = #tpu.dot_dimension_numbers<[1], [0], [0], [1], [0, 0, 1, 1], [], []>} : vector<8x128xf32>, vector<128x512xf32>, vector<8x512xf32> -> vector<8x512xf32>
    %79 = arith.addf %77, %78 : vector<8x512xf32>
    %80 = vector.extract_strided_slice %79 {offsets = [0, 0], sizes = [8, 128], strides = [1, 1]} : vector<8x512xf32> to vector<8x128xf32>
    %81 = arith.negf %80 : vector<8x128xf32>
    %82 = math.exp %81 : vector<8x128xf32>
    %cst_29 = arith.constant 1.000000e+00 : f32
    %83 = vector.broadcast %cst_29 : f32 to vector<8x128xf32>
    %84 = arith.addf %83, %82 : vector<8x128xf32>
    %85 = arith.divf %83, %84 : vector<8x128xf32>
    %86 = vector.extract_strided_slice %79 {offsets = [0, 128], sizes = [8, 128], strides = [1, 1]} : vector<8x512xf32> to vector<8x128xf32>
    %87 = arith.negf %86 : vector<8x128xf32>
    %88 = math.exp %87 : vector<8x128xf32>
    %cst_30 = arith.constant 1.000000e+00 : f32
    %89 = vector.broadcast %cst_30 : f32 to vector<8x128xf32>
    %90 = arith.addf %89, %88 : vector<8x128xf32>
    %91 = arith.divf %89, %90 : vector<8x128xf32>
    %92 = vector.extract_strided_slice %79 {offsets = [0, 256], sizes = [8, 128], strides = [1, 1]} : vector<8x512xf32> to vector<8x128xf32>
    %93 = math.tanh %92 : vector<8x128xf32>
    %94 = vector.extract_strided_slice %79 {offsets = [0, 384], sizes = [8, 128], strides = [1, 1]} : vector<8x512xf32> to vector<8x128xf32>
    %95 = arith.negf %94 : vector<8x128xf32>
    %96 = math.exp %95 : vector<8x128xf32>
    %cst_31 = arith.constant 1.000000e+00 : f32
    %97 = vector.broadcast %cst_31 : f32 to vector<8x128xf32>
    %98 = arith.addf %97, %96 : vector<8x128xf32>
    %99 = arith.divf %97, %98 : vector<8x128xf32>
    %100 = arith.mulf %91, %71 : vector<8x128xf32>
    %101 = arith.mulf %85, %93 : vector<8x128xf32>
    %102 = arith.addf %100, %101 : vector<8x128xf32>
    %103 = math.tanh %102 : vector<8x128xf32>
    %104 = arith.mulf %99, %103 : vector<8x128xf32>
    %c3_i32 = arith.constant 3 : i32
    %c8_i32_32 = arith.constant 8 : i32
    %105 = arith.muli %c3_i32, %c8_i32_32 : i32
    %106 = tpu.assume_multiple %105, 8 : i32
    %107 = arith.index_cast %106 : i32 to index
    %c0_33 = arith.constant 0 : index
    %108 = vector.load %arg10[%107, %c0_33] : memref<64x512xf32, #tpu.memory_space<vmem>>, vector<8x512xf32>
    %cst_34 = arith.constant dense<0.000000e+00> : vector<8x512xf32>
    %109 = tpu.matmul %104, %0, %cst_34 {dimension_numbers = #tpu.dot_dimension_numbers<[1], [0], [0], [1], [0, 0, 1, 1], [], []>} : vector<8x128xf32>, vector<128x512xf32>, vector<8x512xf32> -> vector<8x512xf32>
    %110 = arith.addf %108, %109 : vector<8x512xf32>
    %111 = vector.extract_strided_slice %110 {offsets = [0, 0], sizes = [8, 128], strides = [1, 1]} : vector<8x512xf32> to vector<8x128xf32>
    %112 = arith.negf %111 : vector<8x128xf32>
    %113 = math.exp %112 : vector<8x128xf32>
    %cst_35 = arith.constant 1.000000e+00 : f32
    %114 = vector.broadcast %cst_35 : f32 to vector<8x128xf32>
    %115 = arith.addf %114, %113 : vector<8x128xf32>
    %116 = arith.divf %114, %115 : vector<8x128xf32>
    %117 = vector.extract_strided_slice %110 {offsets = [0, 128], sizes = [8, 128], strides = [1, 1]} : vector<8x512xf32> to vector<8x128xf32>
    %118 = arith.negf %117 : vector<8x128xf32>
    %119 = math.exp %118 : vector<8x128xf32>
    %cst_36 = arith.constant 1.000000e+00 : f32
    %120 = vector.broadcast %cst_36 : f32 to vector<8x128xf32>
    %121 = arith.addf %120, %119 : vector<8x128xf32>
    %122 = arith.divf %120, %121 : vector<8x128xf32>
    %123 = vector.extract_strided_slice %110 {offsets = [0, 256], sizes = [8, 128], strides = [1, 1]} : vector<8x512xf32> to vector<8x128xf32>
    %124 = math.tanh %123 : vector<8x128xf32>
    %125 = vector.extract_strided_slice %110 {offsets = [0, 384], sizes = [8, 128], strides = [1, 1]} : vector<8x512xf32> to vector<8x128xf32>
    %126 = arith.negf %125 : vector<8x128xf32>
    %127 = math.exp %126 : vector<8x128xf32>
    %cst_37 = arith.constant 1.000000e+00 : f32
    %128 = vector.broadcast %cst_37 : f32 to vector<8x128xf32>
    %129 = arith.addf %128, %127 : vector<8x128xf32>
    %130 = arith.divf %128, %129 : vector<8x128xf32>
    %131 = arith.mulf %122, %102 : vector<8x128xf32>
    %132 = arith.mulf %116, %124 : vector<8x128xf32>
    %133 = arith.addf %131, %132 : vector<8x128xf32>
    %134 = math.tanh %133 : vector<8x128xf32>
    %135 = arith.mulf %130, %134 : vector<8x128xf32>
    %c4_i32 = arith.constant 4 : i32
    %c8_i32_38 = arith.constant 8 : i32
    %136 = arith.muli %c4_i32, %c8_i32_38 : i32
    %137 = tpu.assume_multiple %136, 8 : i32
    %138 = arith.index_cast %137 : i32 to index
    %c0_39 = arith.constant 0 : index
    %139 = vector.load %arg10[%138, %c0_39] : memref<64x512xf32, #tpu.memory_space<vmem>>, vector<8x512xf32>
    %cst_40 = arith.constant dense<0.000000e+00> : vector<8x512xf32>
    %140 = tpu.matmul %135, %0, %cst_40 {dimension_numbers = #tpu.dot_dimension_numbers<[1], [0], [0], [1], [0, 0, 1, 1], [], []>} : vector<8x128xf32>, vector<128x512xf32>, vector<8x512xf32> -> vector<8x512xf32>
    %141 = arith.addf %139, %140 : vector<8x512xf32>
    %142 = vector.extract_strided_slice %141 {offsets = [0, 0], sizes = [8, 128], strides = [1, 1]} : vector<8x512xf32> to vector<8x128xf32>
    %143 = arith.negf %142 : vector<8x128xf32>
    %144 = math.exp %143 : vector<8x128xf32>
    %cst_41 = arith.constant 1.000000e+00 : f32
    %145 = vector.broadcast %cst_41 : f32 to vector<8x128xf32>
    %146 = arith.addf %145, %144 : vector<8x128xf32>
    %147 = arith.divf %145, %146 : vector<8x128xf32>
    %148 = vector.extract_strided_slice %141 {offsets = [0, 128], sizes = [8, 128], strides = [1, 1]} : vector<8x512xf32> to vector<8x128xf32>
    %149 = arith.negf %148 : vector<8x128xf32>
    %150 = math.exp %149 : vector<8x128xf32>
    %cst_42 = arith.constant 1.000000e+00 : f32
    %151 = vector.broadcast %cst_42 : f32 to vector<8x128xf32>
    %152 = arith.addf %151, %150 : vector<8x128xf32>
    %153 = arith.divf %151, %152 : vector<8x128xf32>
    %154 = vector.extract_strided_slice %141 {offsets = [0, 256], sizes = [8, 128], strides = [1, 1]} : vector<8x512xf32> to vector<8x128xf32>
    %155 = math.tanh %154 : vector<8x128xf32>
    %156 = vector.extract_strided_slice %141 {offsets = [0, 384], sizes = [8, 128], strides = [1, 1]} : vector<8x512xf32> to vector<8x128xf32>
    %157 = arith.negf %156 : vector<8x128xf32>
    %158 = math.exp %157 : vector<8x128xf32>
    %cst_43 = arith.constant 1.000000e+00 : f32
    %159 = vector.broadcast %cst_43 : f32 to vector<8x128xf32>
    %160 = arith.addf %159, %158 : vector<8x128xf32>
    %161 = arith.divf %159, %160 : vector<8x128xf32>
    %162 = arith.mulf %153, %133 : vector<8x128xf32>
    %163 = arith.mulf %147, %155 : vector<8x128xf32>
    %164 = arith.addf %162, %163 : vector<8x128xf32>
    %165 = math.tanh %164 : vector<8x128xf32>
    %166 = arith.mulf %161, %165 : vector<8x128xf32>
    %c5_i32 = arith.constant 5 : i32
    %c8_i32_44 = arith.constant 8 : i32
    %167 = arith.muli %c5_i32, %c8_i32_44 : i32
    %168 = tpu.assume_multiple %167, 8 : i32
    %169 = arith.index_cast %168 : i32 to index
    %c0_45 = arith.constant 0 : index
    %170 = vector.load %arg10[%169, %c0_45] : memref<64x512xf32, #tpu.memory_space<vmem>>, vector<8x512xf32>
    %cst_46 = arith.constant dense<0.000000e+00> : vector<8x512xf32>
    %171 = tpu.matmul %166, %0, %cst_46 {dimension_numbers = #tpu.dot_dimension_numbers<[1], [0], [0], [1], [0, 0, 1, 1], [], []>} : vector<8x128xf32>, vector<128x512xf32>, vector<8x512xf32> -> vector<8x512xf32>
    %172 = arith.addf %170, %171 : vector<8x512xf32>
    %173 = vector.extract_strided_slice %172 {offsets = [0, 0], sizes = [8, 128], strides = [1, 1]} : vector<8x512xf32> to vector<8x128xf32>
    %174 = arith.negf %173 : vector<8x128xf32>
    %175 = math.exp %174 : vector<8x128xf32>
    %cst_47 = arith.constant 1.000000e+00 : f32
    %176 = vector.broadcast %cst_47 : f32 to vector<8x128xf32>
    %177 = arith.addf %176, %175 : vector<8x128xf32>
    %178 = arith.divf %176, %177 : vector<8x128xf32>
    %179 = vector.extract_strided_slice %172 {offsets = [0, 128], sizes = [8, 128], strides = [1, 1]} : vector<8x512xf32> to vector<8x128xf32>
    %180 = arith.negf %179 : vector<8x128xf32>
    %181 = math.exp %180 : vector<8x128xf32>
    %cst_48 = arith.constant 1.000000e+00 : f32
    %182 = vector.broadcast %cst_48 : f32 to vector<8x128xf32>
    %183 = arith.addf %182, %181 : vector<8x128xf32>
    %184 = arith.divf %182, %183 : vector<8x128xf32>
    %185 = vector.extract_strided_slice %172 {offsets = [0, 256], sizes = [8, 128], strides = [1, 1]} : vector<8x512xf32> to vector<8x128xf32>
    %186 = math.tanh %185 : vector<8x128xf32>
    %187 = vector.extract_strided_slice %172 {offsets = [0, 384], sizes = [8, 128], strides = [1, 1]} : vector<8x512xf32> to vector<8x128xf32>
    %188 = arith.negf %187 : vector<8x128xf32>
    %189 = math.exp %188 : vector<8x128xf32>
    %cst_49 = arith.constant 1.000000e+00 : f32
    %190 = vector.broadcast %cst_49 : f32 to vector<8x128xf32>
    %191 = arith.addf %190, %189 : vector<8x128xf32>
    %192 = arith.divf %190, %191 : vector<8x128xf32>
    %193 = arith.mulf %184, %164 : vector<8x128xf32>
    %194 = arith.mulf %178, %186 : vector<8x128xf32>
    %195 = arith.addf %193, %194 : vector<8x128xf32>
    %196 = math.tanh %195 : vector<8x128xf32>
    %197 = arith.mulf %192, %196 : vector<8x128xf32>
    %c6_i32 = arith.constant 6 : i32
    %c8_i32_50 = arith.constant 8 : i32
    %198 = arith.muli %c6_i32, %c8_i32_50 : i32
    %199 = tpu.assume_multiple %198, 8 : i32
    %200 = arith.index_cast %199 : i32 to index
    %c0_51 = arith.constant 0 : index
    %201 = vector.load %arg10[%200, %c0_51] : memref<64x512xf32, #tpu.memory_space<vmem>>, vector<8x512xf32>
    %cst_52 = arith.constant dense<0.000000e+00> : vector<8x512xf32>
    %202 = tpu.matmul %197, %0, %cst_52 {dimension_numbers = #tpu.dot_dimension_numbers<[1], [0], [0], [1], [0, 0, 1, 1], [], []>} : vector<8x128xf32>, vector<128x512xf32>, vector<8x512xf32> -> vector<8x512xf32>
    %203 = arith.addf %201, %202 : vector<8x512xf32>
    %204 = vector.extract_strided_slice %203 {offsets = [0, 0], sizes = [8, 128], strides = [1, 1]} : vector<8x512xf32> to vector<8x128xf32>
    %205 = arith.negf %204 : vector<8x128xf32>
    %206 = math.exp %205 : vector<8x128xf32>
    %cst_53 = arith.constant 1.000000e+00 : f32
    %207 = vector.broadcast %cst_53 : f32 to vector<8x128xf32>
    %208 = arith.addf %207, %206 : vector<8x128xf32>
    %209 = arith.divf %207, %208 : vector<8x128xf32>
    %210 = vector.extract_strided_slice %203 {offsets = [0, 128], sizes = [8, 128], strides = [1, 1]} : vector<8x512xf32> to vector<8x128xf32>
    %211 = arith.negf %210 : vector<8x128xf32>
    %212 = math.exp %211 : vector<8x128xf32>
    %cst_54 = arith.constant 1.000000e+00 : f32
    %213 = vector.broadcast %cst_54 : f32 to vector<8x128xf32>
    %214 = arith.addf %213, %212 : vector<8x128xf32>
    %215 = arith.divf %213, %214 : vector<8x128xf32>
    %216 = vector.extract_strided_slice %203 {offsets = [0, 256], sizes = [8, 128], strides = [1, 1]} : vector<8x512xf32> to vector<8x128xf32>
    %217 = math.tanh %216 : vector<8x128xf32>
    %218 = vector.extract_strided_slice %203 {offsets = [0, 384], sizes = [8, 128], strides = [1, 1]} : vector<8x512xf32> to vector<8x128xf32>
    %219 = arith.negf %218 : vector<8x128xf32>
    %220 = math.exp %219 : vector<8x128xf32>
    %cst_55 = arith.constant 1.000000e+00 : f32
    %221 = vector.broadcast %cst_55 : f32 to vector<8x128xf32>
    %222 = arith.addf %221, %220 : vector<8x128xf32>
    %223 = arith.divf %221, %222 : vector<8x128xf32>
    %224 = arith.mulf %215, %195 : vector<8x128xf32>
    %225 = arith.mulf %209, %217 : vector<8x128xf32>
    %226 = arith.addf %224, %225 : vector<8x128xf32>
    %227 = math.tanh %226 : vector<8x128xf32>
    %228 = arith.mulf %223, %227 : vector<8x128xf32>
    %c7_i32 = arith.constant 7 : i32
    %c8_i32_56 = arith.constant 8 : i32
    %229 = arith.muli %c7_i32, %c8_i32_56 : i32
    %230 = tpu.assume_multiple %229, 8 : i32
    %231 = arith.index_cast %230 : i32 to index
    %c0_57 = arith.constant 0 : index
    %232 = vector.load %arg10[%231, %c0_57] : memref<64x512xf32, #tpu.memory_space<vmem>>, vector<8x512xf32>
    %cst_58 = arith.constant dense<0.000000e+00> : vector<8x512xf32>
    %233 = tpu.matmul %228, %0, %cst_58 {dimension_numbers = #tpu.dot_dimension_numbers<[1], [0], [0], [1], [0, 0, 1, 1], [], []>} : vector<8x128xf32>, vector<128x512xf32>, vector<8x512xf32> -> vector<8x512xf32>
    %234 = arith.addf %232, %233 : vector<8x512xf32>
    %235 = vector.extract_strided_slice %234 {offsets = [0, 0], sizes = [8, 128], strides = [1, 1]} : vector<8x512xf32> to vector<8x128xf32>
    %236 = arith.negf %235 : vector<8x128xf32>
    %237 = math.exp %236 : vector<8x128xf32>
    %cst_59 = arith.constant 1.000000e+00 : f32
    %238 = vector.broadcast %cst_59 : f32 to vector<8x128xf32>
    %239 = arith.addf %238, %237 : vector<8x128xf32>
    %240 = arith.divf %238, %239 : vector<8x128xf32>
    %241 = vector.extract_strided_slice %234 {offsets = [0, 128], sizes = [8, 128], strides = [1, 1]} : vector<8x512xf32> to vector<8x128xf32>
    %242 = arith.negf %241 : vector<8x128xf32>
    %243 = math.exp %242 : vector<8x128xf32>
    %cst_60 = arith.constant 1.000000e+00 : f32
    %244 = vector.broadcast %cst_60 : f32 to vector<8x128xf32>
    %245 = arith.addf %244, %243 : vector<8x128xf32>
    %246 = arith.divf %244, %245 : vector<8x128xf32>
    %247 = vector.extract_strided_slice %234 {offsets = [0, 256], sizes = [8, 128], strides = [1, 1]} : vector<8x512xf32> to vector<8x128xf32>
    %248 = math.tanh %247 : vector<8x128xf32>
    %249 = vector.extract_strided_slice %234 {offsets = [0, 384], sizes = [8, 128], strides = [1, 1]} : vector<8x512xf32> to vector<8x128xf32>
    %250 = arith.negf %249 : vector<8x128xf32>
    %251 = math.exp %250 : vector<8x128xf32>
    %cst_61 = arith.constant 1.000000e+00 : f32
    %252 = vector.broadcast %cst_61 : f32 to vector<8x128xf32>
    %253 = arith.addf %252, %251 : vector<8x128xf32>
    %254 = arith.divf %252, %253 : vector<8x128xf32>
    %255 = arith.mulf %246, %226 : vector<8x128xf32>
    %256 = arith.mulf %240, %248 : vector<8x128xf32>
    %257 = arith.addf %255, %256 : vector<8x128xf32>
    %258 = math.tanh %257 : vector<8x128xf32>
    %259 = arith.mulf %254, %258 : vector<8x128xf32>
    %c8_i32_62 = arith.constant 8 : i32
    %c0_63 = arith.constant 0 : index
    %c0_64 = arith.constant 0 : index
    %260 = vector.load %arg6[%c0_63, %c0_64] : memref<1x512xf32, #tpu.memory_space<vmem>>, vector<1x512xf32>
    %261 = vector.shape_cast %260 : vector<1x512xf32> to vector<1x512xf32>
    %262 = vector.broadcast %261 : vector<1x512xf32> to vector<8x512xf32>
    %c0_i32_65 = arith.constant 0 : i32
    %cst_66 = arith.constant dense<0.000000e+00> : vector<8x512xf32>
    %263 = tpu.matmul %259, %1, %cst_66 {dimension_numbers = #tpu.dot_dimension_numbers<[1], [0], [0], [1], [0, 0, 1, 1], [], []>} : vector<8x128xf32>, vector<128x512xf32>, vector<8x512xf32> -> vector<8x512xf32>
    %cst_67 = arith.constant dense<0.000000e+00> : vector<8x512xf32>
    %264 = tpu.matmul %259, %2, %cst_67 {dimension_numbers = #tpu.dot_dimension_numbers<[1], [0], [0], [1], [0, 0, 1, 1], [], []>} : vector<8x128xf32>, vector<128x512xf32>, vector<8x512xf32> -> vector<8x512xf32>
    %265 = arith.addf %263, %264 : vector<8x512xf32>
    %266 = arith.addf %265, %262 : vector<8x512xf32>
    %267 = vector.extract_strided_slice %266 {offsets = [0, 0], sizes = [8, 128], strides = [1, 1]} : vector<8x512xf32> to vector<8x128xf32>
    %268 = arith.negf %267 : vector<8x128xf32>
    %269 = math.exp %268 : vector<8x128xf32>
    %cst_68 = arith.constant 1.000000e+00 : f32
    %270 = vector.broadcast %cst_68 : f32 to vector<8x128xf32>
    %271 = arith.addf %270, %269 : vector<8x128xf32>
    %272 = arith.divf %270, %271 : vector<8x128xf32>
    %273 = vector.extract_strided_slice %266 {offsets = [0, 128], sizes = [8, 128], strides = [1, 1]} : vector<8x512xf32> to vector<8x128xf32>
    %274 = arith.negf %273 : vector<8x128xf32>
    %275 = math.exp %274 : vector<8x128xf32>
    %cst_69 = arith.constant 1.000000e+00 : f32
    %276 = vector.broadcast %cst_69 : f32 to vector<8x128xf32>
    %277 = arith.addf %276, %275 : vector<8x128xf32>
    %278 = arith.divf %276, %277 : vector<8x128xf32>
    %279 = vector.extract_strided_slice %266 {offsets = [0, 256], sizes = [8, 128], strides = [1, 1]} : vector<8x512xf32> to vector<8x128xf32>
    %280 = math.tanh %279 : vector<8x128xf32>
    %281 = vector.extract_strided_slice %266 {offsets = [0, 384], sizes = [8, 128], strides = [1, 1]} : vector<8x512xf32> to vector<8x128xf32>
    %282 = arith.negf %281 : vector<8x128xf32>
    %283 = math.exp %282 : vector<8x128xf32>
    %cst_70 = arith.constant 1.000000e+00 : f32
    %284 = vector.broadcast %cst_70 : f32 to vector<8x128xf32>
    %285 = arith.addf %284, %283 : vector<8x128xf32>
    %286 = arith.divf %284, %285 : vector<8x128xf32>
    %287 = arith.mulf %278, %257 : vector<8x128xf32>
    %288 = arith.mulf %272, %280 : vector<8x128xf32>
    %289 = arith.addf %287, %288 : vector<8x128xf32>
    %290 = math.tanh %289 : vector<8x128xf32>
    %291 = arith.mulf %286, %290 : vector<8x128xf32>
    %c8_i32_71 = arith.constant 8 : i32
    %292 = arith.muli %c0_i32_65, %c8_i32_71 : i32
    %293 = tpu.assume_multiple %292, 8 : i32
    %294 = arith.index_cast %293 : i32 to index
    %c0_72 = arith.constant 0 : index
    %295 = vector.load %arg11[%294, %c0_72] : memref<64x128xf32, #tpu.memory_space<vmem>>, vector<8x128xf32>
    tpu.vector_store %arg11[%294, %c0_72], %291 {strides = array<i32>} : memref<64x128xf32, #tpu.memory_space<vmem>>, vector<8x128xf32>,
    %c1_i32_73 = arith.constant 1 : i32
    %cst_74 = arith.constant dense<0.000000e+00> : vector<8x512xf32>
    %296 = tpu.matmul %291, %1, %cst_74 {dimension_numbers = #tpu.dot_dimension_numbers<[1], [0], [0], [1], [0, 0, 1, 1], [], []>} : vector<8x128xf32>, vector<128x512xf32>, vector<8x512xf32> -> vector<8x512xf32>
    %cst_75 = arith.constant dense<0.000000e+00> : vector<8x512xf32>
    %297 = tpu.matmul %291, %2, %cst_75 {dimension_numbers = #tpu.dot_dimension_numbers<[1], [0], [0], [1], [0, 0, 1, 1], [], []>} : vector<8x128xf32>, vector<128x512xf32>, vector<8x512xf32> -> vector<8x512xf32>
    %298 = arith.addf %296, %297 : vector<8x512xf32>
    %299 = arith.addf %298, %262 : vector<8x512xf32>
    %300 = vector.extract_strided_slice %299 {offsets = [0, 0], sizes = [8, 128], strides = [1, 1]} : vector<8x512xf32> to vector<8x128xf32>
    %301 = arith.negf %300 : vector<8x128xf32>
    %302 = math.exp %301 : vector<8x128xf32>
    %cst_76 = arith.constant 1.000000e+00 : f32
    %303 = vector.broadcast %cst_76 : f32 to vector<8x128xf32>
    %304 = arith.addf %303, %302 : vector<8x128xf32>
    %305 = arith.divf %303, %304 : vector<8x128xf32>
    %306 = vector.extract_strided_slice %299 {offsets = [0, 128], sizes = [8, 128], strides = [1, 1]} : vector<8x512xf32> to vector<8x128xf32>
    %307 = arith.negf %306 : vector<8x128xf32>
    %308 = math.exp %307 : vector<8x128xf32>
    %cst_77 = arith.constant 1.000000e+00 : f32
    %309 = vector.broadcast %cst_77 : f32 to vector<8x128xf32>
    %310 = arith.addf %309, %308 : vector<8x128xf32>
    %311 = arith.divf %309, %310 : vector<8x128xf32>
    %312 = vector.extract_strided_slice %299 {offsets = [0, 256], sizes = [8, 128], strides = [1, 1]} : vector<8x512xf32> to vector<8x128xf32>
    %313 = math.tanh %312 : vector<8x128xf32>
    %314 = vector.extract_strided_slice %299 {offsets = [0, 384], sizes = [8, 128], strides = [1, 1]} : vector<8x512xf32> to vector<8x128xf32>
    %315 = arith.negf %314 : vector<8x128xf32>
    %316 = math.exp %315 : vector<8x128xf32>
    %cst_78 = arith.constant 1.000000e+00 : f32
    %317 = vector.broadcast %cst_78 : f32 to vector<8x128xf32>
    %318 = arith.addf %317, %316 : vector<8x128xf32>
    %319 = arith.divf %317, %318 : vector<8x128xf32>
    %320 = arith.mulf %311, %289 : vector<8x128xf32>
    %321 = arith.mulf %305, %313 : vector<8x128xf32>
    %322 = arith.addf %320, %321 : vector<8x128xf32>
    %323 = math.tanh %322 : vector<8x128xf32>
    %324 = arith.mulf %319, %323 : vector<8x128xf32>
    %c8_i32_79 = arith.constant 8 : i32
    %325 = arith.muli %c1_i32_73, %c8_i32_79 : i32
    %326 = tpu.assume_multiple %325, 8 : i32
    %327 = arith.index_cast %326 : i32 to index
    %c0_80 = arith.constant 0 : index
    %328 = vector.load %arg11[%327, %c0_80] : memref<64x128xf32, #tpu.memory_space<vmem>>, vector<8x128xf32>
    tpu.vector_store %arg11[%327, %c0_80], %324 {strides = array<i32>} : memref<64x128xf32, #tpu.memory_space<vmem>>, vector<8x128xf32>,
    %c2_i32_81 = arith.constant 2 : i32
    %cst_82 = arith.constant dense<0.000000e+00> : vector<8x512xf32>
    %329 = tpu.matmul %324, %1, %cst_82 {dimension_numbers = #tpu.dot_dimension_numbers<[1], [0], [0], [1], [0, 0, 1, 1], [], []>} : vector<8x128xf32>, vector<128x512xf32>, vector<8x512xf32> -> vector<8x512xf32>
    %cst_83 = arith.constant dense<0.000000e+00> : vector<8x512xf32>
    %330 = tpu.matmul %324, %2, %cst_83 {dimension_numbers = #tpu.dot_dimension_numbers<[1], [0], [0], [1], [0, 0, 1, 1], [], []>} : vector<8x128xf32>, vector<128x512xf32>, vector<8x512xf32> -> vector<8x512xf32>
    %331 = arith.addf %329, %330 : vector<8x512xf32>
    %332 = arith.addf %331, %262 : vector<8x512xf32>
    %333 = vector.extract_strided_slice %332 {offsets = [0, 0], sizes = [8, 128], strides = [1, 1]} : vector<8x512xf32> to vector<8x128xf32>
    %334 = arith.negf %333 : vector<8x128xf32>
    %335 = math.exp %334 : vector<8x128xf32>
    %cst_84 = arith.constant 1.000000e+00 : f32
    %336 = vector.broadcast %cst_84 : f32 to vector<8x128xf32>
    %337 = arith.addf %336, %335 : vector<8x128xf32>
    %338 = arith.divf %336, %337 : vector<8x128xf32>
    %339 = vector.extract_strided_slice %332 {offsets = [0, 128], sizes = [8, 128], strides = [1, 1]} : vector<8x512xf32> to vector<8x128xf32>
    %340 = arith.negf %339 : vector<8x128xf32>
    %341 = math.exp %340 : vector<8x128xf32>
    %cst_85 = arith.constant 1.000000e+00 : f32
    %342 = vector.broadcast %cst_85 : f32 to vector<8x128xf32>
    %343 = arith.addf %342, %341 : vector<8x128xf32>
    %344 = arith.divf %342, %343 : vector<8x128xf32>
    %345 = vector.extract_strided_slice %332 {offsets = [0, 256], sizes = [8, 128], strides = [1, 1]} : vector<8x512xf32> to vector<8x128xf32>
    %346 = math.tanh %345 : vector<8x128xf32>
    %347 = vector.extract_strided_slice %332 {offsets = [0, 384], sizes = [8, 128], strides = [1, 1]} : vector<8x512xf32> to vector<8x128xf32>
    %348 = arith.negf %347 : vector<8x128xf32>
    %349 = math.exp %348 : vector<8x128xf32>
    %cst_86 = arith.constant 1.000000e+00 : f32
    %350 = vector.broadcast %cst_86 : f32 to vector<8x128xf32>
    %351 = arith.addf %350, %349 : vector<8x128xf32>
    %352 = arith.divf %350, %351 : vector<8x128xf32>
    %353 = arith.mulf %344, %322 : vector<8x128xf32>
    %354 = arith.mulf %338, %346 : vector<8x128xf32>
    %355 = arith.addf %353, %354 : vector<8x128xf32>
    %356 = math.tanh %355 : vector<8x128xf32>
    %357 = arith.mulf %352, %356 : vector<8x128xf32>
    %c8_i32_87 = arith.constant 8 : i32
    %358 = arith.muli %c2_i32_81, %c8_i32_87 : i32
    %359 = tpu.assume_multiple %358, 8 : i32
    %360 = arith.index_cast %359 : i32 to index
    %c0_88 = arith.constant 0 : index
    %361 = vector.load %arg11[%360, %c0_88] : memref<64x128xf32, #tpu.memory_space<vmem>>, vector<8x128xf32>
    tpu.vector_store %arg11[%360, %c0_88], %357 {strides = array<i32>} : memref<64x128xf32, #tpu.memory_space<vmem>>, vector<8x128xf32>,
    %c3_i32_89 = arith.constant 3 : i32
    %cst_90 = arith.constant dense<0.000000e+00> : vector<8x512xf32>
    %362 = tpu.matmul %357, %1, %cst_90 {dimension_numbers = #tpu.dot_dimension_numbers<[1], [0], [0], [1], [0, 0, 1, 1], [], []>} : vector<8x128xf32>, vector<128x512xf32>, vector<8x512xf32> -> vector<8x512xf32>
    %cst_91 = arith.constant dense<0.000000e+00> : vector<8x512xf32>
    %363 = tpu.matmul %357, %2, %cst_91 {dimension_numbers = #tpu.dot_dimension_numbers<[1], [0], [0], [1], [0, 0, 1, 1], [], []>} : vector<8x128xf32>, vector<128x512xf32>, vector<8x512xf32> -> vector<8x512xf32>
    %364 = arith.addf %362, %363 : vector<8x512xf32>
    %365 = arith.addf %364, %262 : vector<8x512xf32>
    %366 = vector.extract_strided_slice %365 {offsets = [0, 0], sizes = [8, 128], strides = [1, 1]} : vector<8x512xf32> to vector<8x128xf32>
    %367 = arith.negf %366 : vector<8x128xf32>
    %368 = math.exp %367 : vector<8x128xf32>
    %cst_92 = arith.constant 1.000000e+00 : f32
    %369 = vector.broadcast %cst_92 : f32 to vector<8x128xf32>
    %370 = arith.addf %369, %368 : vector<8x128xf32>
    %371 = arith.divf %369, %370 : vector<8x128xf32>
    %372 = vector.extract_strided_slice %365 {offsets = [0, 128], sizes = [8, 128], strides = [1, 1]} : vector<8x512xf32> to vector<8x128xf32>
    %373 = arith.negf %372 : vector<8x128xf32>
    %374 = math.exp %373 : vector<8x128xf32>
    %cst_93 = arith.constant 1.000000e+00 : f32
    %375 = vector.broadcast %cst_93 : f32 to vector<8x128xf32>
    %376 = arith.addf %375, %374 : vector<8x128xf32>
    %377 = arith.divf %375, %376 : vector<8x128xf32>
    %378 = vector.extract_strided_slice %365 {offsets = [0, 256], sizes = [8, 128], strides = [1, 1]} : vector<8x512xf32> to vector<8x128xf32>
    %379 = math.tanh %378 : vector<8x128xf32>
    %380 = vector.extract_strided_slice %365 {offsets = [0, 384], sizes = [8, 128], strides = [1, 1]} : vector<8x512xf32> to vector<8x128xf32>
    %381 = arith.negf %380 : vector<8x128xf32>
    %382 = math.exp %381 : vector<8x128xf32>
    %cst_94 = arith.constant 1.000000e+00 : f32
    %383 = vector.broadcast %cst_94 : f32 to vector<8x128xf32>
    %384 = arith.addf %383, %382 : vector<8x128xf32>
    %385 = arith.divf %383, %384 : vector<8x128xf32>
    %386 = arith.mulf %377, %355 : vector<8x128xf32>
    %387 = arith.mulf %371, %379 : vector<8x128xf32>
    %388 = arith.addf %386, %387 : vector<8x128xf32>
    %389 = math.tanh %388 : vector<8x128xf32>
    %390 = arith.mulf %385, %389 : vector<8x128xf32>
    %c8_i32_95 = arith.constant 8 : i32
    %391 = arith.muli %c3_i32_89, %c8_i32_95 : i32
    %392 = tpu.assume_multiple %391, 8 : i32
    %393 = arith.index_cast %392 : i32 to index
    %c0_96 = arith.constant 0 : index
    %394 = vector.load %arg11[%393, %c0_96] : memref<64x128xf32, #tpu.memory_space<vmem>>, vector<8x128xf32>
    tpu.vector_store %arg11[%393, %c0_96], %390 {strides = array<i32>} : memref<64x128xf32, #tpu.memory_space<vmem>>, vector<8x128xf32>,
    %c4_i32_97 = arith.constant 4 : i32
    %cst_98 = arith.constant dense<0.000000e+00> : vector<8x512xf32>
    %395 = tpu.matmul %390, %1, %cst_98 {dimension_numbers = #tpu.dot_dimension_numbers<[1], [0], [0], [1], [0, 0, 1, 1], [], []>} : vector<8x128xf32>, vector<128x512xf32>, vector<8x512xf32> -> vector<8x512xf32>
    %cst_99 = arith.constant dense<0.000000e+00> : vector<8x512xf32>
    %396 = tpu.matmul %390, %2, %cst_99 {dimension_numbers = #tpu.dot_dimension_numbers<[1], [0], [0], [1], [0, 0, 1, 1], [], []>} : vector<8x128xf32>, vector<128x512xf32>, vector<8x512xf32> -> vector<8x512xf32>
    %397 = arith.addf %395, %396 : vector<8x512xf32>
    %398 = arith.addf %397, %262 : vector<8x512xf32>
    %399 = vector.extract_strided_slice %398 {offsets = [0, 0], sizes = [8, 128], strides = [1, 1]} : vector<8x512xf32> to vector<8x128xf32>
    %400 = arith.negf %399 : vector<8x128xf32>
    %401 = math.exp %400 : vector<8x128xf32>
    %cst_100 = arith.constant 1.000000e+00 : f32
    %402 = vector.broadcast %cst_100 : f32 to vector<8x128xf32>
    %403 = arith.addf %402, %401 : vector<8x128xf32>
    %404 = arith.divf %402, %403 : vector<8x128xf32>
    %405 = vector.extract_strided_slice %398 {offsets = [0, 128], sizes = [8, 128], strides = [1, 1]} : vector<8x512xf32> to vector<8x128xf32>
    %406 = arith.negf %405 : vector<8x128xf32>
    %407 = math.exp %406 : vector<8x128xf32>
    %cst_101 = arith.constant 1.000000e+00 : f32
    %408 = vector.broadcast %cst_101 : f32 to vector<8x128xf32>
    %409 = arith.addf %408, %407 : vector<8x128xf32>
    %410 = arith.divf %408, %409 : vector<8x128xf32>
    %411 = vector.extract_strided_slice %398 {offsets = [0, 256], sizes = [8, 128], strides = [1, 1]} : vector<8x512xf32> to vector<8x128xf32>
    %412 = math.tanh %411 : vector<8x128xf32>
    %413 = vector.extract_strided_slice %398 {offsets = [0, 384], sizes = [8, 128], strides = [1, 1]} : vector<8x512xf32> to vector<8x128xf32>
    %414 = arith.negf %413 : vector<8x128xf32>
    %415 = math.exp %414 : vector<8x128xf32>
    %cst_102 = arith.constant 1.000000e+00 : f32
    %416 = vector.broadcast %cst_102 : f32 to vector<8x128xf32>
    %417 = arith.addf %416, %415 : vector<8x128xf32>
    %418 = arith.divf %416, %417 : vector<8x128xf32>
    %419 = arith.mulf %410, %388 : vector<8x128xf32>
    %420 = arith.mulf %404, %412 : vector<8x128xf32>
    %421 = arith.addf %419, %420 : vector<8x128xf32>
    %422 = math.tanh %421 : vector<8x128xf32>
    %423 = arith.mulf %418, %422 : vector<8x128xf32>
    %c8_i32_103 = arith.constant 8 : i32
    %424 = arith.muli %c4_i32_97, %c8_i32_103 : i32
    %425 = tpu.assume_multiple %424, 8 : i32
    %426 = arith.index_cast %425 : i32 to index
    %c0_104 = arith.constant 0 : index
    %427 = vector.load %arg11[%426, %c0_104] : memref<64x128xf32, #tpu.memory_space<vmem>>, vector<8x128xf32>
    tpu.vector_store %arg11[%426, %c0_104], %423 {strides = array<i32>} : memref<64x128xf32, #tpu.memory_space<vmem>>, vector<8x128xf32>,
    %c5_i32_105 = arith.constant 5 : i32
    %cst_106 = arith.constant dense<0.000000e+00> : vector<8x512xf32>
    %428 = tpu.matmul %423, %1, %cst_106 {dimension_numbers = #tpu.dot_dimension_numbers<[1], [0], [0], [1], [0, 0, 1, 1], [], []>} : vector<8x128xf32>, vector<128x512xf32>, vector<8x512xf32> -> vector<8x512xf32>
    %cst_107 = arith.constant dense<0.000000e+00> : vector<8x512xf32>
    %429 = tpu.matmul %423, %2, %cst_107 {dimension_numbers = #tpu.dot_dimension_numbers<[1], [0], [0], [1], [0, 0, 1, 1], [], []>} : vector<8x128xf32>, vector<128x512xf32>, vector<8x512xf32> -> vector<8x512xf32>
    %430 = arith.addf %428, %429 : vector<8x512xf32>
    %431 = arith.addf %430, %262 : vector<8x512xf32>
    %432 = vector.extract_strided_slice %431 {offsets = [0, 0], sizes = [8, 128], strides = [1, 1]} : vector<8x512xf32> to vector<8x128xf32>
    %433 = arith.negf %432 : vector<8x128xf32>
    %434 = math.exp %433 : vector<8x128xf32>
    %cst_108 = arith.constant 1.000000e+00 : f32
    %435 = vector.broadcast %cst_108 : f32 to vector<8x128xf32>
    %436 = arith.addf %435, %434 : vector<8x128xf32>
    %437 = arith.divf %435, %436 : vector<8x128xf32>
    %438 = vector.extract_strided_slice %431 {offsets = [0, 128], sizes = [8, 128], strides = [1, 1]} : vector<8x512xf32> to vector<8x128xf32>
    %439 = arith.negf %438 : vector<8x128xf32>
    %440 = math.exp %439 : vector<8x128xf32>
    %cst_109 = arith.constant 1.000000e+00 : f32
    %441 = vector.broadcast %cst_109 : f32 to vector<8x128xf32>
    %442 = arith.addf %441, %440 : vector<8x128xf32>
    %443 = arith.divf %441, %442 : vector<8x128xf32>
    %444 = vector.extract_strided_slice %431 {offsets = [0, 256], sizes = [8, 128], strides = [1, 1]} : vector<8x512xf32> to vector<8x128xf32>
    %445 = math.tanh %444 : vector<8x128xf32>
    %446 = vector.extract_strided_slice %431 {offsets = [0, 384], sizes = [8, 128], strides = [1, 1]} : vector<8x512xf32> to vector<8x128xf32>
    %447 = arith.negf %446 : vector<8x128xf32>
    %448 = math.exp %447 : vector<8x128xf32>
    %cst_110 = arith.constant 1.000000e+00 : f32
    %449 = vector.broadcast %cst_110 : f32 to vector<8x128xf32>
    %450 = arith.addf %449, %448 : vector<8x128xf32>
    %451 = arith.divf %449, %450 : vector<8x128xf32>
    %452 = arith.mulf %443, %421 : vector<8x128xf32>
    %453 = arith.mulf %437, %445 : vector<8x128xf32>
    %454 = arith.addf %452, %453 : vector<8x128xf32>
    %455 = math.tanh %454 : vector<8x128xf32>
    %456 = arith.mulf %451, %455 : vector<8x128xf32>
    %c8_i32_111 = arith.constant 8 : i32
    %457 = arith.muli %c5_i32_105, %c8_i32_111 : i32
    %458 = tpu.assume_multiple %457, 8 : i32
    %459 = arith.index_cast %458 : i32 to index
    %c0_112 = arith.constant 0 : index
    %460 = vector.load %arg11[%459, %c0_112] : memref<64x128xf32, #tpu.memory_space<vmem>>, vector<8x128xf32>
    tpu.vector_store %arg11[%459, %c0_112], %456 {strides = array<i32>} : memref<64x128xf32, #tpu.memory_space<vmem>>, vector<8x128xf32>,
    %c6_i32_113 = arith.constant 6 : i32
    %cst_114 = arith.constant dense<0.000000e+00> : vector<8x512xf32>
    %461 = tpu.matmul %456, %1, %cst_114 {dimension_numbers = #tpu.dot_dimension_numbers<[1], [0], [0], [1], [0, 0, 1, 1], [], []>} : vector<8x128xf32>, vector<128x512xf32>, vector<8x512xf32> -> vector<8x512xf32>
    %cst_115 = arith.constant dense<0.000000e+00> : vector<8x512xf32>
    %462 = tpu.matmul %456, %2, %cst_115 {dimension_numbers = #tpu.dot_dimension_numbers<[1], [0], [0], [1], [0, 0, 1, 1], [], []>} : vector<8x128xf32>, vector<128x512xf32>, vector<8x512xf32> -> vector<8x512xf32>
    %463 = arith.addf %461, %462 : vector<8x512xf32>
    %464 = arith.addf %463, %262 : vector<8x512xf32>
    %465 = vector.extract_strided_slice %464 {offsets = [0, 0], sizes = [8, 128], strides = [1, 1]} : vector<8x512xf32> to vector<8x128xf32>
    %466 = arith.negf %465 : vector<8x128xf32>
    %467 = math.exp %466 : vector<8x128xf32>
    %cst_116 = arith.constant 1.000000e+00 : f32
    %468 = vector.broadcast %cst_116 : f32 to vector<8x128xf32>
    %469 = arith.addf %468, %467 : vector<8x128xf32>
    %470 = arith.divf %468, %469 : vector<8x128xf32>
    %471 = vector.extract_strided_slice %464 {offsets = [0, 128], sizes = [8, 128], strides = [1, 1]} : vector<8x512xf32> to vector<8x128xf32>
    %472 = arith.negf %471 : vector<8x128xf32>
    %473 = math.exp %472 : vector<8x128xf32>
    %cst_117 = arith.constant 1.000000e+00 : f32
    %474 = vector.broadcast %cst_117 : f32 to vector<8x128xf32>
    %475 = arith.addf %474, %473 : vector<8x128xf32>
    %476 = arith.divf %474, %475 : vector<8x128xf32>
    %477 = vector.extract_strided_slice %464 {offsets = [0, 256], sizes = [8, 128], strides = [1, 1]} : vector<8x512xf32> to vector<8x128xf32>
    %478 = math.tanh %477 : vector<8x128xf32>
    %479 = vector.extract_strided_slice %464 {offsets = [0, 384], sizes = [8, 128], strides = [1, 1]} : vector<8x512xf32> to vector<8x128xf32>
    %480 = arith.negf %479 : vector<8x128xf32>
    %481 = math.exp %480 : vector<8x128xf32>
    %cst_118 = arith.constant 1.000000e+00 : f32
    %482 = vector.broadcast %cst_118 : f32 to vector<8x128xf32>
    %483 = arith.addf %482, %481 : vector<8x128xf32>
    %484 = arith.divf %482, %483 : vector<8x128xf32>
    %485 = arith.mulf %476, %454 : vector<8x128xf32>
    %486 = arith.mulf %470, %478 : vector<8x128xf32>
    %487 = arith.addf %485, %486 : vector<8x128xf32>
    %488 = math.tanh %487 : vector<8x128xf32>
    %489 = arith.mulf %484, %488 : vector<8x128xf32>
    %c8_i32_119 = arith.constant 8 : i32
    %490 = arith.muli %c6_i32_113, %c8_i32_119 : i32
    %491 = tpu.assume_multiple %490, 8 : i32
    %492 = arith.index_cast %491 : i32 to index
    %c0_120 = arith.constant 0 : index
    %493 = vector.load %arg11[%492, %c0_120] : memref<64x128xf32, #tpu.memory_space<vmem>>, vector<8x128xf32>
    tpu.vector_store %arg11[%492, %c0_120], %489 {strides = array<i32>} : memref<64x128xf32, #tpu.memory_space<vmem>>, vector<8x128xf32>,
    %c7_i32_121 = arith.constant 7 : i32
    %cst_122 = arith.constant dense<0.000000e+00> : vector<8x512xf32>
    %494 = tpu.matmul %489, %1, %cst_122 {dimension_numbers = #tpu.dot_dimension_numbers<[1], [0], [0], [1], [0, 0, 1, 1], [], []>} : vector<8x128xf32>, vector<128x512xf32>, vector<8x512xf32> -> vector<8x512xf32>
    %cst_123 = arith.constant dense<0.000000e+00> : vector<8x512xf32>
    %495 = tpu.matmul %489, %2, %cst_123 {dimension_numbers = #tpu.dot_dimension_numbers<[1], [0], [0], [1], [0, 0, 1, 1], [], []>} : vector<8x128xf32>, vector<128x512xf32>, vector<8x512xf32> -> vector<8x512xf32>
    %496 = arith.addf %494, %495 : vector<8x512xf32>
    %497 = arith.addf %496, %262 : vector<8x512xf32>
    %498 = vector.extract_strided_slice %497 {offsets = [0, 0], sizes = [8, 128], strides = [1, 1]} : vector<8x512xf32> to vector<8x128xf32>
    %499 = arith.negf %498 : vector<8x128xf32>
    %500 = math.exp %499 : vector<8x128xf32>
    %cst_124 = arith.constant 1.000000e+00 : f32
    %501 = vector.broadcast %cst_124 : f32 to vector<8x128xf32>
    %502 = arith.addf %501, %500 : vector<8x128xf32>
    %503 = arith.divf %501, %502 : vector<8x128xf32>
    %504 = vector.extract_strided_slice %497 {offsets = [0, 128], sizes = [8, 128], strides = [1, 1]} : vector<8x512xf32> to vector<8x128xf32>
    %505 = arith.negf %504 : vector<8x128xf32>
    %506 = math.exp %505 : vector<8x128xf32>
    %cst_125 = arith.constant 1.000000e+00 : f32
    %507 = vector.broadcast %cst_125 : f32 to vector<8x128xf32>
    %508 = arith.addf %507, %506 : vector<8x128xf32>
    %509 = arith.divf %507, %508 : vector<8x128xf32>
    %510 = vector.extract_strided_slice %497 {offsets = [0, 256], sizes = [8, 128], strides = [1, 1]} : vector<8x512xf32> to vector<8x128xf32>
    %511 = math.tanh %510 : vector<8x128xf32>
    %512 = vector.extract_strided_slice %497 {offsets = [0, 384], sizes = [8, 128], strides = [1, 1]} : vector<8x512xf32> to vector<8x128xf32>
    %513 = arith.negf %512 : vector<8x128xf32>
    %514 = math.exp %513 : vector<8x128xf32>
    %cst_126 = arith.constant 1.000000e+00 : f32
    %515 = vector.broadcast %cst_126 : f32 to vector<8x128xf32>
    %516 = arith.addf %515, %514 : vector<8x128xf32>
    %517 = arith.divf %515, %516 : vector<8x128xf32>
    %518 = arith.mulf %509, %487 : vector<8x128xf32>
    %519 = arith.mulf %503, %511 : vector<8x128xf32>
    %520 = arith.addf %518, %519 : vector<8x128xf32>
    %521 = math.tanh %520 : vector<8x128xf32>
    %522 = arith.mulf %517, %521 : vector<8x128xf32>
    %c8_i32_127 = arith.constant 8 : i32
    %523 = arith.muli %c7_i32_121, %c8_i32_127 : i32
    %524 = tpu.assume_multiple %523, 8 : i32
    %525 = arith.index_cast %524 : i32 to index
    %c0_128 = arith.constant 0 : index
    %526 = vector.load %arg11[%525, %c0_128] : memref<64x128xf32, #tpu.memory_space<vmem>>, vector<8x128xf32>
    tpu.vector_store %arg11[%525, %c0_128], %522 {strides = array<i32>} : memref<64x128xf32, #tpu.memory_space<vmem>>, vector<8x128xf32>,
    %c8_i32_129 = arith.constant 8 : i32
    %c0_130 = arith.constant 0 : index
    %c0_131 = arith.constant 0 : index
    %527 = vector.load %arg11[%c0_130, %c0_131] : memref<64x128xf32, #tpu.memory_space<vmem>>, vector<64x128xf32>
    %c0_132 = arith.constant 0 : index
    %c0_133 = arith.constant 0 : index
    %528 = vector.load %arg7[%c0_132, %c0_133] : memref<128x128xf32, #tpu.memory_space<vmem>>, vector<128x128xf32>
    %cst_134 = arith.constant dense<0.000000e+00> : vector<64x128xf32>
    %529 = tpu.matmul %527, %528, %cst_134 {dimension_numbers = #tpu.dot_dimension_numbers<[1], [0], [0], [1], [0, 0, 1, 1], [], []>} : vector<64x128xf32>, vector<128x128xf32>, vector<64x128xf32> -> vector<64x128xf32>
    %c0_135 = arith.constant 0 : index
    %c0_136 = arith.constant 0 : index
    %530 = vector.load %arg8[%c0_135, %c0_136] : memref<1x128xf32, #tpu.memory_space<vmem>>, vector<1x128xf32>
    %531 = vector.broadcast %530 : vector<1x128xf32> to vector<64x128xf32>
    %532 = arith.addf %529, %531 : vector<64x128xf32>
    %c0_137 = arith.constant 0 : index
    %c0_138 = arith.constant 0 : index
    %533 = vector.load %arg9[%c0_137, %c0_138] : memref<64x128xf32, #tpu.memory_space<vmem>>, vector<64x128xf32>
    tpu.vector_store %arg9[%c0_137, %c0_138], %532 {strides = array<i32>} : memref<64x128xf32, #tpu.memory_space<vmem>>, vector<64x128xf32>,
    return
  }
}

</mosaic_0001>

<llo_original>
// kernel: tpu_custom_call.1
$region0: #{tpu_custom_call.1}
  #allocation0 [shape = 'u32[]', space=smem, size = 0x4, offset = 0x4, fixed_abs, tag = 'smem constant byte address 0x4 - core index']
  #allocation1 [shape = 'u32[144,128]{1,0:T(1,128)}', space=vmem, size = 0x12000, scoped, tag = 'internal scratch']
  #allocation2 [shape = 'f32[64,512]{1,0:T(8,128)}', space=vmem, size = 0x20000, scoped, tag = 'scratch operand']
  #allocation3 [shape = 'f32[64,128]{1,0:T(8,128)}', space=vmem, size = 0x8000, scoped, tag = 'scratch operand']
  %s0 = inlined_call_operand.vmem [shape: f32[64,4], index: 0, kind: input, shape index: {}]
  %s1 = inlined_call_operand.vmem [shape: f32[4,512], index: 1, kind: input, shape index: {}]
  %s2 = inlined_call_operand.hbm [shape: f32[128,512], index: 2, kind: input, shape index: {}]
  %s3 = inlined_call_operand.vmem [shape: f32[1,512], index: 3, kind: input, shape index: {}]
  %s4 = inlined_call_operand.hbm [shape: f32[128,512], index: 4, kind: input, shape index: {}]
  %s5 = inlined_call_operand.hbm [shape: f32[128,512], index: 5, kind: input, shape index: {}]
  %s6 = inlined_call_operand.vmem [shape: f32[1,512], index: 6, kind: input, shape index: {}]
  %s7 = inlined_call_operand.hbm [shape: f32[128,128], index: 7, kind: input, shape index: {}]
  %s8 = inlined_call_operand.vmem [shape: f32[1,128], index: 8, kind: input, shape index: {}]
  %s9 = inlined_call_operand.hbm [shape: f32[64,128], index: 9, kind: output, shape index: {}]
  %s10 = sld [smem:[#allocation0]]
  $region62: #{tpu_custom_call.1} parent=0
    _
  %s12 = ssub.s32 1, %s10
  %s13 = scalar_select 0, %s12, %s10
  $region1: #{tpu_custom_call.1} parent=0
    #allocation4 [shape = 'u8[262144]{0}', space=vmem, size = 0x40000, scoped, tag = 'input window, operand 2, single buffered']
    #allocation5 [shape = 's32[1]{0}', space=sflag, size = 0x4, scoped, tag = 'scoped memory for tpu_custom_call.1']
    #allocation6 [shape = 's32[1]{0}', space=sflag, size = 0x4, scoped, tag = 'scoped memory for tpu_custom_call.1']
    #allocation7 [shape = 'u8[262144]{0}', space=vmem, size = 0x40000, scoped, tag = 'input window, operand 4, single buffered']
    #allocation8 [shape = 's32[1]{0}', space=sflag, size = 0x4, scoped, tag = 'scoped memory for tpu_custom_call.1']
    #allocation9 [shape = 'u8[262144]{0}', space=vmem, size = 0x40000, scoped, tag = 'input window, operand 5, single buffered']
    #allocation10 [shape = 'u8[65536]{0}', space=vmem, size = 0x10000, scoped, tag = 'input window, operand 7, single buffered']
    #allocation11 [shape = 's32[1]{0}', space=sflag, size = 0x4, scoped, tag = 'scoped memory for tpu_custom_call.1']
    #allocation12 [shape = 'u8[32768]{0}', space=vmem, size = 0x8000, scoped, tag = 'output window, operand 0, single buffered']
    %14 = vsyncpa [#allocation5], 0
    %15 = vsyncpa [#allocation8], 0
    %16 = vsyncpa [#allocation11], 0
    %17 = vsyncpa [#allocation6], 0
    // Predicated region
    $region2: #{tpu_custom_call.1} parent=1 // pred_check
      _
    $region3: #{tpu_custom_call.1} parent=1 // pred_check_branch
      %19 = sbr.rel (0) target = $region5
    $region4: #{tpu_custom_call.1} parent=1 // pred_region
      _
    $region5: #{tpu_custom_call.1} parent=1 // pred_fallthru
      _
    // Predicated region
    $region6: #{tpu_custom_call.1} parent=1 // pred_check
      _
    $region7: #{tpu_custom_call.1} parent=1 // pred_check_branch
      %21 = sbr.rel (0) target = $region9
    $region8: #{tpu_custom_call.1} parent=1 // pred_region
      _
    $region9: #{tpu_custom_call.1} parent=1 // pred_fallthru
      _
    // Predicated region
    $region10: #{tpu_custom_call.1} parent=1 // pred_check
      _
    $region11: #{tpu_custom_call.1} parent=1 // pred_check_branch
      %23 = sbr.rel (0) target = $region13
    $region12: #{tpu_custom_call.1} parent=1 // pred_region
      %s25 = ssub.s32 8192, 8192
      %26 = vsyncadd [#allocation5], %s25
      %s27 = sshll.u32 [#allocation4], 4
      %s28 = int_to_ptr.vmem [resolvable:$true] %s27
      %33 = dma.hbm_to_vmem [thread:$0]  %s2, 8192, %s28, [#allocation5], 512, 512, 32
    $region13: #{tpu_custom_call.1} parent=1 // pred_fallthru
      _
    // Predicated region
    $region14: #{tpu_custom_call.1} parent=1 // pred_check
      _
    $region15: #{tpu_custom_call.1} parent=1 // pred_check_branch
      %35 = sbr.rel (0) target = $region17
    $region16: #{tpu_custom_call.1} parent=1 // pred_region
      _
    $region17: #{tpu_custom_call.1} parent=1 // pred_fallthru
      _
    // Predicated region
    $region18: #{tpu_custom_call.1} parent=1 // pred_check
      _
    $region19: #{tpu_custom_call.1} parent=1 // pred_check_branch
      %37 = sbr.rel (0) target = $region21
    $region20: #{tpu_custom_call.1} parent=1 // pred_region
      %s39 = ssub.s32 8192, 8192
      %40 = vsyncadd [#allocation8], %s39
      %s41 = sshll.u32 [#allocation7], 4
      %s42 = int_to_ptr.vmem [resolvable:$true] %s41
      %47 = dma.hbm_to_vmem [thread:$0]  %s4, 8192, %s42, [#allocation8], 512, 512, 32
    $region21: #{tpu_custom_call.1} parent=1 // pred_fallthru
      _
    // Predicated region
    $region22: #{tpu_custom_call.1} parent=1 // pred_check
      _
    $region23: #{tpu_custom_call.1} parent=1 // pred_check_branch
      %49 = sbr.rel (0) target = $region25
    $region24: #{tpu_custom_call.1} parent=1 // pred_region
      %s51 = ssub.s32 8192, 8192
      %52 = vsyncadd [#allocation8], %s51
      %s53 = sshll.u32 [#allocation9], 4
      %s54 = int_to_ptr.vmem [resolvable:$true] %s53
      %59 = dma.hbm_to_vmem [thread:$0]  %s5, 8192, %s54, [#allocation8], 512, 512, 32
    $region25: #{tpu_custom_call.1} parent=1 // pred_fallthru
      _
    // Predicated region
    $region26: #{tpu_custom_call.1} parent=1 // pred_check
      _
    $region27: #{tpu_custom_call.1} parent=1 // pred_check_branch
      %61 = sbr.rel (0) target = $region29
    $region28: #{tpu_custom_call.1} parent=1 // pred_region
      _
    $region29: #{tpu_custom_call.1} parent=1 // pred_fallthru
      _
    // Predicated region
    $region30: #{tpu_custom_call.1} parent=1 // pred_check
      _
    $region31: #{tpu_custom_call.1} parent=1 // pred_check_branch
      %63 = sbr.rel (0) target = $region33
    $region32: #{tpu_custom_call.1} parent=1 // pred_region
      %s65 = ssub.s32 2048, 2048
      %66 = vsyncadd [#allocation11], %s65
      %s67 = sshll.u32 [#allocation10], 4
      %s68 = int_to_ptr.vmem [resolvable:$true] %s67
      %73 = dma.hbm_to_vmem [thread:$0]  %s7, 2048, %s68, [#allocation11], 128, 128, 8
    $region33: #{tpu_custom_call.1} parent=1 // pred_fallthru
      _
    // Predicated region
    $region34: #{tpu_custom_call.1} parent=1 // pred_check
      _
    $region35: #{tpu_custom_call.1} parent=1 // pred_check_branch
      %75 = sbr.rel (0) target = $region37
    $region36: #{tpu_custom_call.1} parent=1 // pred_region
      _
    $region37: #{tpu_custom_call.1} parent=1 // pred_fallthru
      _
    // Predicated region
    $region38: #{tpu_custom_call.1} parent=1 // pred_check
      _
    $region39: #{tpu_custom_call.1} parent=1 // pred_check_branch
      %77 = sbr.rel (0) target = $region41
    $region40: #{tpu_custom_call.1} parent=1 // pred_region
      %78 = dma.done [#allocation5], 8192
    $region41: #{tpu_custom_call.1} parent=1 // pred_fallthru
      _
    // Predicated region
    $region42: #{tpu_custom_call.1} parent=1 // pred_check
      _
    $region43: #{tpu_custom_call.1} parent=1 // pred_check_branch
      %80 = sbr.rel (0) target = $region45
    $region44: #{tpu_custom_call.1} parent=1 // pred_region
      %81 = dma.done [#allocation8], 8192
    $region45: #{tpu_custom_call.1} parent=1 // pred_fallthru
      _
    // Predicated region
    $region46: #{tpu_custom_call.1} parent=1 // pred_check
      _
    $region47: #{tpu_custom_call.1} parent=1 // pred_check_branch
      %83 = sbr.rel (0) target = $region49
    $region48: #{tpu_custom_call.1} parent=1 // pred_region
      %84 = dma.done [#allocation8], 8192
    $region49: #{tpu_custom_call.1} parent=1 // pred_fallthru
      _
    // Predicated region
    $region50: #{tpu_custom_call.1} parent=1 // pred_check
      _
    $region51: #{tpu_custom_call.1} parent=1 // pred_check_branch
      %86 = sbr.rel (0) target = $region53
    $region52: #{tpu_custom_call.1} parent=1 // pred_region
      %87 = dma.done [#allocation11], 2048
    $region53: #{tpu_custom_call.1} parent=1 // pred_fallthru
      _
    %v88 = vld [vmem:[#allocation4] sm:$0xff]
    %v89 = vld [vmem:[#allocation4 + $0x8] sm:$0xff]
    %v90 = vld [vmem:[#allocation4 + $0x10] sm:$0xff]
    %v91 = vld [vmem:[#allocation4 + $0x18] sm:$0xff]
    %v92 = vld [vmem:[#allocation4 + $0x20] sm:$0xff]
    %v93 = vld [vmem:[#allocation4 + $0x28] sm:$0xff]
    %v94 = vld [vmem:[#allocation4 + $0x30] sm:$0xff]
    %v95 = vld [vmem:[#allocation4 + $0x38] sm:$0xff]
    %v96 = vld [vmem:[#allocation4 + $0x40] sm:$0xff]
    %v97 = vld [vmem:[#allocation4 + $0x48] sm:$0xff]
    %v98 = vld [vmem:[#allocation4 + $0x50] sm:$0xff]
    %v99 = vld [vmem:[#allocation4 + $0x58] sm:$0xff]
    %v100 = vld [vmem:[#allocation4 + $0x60] sm:$0xff]
    %v101 = vld [vmem:[#allocation4 + $0x68] sm:$0xff]
    %v102 = vld [vmem:[#allocation4 + $0x70] sm:$0xff]
    %v103 = vld [vmem:[#allocation4 + $0x78] sm:$0xff]
    %v104 = vld [vmem:[#allocation4 + $0x80] sm:$0xff]
    %v105 = vld [vmem:[#allocation4 + $0x88] sm:$0xff]
    %v106 = vld [vmem:[#allocation4 + $0x90] sm:$0xff]
    %v107 = vld [vmem:[#allocation4 + $0x98] sm:$0xff]
    %v108 = vld [vmem:[#allocation4 + $0xa0] sm:$0xff]
    %v109 = vld [vmem:[#allocation4 + $0xa8] sm:$0xff]
    %v110 = vld [vmem:[#allocation4 + $0xb0] sm:$0xff]
    %v111 = vld [vmem:[#allocation4 + $0xb8] sm:$0xff]
    %v112 = vld [vmem:[#allocation4 + $0xc0] sm:$0xff]
    %v113 = vld [vmem:[#allocation4 + $0xc8] sm:$0xff]
    %v114 = vld [vmem:[#allocation4 + $0xd0] sm:$0xff]
    %v115 = vld [vmem:[#allocation4 + $0xd8] sm:$0xff]
    %v116 = vld [vmem:[#allocation4 + $0xe0] sm:$0xff]
    %v117 = vld [vmem:[#allocation4 + $0xe8] sm:$0xff]
    %v118 = vld [vmem:[#allocation4 + $0xf0] sm:$0xff]
    %v119 = vld [vmem:[#allocation4 + $0xf8] sm:$0xff]
    %v120 = vld [vmem:[#allocation4 + $0x100] sm:$0xff]
    %v121 = vld [vmem:[#allocation4 + $0x108] sm:$0xff]
    %v122 = vld [vmem:[#allocation4 + $0x110] sm:$0xff]
    %v123 = vld [vmem:[#allocation4 + $0x118] sm:$0xff]
    %v124 = vld [vmem:[#allocation4 + $0x120] sm:$0xff]
    %v125 = vld [vmem:[#allocation4 + $0x128] sm:$0xff]
    %v126 = vld [vmem:[#allocation4 + $0x130] sm:$0xff]
    %v127 = vld [vmem:[#allocation4 + $0x138] sm:$0xff]
    %v128 = vld [vmem:[#allocation4 + $0x140] sm:$0xff]
    %v129 = vld [vmem:[#allocation4 + $0x148] sm:$0xff]
    %v130 = vld [vmem:[#allocation4 + $0x150] sm:$0xff]
    %v131 = vld [vmem:[#allocation4 + $0x158] sm:$0xff]
    %v132 = vld [vmem:[#allocation4 + $0x160] sm:$0xff]
    %v133 = vld [vmem:[#allocation4 + $0x168] sm:$0xff]
    %v134 = vld [vmem:[#allocation4 + $0x170] sm:$0xff]
    %v135 = vld [vmem:[#allocation4 + $0x178] sm:$0xff]
    %v136 = vld [vmem:[#allocation4 + $0x180] sm:$0xff]
    %v137 = vld [vmem:[#allocation4 + $0x188] sm:$0xff]
    %v138 = vld [vmem:[#allocation4 + $0x190] sm:$0xff]
    %v139 = vld [vmem:[#allocation4 + $0x198] sm:$0xff]
    %v140 = vld [vmem:[#allocation4 + $0x1a0] sm:$0xff]
    %v141 = vld [vmem:[#allocation4 + $0x1a8] sm:$0xff]
    %v142 = vld [vmem:[#allocation4 + $0x1b0] sm:$0xff]
    %v143 = vld [vmem:[#allocation4 + $0x1b8] sm:$0xff]
    %v144 = vld [vmem:[#allocation4 + $0x1c0] sm:$0xff]
    %v145 = vld [vmem:[#allocation4 + $0x1c8] sm:$0xff]
    %v146 = vld [vmem:[#allocation4 + $0x1d0] sm:$0xff]
    %v147 = vld [vmem:[#allocation4 + $0x1d8] sm:$0xff]
    %v148 = vld [vmem:[#allocation4 + $0x1e0] sm:$0xff]
    %v149 = vld [vmem:[#allocation4 + $0x1e8] sm:$0xff]
    %v150 = vld [vmem:[#allocation4 + $0x1f0] sm:$0xff]
    %v151 = vld [vmem:[#allocation4 + $0x1f8] sm:$0xff]
    %v152 = vld [vmem:[#allocation7] sm:$0xff]
    %v153 = vld [vmem:[#allocation7 + $0x8] sm:$0xff]
    %v154 = vld [vmem:[#allocation7 + $0x10] sm:$0xff]
    %v155 = vld [vmem:[#allocation7 + $0x18] sm:$0xff]
    %v156 = vld [vmem:[#allocation7 + $0x20] sm:$0xff]
    %v157 = vld [vmem:[#allocation7 + $0x28] sm:$0xff]
    %v158 = vld [vmem:[#allocation7 + $0x30] sm:$0xff]
    %v159 = vld [vmem:[#allocation7 + $0x38] sm:$0xff]
    %v160 = vld [vmem:[#allocation7 + $0x40] sm:$0xff]
    %v161 = vld [vmem:[#allocation7 + $0x48] sm:$0xff]
    %v162 = vld [vmem:[#allocation7 + $0x50] sm:$0xff]
    %v163 = vld [vmem:[#allocation7 + $0x58] sm:$0xff]
    %v164 = vld [vmem:[#allocation7 + $0x60] sm:$0xff]
    %v165 = vld [vmem:[#allocation7 + $0x68] sm:$0xff]
    %v166 = vld [vmem:[#allocation7 + $0x70] sm:$0xff]
    %v167 = vld [vmem:[#allocation7 + $0x78] sm:$0xff]
    %v168 = vld [vmem:[#allocation7 + $0x80] sm:$0xff]
    %v169 = vld [vmem:[#allocation7 + $0x88] sm:$0xff]
    %v170 = vld [vmem:[#allocation7 + $0x90] sm:$0xff]
    %v171 = vld [vmem:[#allocation7 + $0x98] sm:$0xff]
    %v172 = vld [vmem:[#allocation7 + $0xa0] sm:$0xff]
    %v173 = vld [vmem:[#allocation7 + $0xa8] sm:$0xff]
    %v174 = vld [vmem:[#allocation7 + $0xb0] sm:$0xff]
    %v175 = vld [vmem:[#allocation7 + $0xb8] sm:$0xff]
    %v176 = vld [vmem:[#allocation7 + $0xc0] sm:$0xff]
    %v177 = vld [vmem:[#allocation7 + $0xc8] sm:$0xff]
    %v178 = vld [vmem:[#allocation7 + $0xd0] sm:$0xff]
    %v179 = vld [vmem:[#allocation7 + $0xd8] sm:$0xff]
    %v180 = vld [vmem:[#allocation7 + $0xe0] sm:$0xff]
    %v181 = vld [vmem:[#allocation7 + $0xe8] sm:$0xff]
    %v182 = vld [vmem:[#allocation7 + $0xf0] sm:$0xff]
    %v183 = vld [vmem:[#allocation7 + $0xf8] sm:$0xff]
    %v184 = vld [vmem:[#allocation7 + $0x100] sm:$0xff]
    %v185 = vld [vmem:[#allocation7 + $0x108] sm:$0xff]
    %v186 = vld [vmem:[#allocation7 + $0x110] sm:$0xff]
    %v187 = vld [vmem:[#allocation7 + $0x118] sm:$0xff]
    %v188 = vld [vmem:[#allocation7 + $0x120] sm:$0xff]
    %v189 = vld [vmem:[#allocation7 + $0x128] sm:$0xff]
    %v190 = vld [vmem:[#allocation7 + $0x130] sm:$0xff]
    %v191 = vld [vmem:[#allocation7 + $0x138] sm:$0xff]
    %v192 = vld [vmem:[#allocation7 + $0x140] sm:$0xff]
    %v193 = vld [vmem:[#allocation7 + $0x148] sm:$0xff]
    %v194 = vld [vmem:[#allocation7 + $0x150] sm:$0xff]
    %v195 = vld [vmem:[#allocation7 + $0x158] sm:$0xff]
    %v196 = vld [vmem:[#allocation7 + $0x160] sm:$0xff]
    %v197 = vld [vmem:[#allocation7 + $0x168] sm:$0xff]
    %v198 = vld [vmem:[#allocation7 + $0x170] sm:$0xff]
    %v199 = vld [vmem:[#allocation7 + $0x178] sm:$0xff]
    %v200 = vld [vmem:[#allocation7 + $0x180] sm:$0xff]
    %v201 = vld [vmem:[#allocation7 + $0x188] sm:$0xff]
    %v202 = vld [vmem:[#allocation7 + $0x190] sm:$0xff]
    %v203 = vld [vmem:[#allocation7 + $0x198] sm:$0xff]
    %v204 = vld [vmem:[#allocation7 + $0x1a0] sm:$0xff]
    %v205 = vld [vmem:[#allocation7 + $0x1a8] sm:$0xff]
    %v206 = vld [vmem:[#allocation7 + $0x1b0] sm:$0xff]
    %v207 = vld [vmem:[#allocation7 + $0x1b8] sm:$0xff]
    %v208 = vld [vmem:[#allocation7 + $0x1c0] sm:$0xff]
    %v209 = vld [vmem:[#allocation7 + $0x1c8] sm:$0xff]
    %v210 = vld [vmem:[#allocation7 + $0x1d0] sm:$0xff]
    %v211 = vld [vmem:[#allocation7 + $0x1d8] sm:$0xff]
    %v212 = vld [vmem:[#allocation7 + $0x1e0] sm:$0xff]
    %v213 = vld [vmem:[#allocation7 + $0x1e8] sm:$0xff]
    %v214 = vld [vmem:[#allocation7 + $0x1f0] sm:$0xff]
    %v215 = vld [vmem:[#allocation7 + $0x1f8] sm:$0xff]
    %v216 = vld [vmem:[#allocation9] sm:$0xff]
    %v217 = vld [vmem:[#allocation9 + $0x8] sm:$0xff]
    %v218 = vld [vmem:[#allocation9 + $0x10] sm:$0xff]
    %v219 = vld [vmem:[#allocation9 + $0x18] sm:$0xff]
    %v220 = vld [vmem:[#allocation9 + $0x20] sm:$0xff]
    %v221 = vld [vmem:[#allocation9 + $0x28] sm:$0xff]
    %v222 = vld [vmem:[#allocation9 + $0x30] sm:$0xff]
    %v223 = vld [vmem:[#allocation9 + $0x38] sm:$0xff]
    %v224 = vld [vmem:[#allocation9 + $0x40] sm:$0xff]
    %v225 = vld [vmem:[#allocation9 + $0x48] sm:$0xff]
    %v226 = vld [vmem:[#allocation9 + $0x50] sm:$0xff]
    %v227 = vld [vmem:[#allocation9 + $0x58] sm:$0xff]
    %v228 = vld [vmem:[#allocation9 + $0x60] sm:$0xff]
    %v229 = vld [vmem:[#allocation9 + $0x68] sm:$0xff]
    %v230 = vld [vmem:[#allocation9 + $0x70] sm:$0xff]
    %v231 = vld [vmem:[#allocation9 + $0x78] sm:$0xff]
    %v232 = vld [vmem:[#allocation9 + $0x80] sm:$0xff]
    %v233 = vld [vmem:[#allocation9 + $0x88] sm:$0xff]
    %v234 = vld [vmem:[#allocation9 + $0x90] sm:$0xff]
    %v235 = vld [vmem:[#allocation9 + $0x98] sm:$0xff]
    %v236 = vld [vmem:[#allocation9 + $0xa0] sm:$0xff]
    %v237 = vld [vmem:[#allocation9 + $0xa8] sm:$0xff]
    %v238 = vld [vmem:[#allocation9 + $0xb0] sm:$0xff]
    %v239 = vld [vmem:[#allocation9 + $0xb8] sm:$0xff]
    %v240 = vld [vmem:[#allocation9 + $0xc0] sm:$0xff]
    %v241 = vld [vmem:[#allocation9 + $0xc8] sm:$0xff]
    %v242 = vld [vmem:[#allocation9 + $0xd0] sm:$0xff]
    %v243 = vld [vmem:[#allocation9 + $0xd8] sm:$0xff]
    %v244 = vld [vmem:[#allocation9 + $0xe0] sm:$0xff]
    %v245 = vld [vmem:[#allocation9 + $0xe8] sm:$0xff]
    %v246 = vld [vmem:[#allocation9 + $0xf0] sm:$0xff]
    %v247 = vld [vmem:[#allocation9 + $0xf8] sm:$0xff]
    %v248 = vld [vmem:[#allocation9 + $0x100] sm:$0xff]
    %v249 = vld [vmem:[#allocation9 + $0x108] sm:$0xff]
    %v250 = vld [vmem:[#allocation9 + $0x110] sm:$0xff]
    %v251 = vld [vmem:[#allocation9 + $0x118] sm:$0xff]
    %v252 = vld [vmem:[#allocation9 + $0x120] sm:$0xff]
    %v253 = vld [vmem:[#allocation9 + $0x128] sm:$0xff]
    %v254 = vld [vmem:[#allocation9 + $0x130] sm:$0xff]
    %v255 = vld [vmem:[#allocation9 + $0x138] sm:$0xff]
    %v256 = vld [vmem:[#allocation9 + $0x140] sm:$0xff]
    %v257 = vld [vmem:[#allocation9 + $0x148] sm:$0xff]
    %v258 = vld [vmem:[#allocation9 + $0x150] sm:$0xff]
    %v259 = vld [vmem:[#allocation9 + $0x158] sm:$0xff]
    %v260 = vld [vmem:[#allocation9 + $0x160] sm:$0xff]
    %v261 = vld [vmem:[#allocation9 + $0x168] sm:$0xff]
    %v262 = vld [vmem:[#allocation9 + $0x170] sm:$0xff]
    %v263 = vld [vmem:[#allocation9 + $0x178] sm:$0xff]
    %v264 = vld [vmem:[#allocation9 + $0x180] sm:$0xff]
    %v265 = vld [vmem:[#allocation9 + $0x188] sm:$0xff]
    %v266 = vld [vmem:[#allocation9 + $0x190] sm:$0xff]
    %v267 = vld [vmem:[#allocation9 + $0x198] sm:$0xff]
    %v268 = vld [vmem:[#allocation9 + $0x1a0] sm:$0xff]
    %v269 = vld [vmem:[#allocation9 + $0x1a8] sm:$0xff]
    %v270 = vld [vmem:[#allocation9 + $0x1b0] sm:$0xff]
    %v271 = vld [vmem:[#allocation9 + $0x1b8] sm:$0xff]
    %v272 = vld [vmem:[#allocation9 + $0x1c0] sm:$0xff]
    %v273 = vld [vmem:[#allocation9 + $0x1c8] sm:$0xff]
    %v274 = vld [vmem:[#allocation9 + $0x1d0] sm:$0xff]
    %v275 = vld [vmem:[#allocation9 + $0x1d8] sm:$0xff]
    %v276 = vld [vmem:[#allocation9 + $0x1e0] sm:$0xff]
    %v277 = vld [vmem:[#allocation9 + $0x1e8] sm:$0xff]
    %v278 = vld [vmem:[#allocation9 + $0x1f0] sm:$0xff]
    %v279 = vld [vmem:[#allocation9 + $0x1f8] sm:$0xff]
    %v280 = vld [vmem:[%s0] sm:$0xff]
    %v281 = vld [vmem:[%s0 + $0x8] sm:$0xff]
    %v282 = vld [vmem:[%s0 + $0x10] sm:$0xff]
    %v283 = vld [vmem:[%s0 + $0x18] sm:$0xff]
    %v284 = vld [vmem:[%s0 + $0x20] sm:$0xff]
    %v285 = vld [vmem:[%s0 + $0x28] sm:$0xff]
    %v286 = vld [vmem:[%s0 + $0x30] sm:$0xff]
    %v287 = vld [vmem:[%s0 + $0x38] sm:$0xff]
    %v288 = vld [vmem:[%s1] sm:$0xff]
    %v289 = vld [vmem:[%s1 + $0x8] sm:$0xff]
    %v290 = vld [vmem:[%s3] sm:$0xf]
    %v292 = vlaneseq
    %v293 = vshrl.u32 %v292, 7
    %v294 = vsub.s32 0, %v293
    %v295 = vrot.slane %v290, %v294
    %v296 = vlaneseq
    %v297 = vshrl.u32 %v296, 7
    %v298 = vsub.s32 1, %v297
    %v299 = vrot.slane %v290, %v298
    %v300 = vlaneseq
    %v301 = vshrl.u32 %v300, 7
    %v302 = vsub.s32 2, %v301
    %v303 = vrot.slane %v290, %v302
    %v304 = vlaneseq
    %v305 = vshrl.u32 %v304, 7
    %v306 = vsub.s32 3, %v305
    %v307 = vrot.slane %v290, %v306
    %v314 = vcombine.high %v288, %v288
    %v315 = vcombine.high %v289, %v289
    %vm316 = vcmask 31744
    %v318 = vsel %vm316, %v280, 0
    %v321 = vsel %vm316, %v281, 0
    %v324 = vsel %vm316, %v282, 0
    %v327 = vsel %vm316, %v283, 0
    %v330 = vsel %vm316, %v284, 0
    %v333 = vsel %vm316, %v285, 0
    %v336 = vsel %vm316, %v286, 0
    %v339 = vsel %vm316, %v287, 0
    %vm341 = vcmask 1043456
    %v342 = vsel %vm341, %v288, 0
    %v344 = vsel %vm341, %v314, 0
    %v346 = vsel %vm341, %v289, 0
    %v348 = vsel %vm341, %v315, 0
    %350 = vmatprep.subr.mxu0 %v344
    %351 = vmatpush1.msra.mxu0 %v342
    %352 = vmatprep.subr.mxu0 0.0
    %353 = vmatpush1.msra.mxu0 0.0
    %354 = vmatprep.subr.mxu0 0.0
    %355 = vmatpush1.msra.mxu0 0.0
    %356 = vmatprep.subr.mxu0 0.0
    %357 = vmatpush1.msra.mxu0 0.0
    %358 = vmatprep.subr.mxu0 0.0
    %359 = vmatpush1.msra.mxu0 0.0
    %360 = vmatprep.subr.mxu0 0.0
    %361 = vmatpush1.msra.mxu0 0.0
    %362 = vmatprep.subr.mxu0 0.0
    %363 = vmatpush1.msra.mxu0 0.0
    %364 = vmatprep.subr.mxu0 0.0
    %365 = vmatpush1.msra.mxu0 0.0
    %366 = vmatprep.subr.mxu0 0.0
    %367 = vmatpush1.msra.mxu0 0.0
    %368 = vmatprep.subr.mxu0 0.0
    %369 = vmatpush1.msra.mxu0 0.0
    %370 = vmatprep.subr.mxu0 0.0
    %371 = vmatpush1.msra.mxu0 0.0
    %372 = vmatprep.subr.mxu0 0.0
    %373 = vmatpush1.msra.mxu0 0.0
    %374 = vmatprep.subr.mxu0 0.0
    %375 = vmatpush1.msra.mxu0 0.0
    %376 = vmatprep.subr.mxu0 0.0
    %377 = vmatpush1.msra.mxu0 0.0
    %378 = vmatprep.subr.mxu0 0.0
    %379 = vmatpush1.msra.mxu0 0.0
    %380 = vmatprep.subr.mxu0 0.0
    %381 = vmatpush1.msra.mxu0 0.0
    %382 = vmatprep.subr.mxu0 0.0
    %383 = vmatpush1.msra.mxu0 0.0
    %384 = vmatprep.subr.mxu0 0.0
    %385 = vmatpush1.msra.mxu0 0.0
    %386 = vmatprep.subr.mxu0 0.0
    %387 = vmatpush1.msra.mxu0 0.0
    %388 = vmatprep.subr.mxu0 0.0
    %389 = vmatpush1.msra.mxu0 0.0
    %390 = vmatprep.subr.mxu0 0.0
    %391 = vmatpush1.msra.mxu0 0.0
    %392 = vmatprep.subr.mxu0 0.0
    %393 = vmatpush1.msra.mxu0 0.0
    %394 = vmatprep.subr.mxu0 0.0
    %395 = vmatpush1.msra.mxu0 0.0
    %396 = vmatprep.subr.mxu0 0.0
    %397 = vmatpush1.msra.mxu0 0.0
    %398 = vmatprep.subr.mxu0 0.0
    %399 = vmatpush1.msra.mxu0 0.0
    %400 = vmatprep.subr.mxu0 0.0
    %401 = vmatpush1.msra.mxu0 0.0
    %402 = vmatprep.subr.mxu0 0.0
    %403 = vmatpush1.msra.mxu0 0.0
    %404 = vmatprep.subr.mxu0 0.0
    %405 = vmatpush1.msra.mxu0 0.0
    %406 = vmatprep.subr.mxu0 0.0
    %407 = vmatpush1.msra.mxu0 0.0
    %408 = vmatprep.subr.mxu0 0.0
    %409 = vmatpush1.msra.mxu0 0.0
    %410 = vmatprep.subr.mxu0 0.0
    %411 = vmatpush1.msra.mxu0 0.0
    %412 = vmatprep.subr.mxu0 0.0
    %413 = vmatpush1.msra.mxu0 0.0
    %414 = vmatprep.mubr.f32.mxu0 0.0
    %415 = vmatmul.mubr.f32.gmra.mrb[0].mxu0 %v318
    %v416 = vpop.f32.mrb[0].mxu0
    %v417 = vadd.f32 %v295, %v416
    %v418 = vpop.f32.mrb[0].mxu0
    %v419 = vadd.f32 %v299, %v418
    %420 = vmatprep.mubr.f32.mxu0 0.0
    %421 = vmatmul.mubr.f32.gmra.mrb[0].mxu0 %v321
    %v422 = vpop.f32.mrb[0].mxu0
    %v423 = vadd.f32 %v295, %v422
    %v424 = vpop.f32.mrb[0].mxu0
    %v425 = vadd.f32 %v299, %v424
    %426 = vmatprep.mubr.f32.mxu0 0.0
    %427 = vmatmul.mubr.f32.gmra.mrb[0].mxu0 %v324
    %v428 = vpop.f32.mrb[0].mxu0
    %v429 = vadd.f32 %v295, %v428
    %v430 = vpop.f32.mrb[0].mxu0
    %v431 = vadd.f32 %v299, %v430
    %432 = vmatprep.mubr.f32.mxu0 0.0
    %433 = vmatmul.mubr.f32.gmra.mrb[0].mxu0 %v327
    %v434 = vpop.f32.mrb[0].mxu0
    %v435 = vadd.f32 %v295, %v434
    %v436 = vpop.f32.mrb[0].mxu0
    %v437 = vadd.f32 %v299, %v436
    %438 = vmatprep.mubr.f32.mxu0 0.0
    %439 = vmatmul.mubr.f32.gmra.mrb[0].mxu0 %v330
    %v440 = vpop.f32.mrb[0].mxu0
    %v441 = vadd.f32 %v295, %v440
    %v442 = vpop.f32.mrb[0].mxu0
    %v443 = vadd.f32 %v299, %v442
    %444 = vmatprep.mubr.f32.mxu0 0.0
    %445 = vmatmul.mubr.f32.gmra.mrb[0].mxu0 %v333
    %v446 = vpop.f32.mrb[0].mxu0
    %v447 = vadd.f32 %v295, %v446
    %v448 = vpop.f32.mrb[0].mxu0
    %v449 = vadd.f32 %v299, %v448
    %450 = vmatprep.mubr.f32.mxu0 0.0
    %451 = vmatmul.mubr.f32.gmra.mrb[0].mxu0 %v336
    %v452 = vpop.f32.mrb[0].mxu0
    %v453 = vadd.f32 %v295, %v452
    %v454 = vpop.f32.mrb[0].mxu0
    %v455 = vadd.f32 %v299, %v454
    %456 = vmatprep.mubr.f32.mxu0 0.0
    %457 = vmatmul.mubr.f32.gmra.mrb[0].mxu0 %v339
    %v458 = vpop.f32.mrb[0].mxu0
    %v459 = vadd.f32 %v295, %v458
    %v460 = vpop.f32.mrb[0].mxu0
    %v461 = vadd.f32 %v299, %v460
    %462 = vdwg.mxu0
    %463 = vmatprep.subr.mxu0 %v348
    %464 = vmatpush1.msra.mxu0 %v346
    %465 = vmatprep.subr.mxu0 0.0
    %466 = vmatpush1.msra.mxu0 0.0
    %467 = vmatprep.subr.mxu0 0.0
    %468 = vmatpush1.msra.mxu0 0.0
    %469 = vmatprep.subr.mxu0 0.0
    %470 = vmatpush1.msra.mxu0 0.0
    %471 = vmatprep.subr.mxu0 0.0
    %472 = vmatpush1.msra.mxu0 0.0
    %473 = vmatprep.subr.mxu0 0.0
    %474 = vmatpush1.msra.mxu0 0.0
    %475 = vmatprep.subr.mxu0 0.0
    %476 = vmatpush1.msra.mxu0 0.0
    %477 = vmatprep.subr.mxu0 0.0
    %478 = vmatpush1.msra.mxu0 0.0
    %479 = vmatprep.subr.mxu0 0.0
    %480 = vmatpush1.msra.mxu0 0.0
    %481 = vmatprep.subr.mxu0 0.0
    %482 = vmatpush1.msra.mxu0 0.0
    %483 = vmatprep.subr.mxu0 0.0
    %484 = vmatpush1.msra.mxu0 0.0
    %485 = vmatprep.subr.mxu0 0.0
    %486 = vmatpush1.msra.mxu0 0.0
    %487 = vmatprep.subr.mxu0 0.0
    %488 = vmatpush1.msra.mxu0 0.0
    %489 = vmatprep.subr.mxu0 0.0
    %490 = vmatpush1.msra.mxu0 0.0
    %491 = vmatprep.subr.mxu0 0.0
    %492 = vmatpush1.msra.mxu0 0.0
    %493 = vmatprep.subr.mxu0 0.0
    %494 = vmatpush1.msra.mxu0 0.0
    %495 = vmatprep.subr.mxu0 0.0
    %496 = vmatpush1.msra.mxu0 0.0
    %497 = vmatprep.subr.mxu0 0.0
    %498 = vmatpush1.msra.mxu0 0.0
    %499 = vmatprep.subr.mxu0 0.0
    %500 = vmatpush1.msra.mxu0 0.0
    %501 = vmatprep.subr.mxu0 0.0
    %502 = vmatpush1.msra.mxu0 0.0
    %503 = vmatprep.subr.mxu0 0.0
    %504 = vmatpush1.msra.mxu0 0.0
    %505 = vmatprep.subr.mxu0 0.0
    %506 = vmatpush1.msra.mxu0 0.0
    %507 = vmatprep.subr.mxu0 0.0
    %508 = vmatpush1.msra.mxu0 0.0
    %509 = vmatprep.subr.mxu0 0.0
    %510 = vmatpush1.msra.mxu0 0.0
    %511 = vmatprep.subr.mxu0 0.0
    %512 = vmatpush1.msra.mxu0 0.0
    %513 = vmatprep.subr.mxu0 0.0
    %514 = vmatpush1.msra.mxu0 0.0
    %515 = vmatprep.subr.mxu0 0.0
    %516 = vmatpush1.msra.mxu0 0.0
    %517 = vmatprep.subr.mxu0 0.0
    %518 = vmatpush1.msra.mxu0 0.0
    %519 = vmatprep.subr.mxu0 0.0
    %520 = vmatpush1.msra.mxu0 0.0
    %521 = vmatprep.subr.mxu0 0.0
    %522 = vmatpush1.msra.mxu0 0.0
    %523 = vmatprep.subr.mxu0 0.0
    %524 = vmatpush1.msra.mxu0 0.0
    %525 = vmatprep.subr.mxu0 0.0
    %526 = vmatpush1.msra.mxu0 0.0
    %527 = vmatprep.mubr.f32.mxu0 0.0
    %528 = vmatmul.mubr.f32.gmra.mrb[0].mxu0 %v318
    %v529 = vpop.f32.mrb[0].mxu0
    %v530 = vadd.f32 %v303, %v529
    %v531 = vpop.f32.mrb[0].mxu0
    %v532 = vadd.f32 %v307, %v531
    %533 = vmatprep.mubr.f32.mxu0 0.0
    %534 = vmatmul.mubr.f32.gmra.mrb[0].mxu0 %v321
    %v535 = vpop.f32.mrb[0].mxu0
    %v536 = vadd.f32 %v303, %v535
    %v537 = vpop.f32.mrb[0].mxu0
    %v538 = vadd.f32 %v307, %v537
    %539 = vmatprep.mubr.f32.mxu0 0.0
    %540 = vmatmul.mubr.f32.gmra.mrb[0].mxu0 %v324
    %v541 = vpop.f32.mrb[0].mxu0
    %v542 = vadd.f32 %v303, %v541
    %v543 = vpop.f32.mrb[0].mxu0
    %v544 = vadd.f32 %v307, %v543
    %545 = vmatprep.mubr.f32.mxu0 0.0
    %546 = vmatmul.mubr.f32.gmra.mrb[0].mxu0 %v327
    %v547 = vpop.f32.mrb[0].mxu0
    %v548 = vadd.f32 %v303, %v547
    %v549 = vpop.f32.mrb[0].mxu0
    %v550 = vadd.f32 %v307, %v549
    %551 = vmatprep.mubr.f32.mxu0 0.0
    %552 = vmatmul.mubr.f32.gmra.mrb[0].mxu0 %v330
    %v553 = vpop.f32.mrb[0].mxu0
    %v554 = vadd.f32 %v303, %v553
    %v555 = vpop.f32.mrb[0].mxu0
    %v556 = vadd.f32 %v307, %v555
    %557 = vmatprep.mubr.f32.mxu0 0.0
    %558 = vmatmul.mubr.f32.gmra.mrb[0].mxu0 %v333
    %v559 = vpop.f32.mrb[0].mxu0
    %v560 = vadd.f32 %v303, %v559
    %v561 = vpop.f32.mrb[0].mxu0
    %v562 = vadd.f32 %v307, %v561
    %563 = vmatprep.mubr.f32.mxu0 0.0
    %564 = vmatmul.mubr.f32.gmra.mrb[0].mxu0 %v336
    %v565 = vpop.f32.mrb[0].mxu0
    %v566 = vadd.f32 %v303, %v565
    %v567 = vpop.f32.mrb[0].mxu0
    %v568 = vadd.f32 %v307, %v567
    %569 = vmatprep.mubr.f32.mxu0 0.0
    %570 = vmatmul.mubr.f32.gmra.mrb[0].mxu0 %v339
    %v571 = vpop.f32.mrb[0].mxu0
    %v572 = vadd.f32 %v303, %v571
    %v573 = vpop.f32.mrb[0].mxu0
    %v574 = vadd.f32 %v307, %v573
    %575 = vdwg.mxu0
    %576 = vst [vmem:[#allocation2] sm:$0xff] %v417
    %577 = vst [vmem:[#allocation2 + $0x8] sm:$0xff] %v419
    %578 = vst [vmem:[#allocation2 + $0x10] sm:$0xff] %v530
    %579 = vst [vmem:[#allocation2 + $0x18] sm:$0xff] %v532
    %580 = vst [vmem:[#allocation2 + $0x20] sm:$0xff] %v423
    %581 = vst [vmem:[#allocation2 + $0x28] sm:$0xff] %v425
    %582 = vst [vmem:[#allocation2 + $0x30] sm:$0xff] %v536
    %583 = vst [vmem:[#allocation2 + $0x38] sm:$0xff] %v538
    %584 = vst [vmem:[#allocation2 + $0x40] sm:$0xff] %v429
    %585 = vst [vmem:[#allocation2 + $0x48] sm:$0xff] %v431
    %586 = vst [vmem:[#allocation2 + $0x50] sm:$0xff] %v542
    %587 = vst [vmem:[#allocation2 + $0x58] sm:$0xff] %v544
    %588 = vst [vmem:[#allocation2 + $0x60] sm:$0xff] %v435
    %589 = vst [vmem:[#allocation2 + $0x68] sm:$0xff] %v437
    %590 = vst [vmem:[#allocation2 + $0x70] sm:$0xff] %v548
    %591 = vst [vmem:[#allocation2 + $0x78] sm:$0xff] %v550
    %592 = vst [vmem:[#allocation2 + $0x80] sm:$0xff] %v441
    %593 = vst [vmem:[#allocation2 + $0x88] sm:$0xff] %v443
    %594 = vst [vmem:[#allocation2 + $0x90] sm:$0xff] %v554
    %595 = vst [vmem:[#allocation2 + $0x98] sm:$0xff] %v556
    %596 = vst [vmem:[#allocation2 + $0xa0] sm:$0xff] %v447
    %597 = vst [vmem:[#allocation2 + $0xa8] sm:$0xff] %v449
    %598 = vst [vmem:[#allocation2 + $0xb0] sm:$0xff] %v560
    %599 = vst [vmem:[#allocation2 + $0xb8] sm:$0xff] %v562
    %600 = vst [vmem:[#allocation2 + $0xc0] sm:$0xff] %v453
    %601 = vst [vmem:[#allocation2 + $0xc8] sm:$0xff] %v455
    %602 = vst [vmem:[#allocation2 + $0xd0] sm:$0xff] %v566
    %603 = vst [vmem:[#allocation2 + $0xd8] sm:$0xff] %v568
    %604 = vst [vmem:[#allocation2 + $0xe0] sm:$0xff] %v459
    %605 = vst [vmem:[#allocation2 + $0xe8] sm:$0xff] %v461
    %606 = vst [vmem:[#allocation2 + $0xf0] sm:$0xff] %v572
    %607 = vst [vmem:[#allocation2 + $0xf8] sm:$0xff] %v574
    %s608 = smul.u32 0, 4
    %s609 = smul.addr %s608, 8
    %s610 = scalar_lea.vmem [#allocation2], %s609
    %v611 = vld [vmem:[%s610] sm:$0xff]
    %v612 = vld [vmem:[%s610 + $0x8] sm:$0xff]
    %v613 = vld [vmem:[%s610 + $0x10] sm:$0xff]
    %v614 = vld [vmem:[%s610 + $0x18] sm:$0xff]
    %615 = vmatprep.subr.mxu0 %v89
    %616 = vmatpush1.msra.mxu0 %v88
    %617 = vmatprep.subr.mxu0 %v93
    %618 = vmatpush1.msra.mxu0 %v92
    %619 = vmatprep.subr.mxu0 %v97
    %620 = vmatpush1.msra.mxu0 %v96
    %621 = vmatprep.subr.mxu0 %v101
    %622 = vmatpush1.msra.mxu0 %v100
    %623 = vmatprep.subr.mxu0 %v105
    %624 = vmatpush1.msra.mxu0 %v104
    %625 = vmatprep.subr.mxu0 %v109
    %626 = vmatpush1.msra.mxu0 %v108
    %627 = vmatprep.subr.mxu0 %v113
    %628 = vmatpush1.msra.mxu0 %v112
    %629 = vmatprep.subr.mxu0 %v117
    %630 = vmatpush1.msra.mxu0 %v116
    %631 = vmatprep.subr.mxu0 %v121
    %632 = vmatpush1.msra.mxu0 %v120
    %633 = vmatprep.subr.mxu0 %v125
    %634 = vmatpush1.msra.mxu0 %v124
    %635 = vmatprep.subr.mxu0 %v129
    %636 = vmatpush1.msra.mxu0 %v128
    %637 = vmatprep.subr.mxu0 %v133
    %638 = vmatpush1.msra.mxu0 %v132
    %639 = vmatprep.subr.mxu0 %v137
    %640 = vmatpush1.msra.mxu0 %v136
    %641 = vmatprep.subr.mxu0 %v141
    %642 = vmatpush1.msra.mxu0 %v140
    %643 = vmatprep.subr.mxu0 %v145
    %644 = vmatpush1.msra.mxu0 %v144
    %645 = vmatprep.subr.mxu0 %v149
    %646 = vmatpush1.msra.mxu0 %v148
    %647 = vmatprep.subr.mxu0 0.0
    %648 = vmatpush1.msra.mxu0 0.0
    %649 = vmatprep.subr.mxu0 0.0
    %650 = vmatpush1.msra.mxu0 0.0
    %651 = vmatprep.subr.mxu0 0.0
    %652 = vmatpush1.msra.mxu0 0.0
    %653 = vmatprep.subr.mxu0 0.0
    %654 = vmatpush1.msra.mxu0 0.0
    %655 = vmatprep.subr.mxu0 0.0
    %656 = vmatpush1.msra.mxu0 0.0
    %657 = vmatprep.subr.mxu0 0.0
    %658 = vmatpush1.msra.mxu0 0.0
    %659 = vmatprep.subr.mxu0 0.0
    %660 = vmatpush1.msra.mxu0 0.0
    %661 = vmatprep.subr.mxu0 0.0
    %662 = vmatpush1.msra.mxu0 0.0
    %663 = vmatprep.subr.mxu0 0.0
    %664 = vmatpush1.msra.mxu0 0.0
    %665 = vmatprep.subr.mxu0 0.0
    %666 = vmatpush1.msra.mxu0 0.0
    %667 = vmatprep.subr.mxu0 0.0
    %668 = vmatpush1.msra.mxu0 0.0
    %669 = vmatprep.subr.mxu0 0.0
    %670 = vmatpush1.msra.mxu0 0.0
    %671 = vmatprep.subr.mxu0 0.0
    %672 = vmatpush1.msra.mxu0 0.0
    %673 = vmatprep.subr.mxu0 0.0
    %674 = vmatpush1.msra.mxu0 0.0
    %675 = vmatprep.subr.mxu0 0.0
    %676 = vmatpush1.msra.mxu0 0.0
    %677 = vmatprep.subr.mxu0 0.0
    %678 = vmatpush1.msra.mxu0 0.0
    %679 = vmatprep.mubr.f32.mxu0 0.0
    %680 = vmatmul.mubr.f32.gmra.mrb[0].mxu0 0.0
    %v681 = vpop.f32.mrb[0].mxu0
    %v682 = vadd.f32 0.0, %v681
    %v683 = vpop.f32.mrb[0].mxu0
    %v684 = vadd.f32 0.0, %v683
    %685 = vdwg.mxu0
    %686 = vmatprep.subr.mxu0 %v91
    %687 = vmatpush1.msra.mxu0 %v90
    %688 = vmatprep.subr.mxu0 %v95
    %689 = vmatpush1.msra.mxu0 %v94
    %690 = vmatprep.subr.mxu0 %v99
    %691 = vmatpush1.msra.mxu0 %v98
    %692 = vmatprep.subr.mxu0 %v103
    %693 = vmatpush1.msra.mxu0 %v102
    %694 = vmatprep.subr.mxu0 %v107
    %695 = vmatpush1.msra.mxu0 %v106
    %696 = vmatprep.subr.mxu0 %v111
    %697 = vmatpush1.msra.mxu0 %v110
    %698 = vmatprep.subr.mxu0 %v115
    %699 = vmatpush1.msra.mxu0 %v114
    %700 = vmatprep.subr.mxu0 %v119
    %701 = vmatpush1.msra.mxu0 %v118
    %702 = vmatprep.subr.mxu0 %v123
    %703 = vmatpush1.msra.mxu0 %v122
    %704 = vmatprep.subr.mxu0 %v127
    %705 = vmatpush1.msra.mxu0 %v126
    %706 = vmatprep.subr.mxu0 %v131
    %707 = vmatpush1.msra.mxu0 %v130
    %708 = vmatprep.subr.mxu0 %v135
    %709 = vmatpush1.msra.mxu0 %v134
    %710 = vmatprep.subr.mxu0 %v139
    %711 = vmatpush1.msra.mxu0 %v138
    %712 = vmatprep.subr.mxu0 %v143
    %713 = vmatpush1.msra.mxu0 %v142
    %714 = vmatprep.subr.mxu0 %v147
    %715 = vmatpush1.msra.mxu0 %v146
    %716 = vmatprep.subr.mxu0 %v151
    %717 = vmatpush1.msra.mxu0 %v150
    %718 = vmatprep.subr.mxu0 0.0
    %719 = vmatpush1.msra.mxu0 0.0
    %720 = vmatprep.subr.mxu0 0.0
    %721 = vmatpush1.msra.mxu0 0.0
    %722 = vmatprep.subr.mxu0 0.0
    %723 = vmatpush1.msra.mxu0 0.0
    %724 = vmatprep.subr.mxu0 0.0
    %725 = vmatpush1.msra.mxu0 0.0
    %726 = vmatprep.subr.mxu0 0.0
    %727 = vmatpush1.msra.mxu0 0.0
    %728 = vmatprep.subr.mxu0 0.0
    %729 = vmatpush1.msra.mxu0 0.0
    %730 = vmatprep.subr.mxu0 0.0
    %731 = vmatpush1.msra.mxu0 0.0
    %732 = vmatprep.subr.mxu0 0.0
    %733 = vmatpush1.msra.mxu0 0.0
    %734 = vmatprep.subr.mxu0 0.0
    %735 = vmatpush1.msra.mxu0 0.0
    %736 = vmatprep.subr.mxu0 0.0
    %737 = vmatpush1.msra.mxu0 0.0
    %738 = vmatprep.subr.mxu0 0.0
    %739 = vmatpush1.msra.mxu0 0.0
    %740 = vmatprep.subr.mxu0 0.0
    %741 = vmatpush1.msra.mxu0 0.0
    %742 = vmatprep.subr.mxu0 0.0
    %743 = vmatpush1.msra.mxu0 0.0
    %744 = vmatprep.subr.mxu0 0.0
    %745 = vmatpush1.msra.mxu0 0.0
    %746 = vmatprep.subr.mxu0 0.0
    %747 = vmatpush1.msra.mxu0 0.0
    %748 = vmatprep.subr.mxu0 0.0
    %749 = vmatpush1.msra.mxu0 0.0
    %750 = vmatprep.mubr.f32.mxu0 0.0
    %751 = vmatmul.mubr.f32.gmra.mrb[0].mxu0 0.0
    %v752 = vpop.f32.mrb[0].mxu0
    %v753 = vadd.f32 0.0, %v752
    %v754 = vpop.f32.mrb[0].mxu0
    %v755 = vadd.f32 0.0, %v754
    %756 = vdwg.mxu0
    %v757 = vadd.f32 %v611, %v682
    %v758 = vadd.f32 %v612, %v684
    %v759 = vadd.f32 %v613, %v753
    %v760 = vadd.f32 %v614, %v755
    %v761 = vxor.u32 %v757, 2147483648
    %v762 = vmul.f32 %v761, 1.442695
    %v763 = vpow.pop %v762
    %v764 = vadd.f32 %v763, 1.0
    %v765 = vrcp.pop %v764
    %v766 = vmul.f32 1.0, %v765
    %v767 = vxor.u32 %v758, 2147483648
    %v768 = vmul.f32 %v767, 1.442695
    %v769 = vpow.pop %v768
    %v770 = vadd.f32 %v769, 1.0
    %v771 = vrcp.pop %v770
    %v772 = vmul.f32 1.0, %v771
    %v773 = vtanh.pop %v759
    %v774 = vxor.u32 %v760, 2147483648
    %v775 = vmul.f32 %v774, 1.442695
    %v776 = vpow.pop %v775
    %v777 = vadd.f32 %v776, 1.0
    %v778 = vrcp.pop %v777
    %v779 = vmul.f32 1.0, %v778
    %v780 = vmul.f32 %v772, 0.0
    %v781 = vmul.f32 %v766, %v773
    %v782 = vadd.f32 %v780, %v781
    %v783 = vtanh.pop %v782
    %v784 = vmul.f32 %v779, %v783
    %s785 = smul.u32 1, 4
    %s786 = smul.addr %s785, 8
    %s787 = scalar_lea.vmem [#allocation2], %s786
    %v788 = vld [vmem:[%s787] sm:$0xff]
    %v789 = vld [vmem:[%s787 + $0x8] sm:$0xff]
    %v790 = vld [vmem:[%s787 + $0x10] sm:$0xff]
    %v791 = vld [vmem:[%s787 + $0x18] sm:$0xff]
    %792 = vmatprep.subr.mxu0 %v89
    %793 = vmatpush1.msra.mxu0 %v88
    %794 = vmatprep.subr.mxu0 %v93
    %795 = vmatpush1.msra.mxu0 %v92
    %796 = vmatprep.subr.mxu0 %v97
    %797 = vmatpush1.msra.mxu0 %v96
    %798 = vmatprep.subr.mxu0 %v101
    %799 = vmatpush1.msra.mxu0 %v100
    %800 = vmatprep.subr.mxu0 %v105
    %801 = vmatpush1.msra.mxu0 %v104
    %802 = vmatprep.subr.mxu0 %v109
    %803 = vmatpush1.msra.mxu0 %v108
    %804 = vmatprep.subr.mxu0 %v113
    %805 = vmatpush1.msra.mxu0 %v112
    %806 = vmatprep.subr.mxu0 %v117
    %807 = vmatpush1.msra.mxu0 %v116
    %808 = vmatprep.subr.mxu0 %v121
    %809 = vmatpush1.msra.mxu0 %v120
    %810 = vmatprep.subr.mxu0 %v125
    %811 = vmatpush1.msra.mxu0 %v124
    %812 = vmatprep.subr.mxu0 %v129
    %813 = vmatpush1.msra.mxu0 %v128
    %814 = vmatprep.subr.mxu0 %v133
    %815 = vmatpush1.msra.mxu0 %v132
    %816 = vmatprep.subr.mxu0 %v137
    %817 = vmatpush1.msra.mxu0 %v136
    %818 = vmatprep.subr.mxu0 %v141
    %819 = vmatpush1.msra.mxu0 %v140
    %820 = vmatprep.subr.mxu0 %v145
    %821 = vmatpush1.msra.mxu0 %v144
    %822 = vmatprep.subr.mxu0 %v149
    %823 = vmatpush1.msra.mxu0 %v148
    %824 = vmatprep.subr.mxu0 0.0
    %825 = vmatpush1.msra.mxu0 0.0
    %826 = vmatprep.subr.mxu0 0.0
    %827 = vmatpush1.msra.mxu0 0.0
    %828 = vmatprep.subr.mxu0 0.0
    %829 = vmatpush1.msra.mxu0 0.0
    %830 = vmatprep.subr.mxu0 0.0
    %831 = vmatpush1.msra.mxu0 0.0
    %832 = vmatprep.subr.mxu0 0.0
    %833 = vmatpush1.msra.mxu0 0.0
    %834 = vmatprep.subr.mxu0 0.0
    %835 = vmatpush1.msra.mxu0 0.0
    %836 = vmatprep.subr.mxu0 0.0
    %837 = vmatpush1.msra.mxu0 0.0
    %838 = vmatprep.subr.mxu0 0.0
    %839 = vmatpush1.msra.mxu0 0.0
    %840 = vmatprep.subr.mxu0 0.0
    %841 = vmatpush1.msra.mxu0 0.0
    %842 = vmatprep.subr.mxu0 0.0
    %843 = vmatpush1.msra.mxu0 0.0
    %844 = vmatprep.subr.mxu0 0.0
    %845 = vmatpush1.msra.mxu0 0.0
    %846 = vmatprep.subr.mxu0 0.0
    %847 = vmatpush1.msra.mxu0 0.0
    %848 = vmatprep.subr.mxu0 0.0
    %849 = vmatpush1.msra.mxu0 0.0
    %850 = vmatprep.subr.mxu0 0.0
    %851 = vmatpush1.msra.mxu0 0.0
    %852 = vmatprep.subr.mxu0 0.0
    %853 = vmatpush1.msra.mxu0 0.0
    %854 = vmatprep.subr.mxu0 0.0
    %855 = vmatpush1.msra.mxu0 0.0
    %856 = vmatprep.mubr.f32.mxu0 0.0
    %857 = vmatmul.mubr.f32.gmra.mrb[0].mxu0 %v784
    %v858 = vpop.f32.mrb[0].mxu0
    %v859 = vadd.f32 0.0, %v858
    %v860 = vpop.f32.mrb[0].mxu0
    %v861 = vadd.f32 0.0, %v860
    %862 = vdwg.mxu0
    %863 = vmatprep.subr.mxu0 %v91
    %864 = vmatpush1.msra.mxu0 %v90
    %865 = vmatprep.subr.mxu0 %v95
    %866 = vmatpush1.msra.mxu0 %v94
    %867 = vmatprep.subr.mxu0 %v99
    %868 = vmatpush1.msra.mxu0 %v98
    %869 = vmatprep.subr.mxu0 %v103
    %870 = vmatpush1.msra.mxu0 %v102
    %871 = vmatprep.subr.mxu0 %v107
    %872 = vmatpush1.msra.mxu0 %v106
    %873 = vmatprep.subr.mxu0 %v111
    %874 = vmatpush1.msra.mxu0 %v110
    %875 = vmatprep.subr.mxu0 %v115
    %876 = vmatpush1.msra.mxu0 %v114
    %877 = vmatprep.subr.mxu0 %v119
    %878 = vmatpush1.msra.mxu0 %v118
    %879 = vmatprep.subr.mxu0 %v123
    %880 = vmatpush1.msra.mxu0 %v122
    %881 = vmatprep.subr.mxu0 %v127
    %882 = vmatpush1.msra.mxu0 %v126
    %883 = vmatprep.subr.mxu0 %v131
    %884 = vmatpush1.msra.mxu0 %v130
    %885 = vmatprep.subr.mxu0 %v135
    %886 = vmatpush1.msra.mxu0 %v134
    %887 = vmatprep.subr.mxu0 %v139
    %888 = vmatpush1.msra.mxu0 %v138
    %889 = vmatprep.subr.mxu0 %v143
    %890 = vmatpush1.msra.mxu0 %v142
    %891 = vmatprep.subr.mxu0 %v147
    %892 = vmatpush1.msra.mxu0 %v146
    %893 = vmatprep.subr.mxu0 %v151
    %894 = vmatpush1.msra.mxu0 %v150
    %895 = vmatprep.subr.mxu0 0.0
    %896 = vmatpush1.msra.mxu0 0.0
    %897 = vmatprep.subr.mxu0 0.0
    %898 = vmatpush1.msra.mxu0 0.0
    %899 = vmatprep.subr.mxu0 0.0
    %900 = vmatpush1.msra.mxu0 0.0
    %901 = vmatprep.subr.mxu0 0.0
    %902 = vmatpush1.msra.mxu0 0.0
    %903 = vmatprep.subr.mxu0 0.0
    %904 = vmatpush1.msra.mxu0 0.0
    %905 = vmatprep.subr.mxu0 0.0
    %906 = vmatpush1.msra.mxu0 0.0
    %907 = vmatprep.subr.mxu0 0.0
    %908 = vmatpush1.msra.mxu0 0.0
    %909 = vmatprep.subr.mxu0 0.0
    %910 = vmatpush1.msra.mxu0 0.0
    %911 = vmatprep.subr.mxu0 0.0
    %912 = vmatpush1.msra.mxu0 0.0
    %913 = vmatprep.subr.mxu0 0.0
    %914 = vmatpush1.msra.mxu0 0.0
    %915 = vmatprep.subr.mxu0 0.0
    %916 = vmatpush1.msra.mxu0 0.0
    %917 = vmatprep.subr.mxu0 0.0
    %918 = vmatpush1.msra.mxu0 0.0
    %919 = vmatprep.subr.mxu0 0.0
    %920 = vmatpush1.msra.mxu0 0.0
    %921 = vmatprep.subr.mxu0 0.0
    %922 = vmatpush1.msra.mxu0 0.0
    %923 = vmatprep.subr.mxu0 0.0
    %924 = vmatpush1.msra.mxu0 0.0
    %925 = vmatprep.subr.mxu0 0.0
    %926 = vmatpush1.msra.mxu0 0.0
    %927 = vmatprep.mubr.f32.mxu0 0.0
    %928 = vmatmul.mubr.f32.gmra.mrb[0].mxu0 %v784
    %v929 = vpop.f32.mrb[0].mxu0
    %v930 = vadd.f32 0.0, %v929
    %v931 = vpop.f32.mrb[0].mxu0
    %v932 = vadd.f32 0.0, %v931
    %933 = vdwg.mxu0
    %v934 = vadd.f32 %v788, %v859
    %v935 = vadd.f32 %v789, %v861
    %v936 = vadd.f32 %v790, %v930
    %v937 = vadd.f32 %v791, %v932
    %v938 = vxor.u32 %v934, 2147483648
    %v939 = vmul.f32 %v938, 1.442695
    %v940 = vpow.pop %v939
    %v941 = vadd.f32 %v940, 1.0
    %v942 = vrcp.pop %v941
    %v943 = vmul.f32 1.0, %v942
    %v944 = vxor.u32 %v935, 2147483648
    %v945 = vmul.f32 %v944, 1.442695
    %v946 = vpow.pop %v945
    %v947 = vadd.f32 %v946, 1.0
    %v948 = vrcp.pop %v947
    %v949 = vmul.f32 1.0, %v948
    %v950 = vtanh.pop %v936
    %v951 = vxor.u32 %v937, 2147483648
    %v952 = vmul.f32 %v951, 1.442695
    %v953 = vpow.pop %v952
    %v954 = vadd.f32 %v953, 1.0
    %v955 = vrcp.pop %v954
    %v956 = vmul.f32 1.0, %v955
    %v957 = vmul.f32 %v949, %v782
    %v958 = vmul.f32 %v943, %v950
    %v959 = vadd.f32 %v957, %v958
    %v960 = vtanh.pop %v959
    %v961 = vmul.f32 %v956, %v960
    %s962 = smul.u32 2, 4
    %s963 = smul.addr %s962, 8
    %s964 = scalar_lea.vmem [#allocation2], %s963
    %v965 = vld [vmem:[%s964] sm:$0xff]
    %v966 = vld [vmem:[%s964 + $0x8] sm:$0xff]
    %v967 = vld [vmem:[%s964 + $0x10] sm:$0xff]
    %v968 = vld [vmem:[%s964 + $0x18] sm:$0xff]
    %969 = vmatprep.subr.mxu0 %v89
    %970 = vmatpush1.msra.mxu0 %v88
    %971 = vmatprep.subr.mxu0 %v93
    %972 = vmatpush1.msra.mxu0 %v92
    %973 = vmatprep.subr.mxu0 %v97
    %974 = vmatpush1.msra.mxu0 %v96
    %975 = vmatprep.subr.mxu0 %v101
    %976 = vmatpush1.msra.mxu0 %v100
    %977 = vmatprep.subr.mxu0 %v105
    %978 = vmatpush1.msra.mxu0 %v104
    %979 = vmatprep.subr.mxu0 %v109
    %980 = vmatpush1.msra.mxu0 %v108
    %981 = vmatprep.subr.mxu0 %v113
    %982 = vmatpush1.msra.mxu0 %v112
    %983 = vmatprep.subr.mxu0 %v117
    %984 = vmatpush1.msra.mxu0 %v116
    %985 = vmatprep.subr.mxu0 %v121
    %986 = vmatpush1.msra.mxu0 %v120
    %987 = vmatprep.subr.mxu0 %v125
    %988 = vmatpush1.msra.mxu0 %v124
    %989 = vmatprep.subr.mxu0 %v129
    %990 = vmatpush1.msra.mxu0 %v128
    %991 = vmatprep.subr.mxu0 %v133
    %992 = vmatpush1.msra.mxu0 %v132
    %993 = vmatprep.subr.mxu0 %v137
    %994 = vmatpush1.msra.mxu0 %v136
    %995 = vmatprep.subr.mxu0 %v141
    %996 = vmatpush1.msra.mxu0 %v140
    %997 = vmatprep.subr.mxu0 %v145
    %998 = vmatpush1.msra.mxu0 %v144
    %999 = vmatprep.subr.mxu0 %v149
    %1000 = vmatpush1.msra.mxu0 %v148
    %1001 = vmatprep.subr.mxu0 0.0
    %1002 = vmatpush1.msra.mxu0 0.0
    %1003 = vmatprep.subr.mxu0 0.0
    %1004 = vmatpush1.msra.mxu0 0.0
    %1005 = vmatprep.subr.mxu0 0.0
    %1006 = vmatpush1.msra.mxu0 0.0
    %1007 = vmatprep.subr.mxu0 0.0
    %1008 = vmatpush1.msra.mxu0 0.0
    %1009 = vmatprep.subr.mxu0 0.0
    %1010 = vmatpush1.msra.mxu0 0.0
    %1011 = vmatprep.subr.mxu0 0.0
    %1012 = vmatpush1.msra.mxu0 0.0
    %1013 = vmatprep.subr.mxu0 0.0
    %1014 = vmatpush1.msra.mxu0 0.0
    %1015 = vmatprep.subr.mxu0 0.0
    %1016 = vmatpush1.msra.mxu0 0.0
    %1017 = vmatprep.subr.mxu0 0.0
    %1018 = vmatpush1.msra.mxu0 0.0
    %1019 = vmatprep.subr.mxu0 0.0
    %1020 = vmatpush1.msra.mxu0 0.0
    %1021 = vmatprep.subr.mxu0 0.0
    %1022 = vmatpush1.msra.mxu0 0.0
    %1023 = vmatprep.subr.mxu0 0.0
    %1024 = vmatpush1.msra.mxu0 0.0
    %1025 = vmatprep.subr.mxu0 0.0
    %1026 = vmatpush1.msra.mxu0 0.0
    %1027 = vmatprep.subr.mxu0 0.0
    %1028 = vmatpush1.msra.mxu0 0.0
    %1029 = vmatprep.subr.mxu0 0.0
    %1030 = vmatpush1.msra.mxu0 0.0
    %1031 = vmatprep.subr.mxu0 0.0
    %1032 = vmatpush1.msra.mxu0 0.0
    %1033 = vmatprep.mubr.f32.mxu0 0.0
    %1034 = vmatmul.mubr.f32.gmra.mrb[0].mxu0 %v961
    %v1035 = vpop.f32.mrb[0].mxu0
    %v1036 = vadd.f32 0.0, %v1035
    %v1037 = vpop.f32.mrb[0].mxu0
    %v1038 = vadd.f32 0.0, %v1037
    %1039 = vdwg.mxu0
    %1040 = vmatprep.subr.mxu0 %v91
    %1041 = vmatpush1.msra.mxu0 %v90
    %1042 = vmatprep.subr.mxu0 %v95
    %1043 = vmatpush1.msra.mxu0 %v94
    %1044 = vmatprep.subr.mxu0 %v99
    %1045 = vmatpush1.msra.mxu0 %v98
    %1046 = vmatprep.subr.mxu0 %v103
    %1047 = vmatpush1.msra.mxu0 %v102
    %1048 = vmatprep.subr.mxu0 %v107
    %1049 = vmatpush1.msra.mxu0 %v106
    %1050 = vmatprep.subr.mxu0 %v111
    %1051 = vmatpush1.msra.mxu0 %v110
    %1052 = vmatprep.subr.mxu0 %v115
    %1053 = vmatpush1.msra.mxu0 %v114
    %1054 = vmatprep.subr.mxu0 %v119
    %1055 = vmatpush1.msra.mxu0 %v118
    %1056 = vmatprep.subr.mxu0 %v123
    %1057 = vmatpush1.msra.mxu0 %v122
    %1058 = vmatprep.subr.mxu0 %v127
    %1059 = vmatpush1.msra.mxu0 %v126
    %1060 = vmatprep.subr.mxu0 %v131
    %1061 = vmatpush1.msra.mxu0 %v130
    %1062 = vmatprep.subr.mxu0 %v135
    %1063 = vmatpush1.msra.mxu0 %v134
    %1064 = vmatprep.subr.mxu0 %v139
    %1065 = vmatpush1.msra.mxu0 %v138
    %1066 = vmatprep.subr.mxu0 %v143
    %1067 = vmatpush1.msra.mxu0 %v142
    %1068 = vmatprep.subr.mxu0 %v147
    %1069 = vmatpush1.msra.mxu0 %v146
    %1070 = vmatprep.subr.mxu0 %v151
    %1071 = vmatpush1.msra.mxu0 %v150
    %1072 = vmatprep.subr.mxu0 0.0
    %1073 = vmatpush1.msra.mxu0 0.0
    %1074 = vmatprep.subr.mxu0 0.0
    %1075 = vmatpush1.msra.mxu0 0.0
    %1076 = vmatprep.subr.mxu0 0.0
    %1077 = vmatpush1.msra.mxu0 0.0
    %1078 = vmatprep.subr.mxu0 0.0
    %1079 = vmatpush1.msra.mxu0 0.0
    %1080 = vmatprep.subr.mxu0 0.0
    %1081 = vmatpush1.msra.mxu0 0.0
    %1082 = vmatprep.subr.mxu0 0.0
    %1083 = vmatpush1.msra.mxu0 0.0
    %1084 = vmatprep.subr.mxu0 0.0
    %1085 = vmatpush1.msra.mxu0 0.0
    %1086 = vmatprep.subr.mxu0 0.0
    %1087 = vmatpush1.msra.mxu0 0.0
    %1088 = vmatprep.subr.mxu0 0.0
    %1089 = vmatpush1.msra.mxu0 0.0
    %1090 = vmatprep.subr.mxu0 0.0
    %1091 = vmatpush1.msra.mxu0 0.0
    %1092 = vmatprep.subr.mxu0 0.0
    %1093 = vmatpush1.msra.mxu0 0.0
    %1094 = vmatprep.subr.mxu0 0.0
    %1095 = vmatpush1.msra.mxu0 0.0
    %1096 = vmatprep.subr.mxu0 0.0
    %1097 = vmatpush1.msra.mxu0 0.0
    %1098 = vmatprep.subr.mxu0 0.0
    %1099 = vmatpush1.msra.mxu0 0.0
    %1100 = vmatprep.subr.mxu0 0.0
    %1101 = vmatpush1.msra.mxu0 0.0
    %1102 = vmatprep.subr.mxu0 0.0
    %1103 = vmatpush1.msra.mxu0 0.0
    %1104 = vmatprep.mubr.f32.mxu0 0.0
    %1105 = vmatmul.mubr.f32.gmra.mrb[0].mxu0 %v961
    %v1106 = vpop.f32.mrb[0].mxu0
    %v1107 = vadd.f32 0.0, %v1106
    %v1108 = vpop.f32.mrb[0].mxu0
    %v1109 = vadd.f32 0.0, %v1108
    %1110 = vdwg.mxu0
    %v1111 = vadd.f32 %v965, %v1036
    %v1112 = vadd.f32 %v966, %v1038
    %v1113 = vadd.f32 %v967, %v1107
    %v1114 = vadd.f32 %v968, %v1109
    %v1115 = vxor.u32 %v1111, 2147483648
    %v1116 = vmul.f32 %v1115, 1.442695
    %v1117 = vpow.pop %v1116
    %v1118 = vadd.f32 %v1117, 1.0
    %v1119 = vrcp.pop %v1118
    %v1120 = vmul.f32 1.0, %v1119
    %v1121 = vxor.u32 %v1112, 2147483648
    %v1122 = vmul.f32 %v1121, 1.442695
    %v1123 = vpow.pop %v1122
    %v1124 = vadd.f32 %v1123, 1.0
    %v1125 = vrcp.pop %v1124
    %v1126 = vmul.f32 1.0, %v1125
    %v1127 = vtanh.pop %v1113
    %v1128 = vxor.u32 %v1114, 2147483648
    %v1129 = vmul.f32 %v1128, 1.442695
    %v1130 = vpow.pop %v1129
    %v1131 = vadd.f32 %v1130, 1.0
    %v1132 = vrcp.pop %v1131
    %v1133 = vmul.f32 1.0, %v1132
    %v1134 = vmul.f32 %v1126, %v959
    %v1135 = vmul.f32 %v1120, %v1127
    %v1136 = vadd.f32 %v1134, %v1135
    %v1137 = vtanh.pop %v1136
    %v1138 = vmul.f32 %v1133, %v1137
    %s1139 = smul.u32 3, 4
    %s1140 = smul.addr %s1139, 8
    %s1141 = scalar_lea.vmem [#allocation2], %s1140
    %v1142 = vld [vmem:[%s1141] sm:$0xff]
    %v1143 = vld [vmem:[%s1141 + $0x8] sm:$0xff]
    %v1144 = vld [vmem:[%s1141 + $0x10] sm:$0xff]
    %v1145 = vld [vmem:[%s1141 + $0x18] sm:$0xff]
    %1146 = vmatprep.subr.mxu0 %v89
    %1147 = vmatpush1.msra.mxu0 %v88
    %1148 = vmatprep.subr.mxu0 %v93
    %1149 = vmatpush1.msra.mxu0 %v92
    %1150 = vmatprep.subr.mxu0 %v97
    %1151 = vmatpush1.msra.mxu0 %v96
    %1152 = vmatprep.subr.mxu0 %v101
    %1153 = vmatpush1.msra.mxu0 %v100
    %1154 = vmatprep.subr.mxu0 %v105
    %1155 = vmatpush1.msra.mxu0 %v104
    %1156 = vmatprep.subr.mxu0 %v109
    %1157 = vmatpush1.msra.mxu0 %v108
    %1158 = vmatprep.subr.mxu0 %v113
    %1159 = vmatpush1.msra.mxu0 %v112
    %1160 = vmatprep.subr.mxu0 %v117
    %1161 = vmatpush1.msra.mxu0 %v116
    %1162 = vmatprep.subr.mxu0 %v121
    %1163 = vmatpush1.msra.mxu0 %v120
    %1164 = vmatprep.subr.mxu0 %v125
    %1165 = vmatpush1.msra.mxu0 %v124
    %1166 = vmatprep.subr.mxu0 %v129
    %1167 = vmatpush1.msra.mxu0 %v128
    %1168 = vmatprep.subr.mxu0 %v133
    %1169 = vmatpush1.msra.mxu0 %v132
    %1170 = vmatprep.subr.mxu0 %v137
    %1171 = vmatpush1.msra.mxu0 %v136
    %1172 = vmatprep.subr.mxu0 %v141
    %1173 = vmatpush1.msra.mxu0 %v140
    %1174 = vmatprep.subr.mxu0 %v145
    %1175 = vmatpush1.msra.mxu0 %v144
    %1176 = vmatprep.subr.mxu0 %v149
    %1177 = vmatpush1.msra.mxu0 %v148
    %1178 = vmatprep.subr.mxu0 0.0
    %1179 = vmatpush1.msra.mxu0 0.0
    %1180 = vmatprep.subr.mxu0 0.0
    %1181 = vmatpush1.msra.mxu0 0.0
    %1182 = vmatprep.subr.mxu0 0.0
    %1183 = vmatpush1.msra.mxu0 0.0
    %1184 = vmatprep.subr.mxu0 0.0
    %1185 = vmatpush1.msra.mxu0 0.0
    %1186 = vmatprep.subr.mxu0 0.0
    %1187 = vmatpush1.msra.mxu0 0.0
    %1188 = vmatprep.subr.mxu0 0.0
    %1189 = vmatpush1.msra.mxu0 0.0
    %1190 = vmatprep.subr.mxu0 0.0
    %1191 = vmatpush1.msra.mxu0 0.0
    %1192 = vmatprep.subr.mxu0 0.0
    %1193 = vmatpush1.msra.mxu0 0.0
    %1194 = vmatprep.subr.mxu0 0.0
    %1195 = vmatpush1.msra.mxu0 0.0
    %1196 = vmatprep.subr.mxu0 0.0
    %1197 = vmatpush1.msra.mxu0 0.0
    %1198 = vmatprep.subr.mxu0 0.0
    %1199 = vmatpush1.msra.mxu0 0.0
    %1200 = vmatprep.subr.mxu0 0.0
    %1201 = vmatpush1.msra.mxu0 0.0
    %1202 = vmatprep.subr.mxu0 0.0
    %1203 = vmatpush1.msra.mxu0 0.0
    %1204 = vmatprep.subr.mxu0 0.0
    %1205 = vmatpush1.msra.mxu0 0.0
    %1206 = vmatprep.subr.mxu0 0.0
    %1207 = vmatpush1.msra.mxu0 0.0
    %1208 = vmatprep.subr.mxu0 0.0
    %1209 = vmatpush1.msra.mxu0 0.0
    %1210 = vmatprep.mubr.f32.mxu0 0.0
    %1211 = vmatmul.mubr.f32.gmra.mrb[0].mxu0 %v1138
    %v1212 = vpop.f32.mrb[0].mxu0
    %v1213 = vadd.f32 0.0, %v1212
    %v1214 = vpop.f32.mrb[0].mxu0
    %v1215 = vadd.f32 0.0, %v1214
    %1216 = vdwg.mxu0
    %1217 = vmatprep.subr.mxu0 %v91
    %1218 = vmatpush1.msra.mxu0 %v90
    %1219 = vmatprep.subr.mxu0 %v95
    %1220 = vmatpush1.msra.mxu0 %v94
    %1221 = vmatprep.subr.mxu0 %v99
    %1222 = vmatpush1.msra.mxu0 %v98
    %1223 = vmatprep.subr.mxu0 %v103
    %1224 = vmatpush1.msra.mxu0 %v102
    %1225 = vmatprep.subr.mxu0 %v107
    %1226 = vmatpush1.msra.mxu0 %v106
    %1227 = vmatprep.subr.mxu0 %v111
    %1228 = vmatpush1.msra.mxu0 %v110
    %1229 = vmatprep.subr.mxu0 %v115
    %1230 = vmatpush1.msra.mxu0 %v114
    %1231 = vmatprep.subr.mxu0 %v119
    %1232 = vmatpush1.msra.mxu0 %v118
    %1233 = vmatprep.subr.mxu0 %v123
    %1234 = vmatpush1.msra.mxu0 %v122
    %1235 = vmatprep.subr.mxu0 %v127
    %1236 = vmatpush1.msra.mxu0 %v126
    %1237 = vmatprep.subr.mxu0 %v131
    %1238 = vmatpush1.msra.mxu0 %v130
    %1239 = vmatprep.subr.mxu0 %v135
    %1240 = vmatpush1.msra.mxu0 %v134
    %1241 = vmatprep.subr.mxu0 %v139
    %1242 = vmatpush1.msra.mxu0 %v138
    %1243 = vmatprep.subr.mxu0 %v143
    %1244 = vmatpush1.msra.mxu0 %v142
    %1245 = vmatprep.subr.mxu0 %v147
    %1246 = vmatpush1.msra.mxu0 %v146
    %1247 = vmatprep.subr.mxu0 %v151
    %1248 = vmatpush1.msra.mxu0 %v150
    %1249 = vmatprep.subr.mxu0 0.0
    %1250 = vmatpush1.msra.mxu0 0.0
    %1251 = vmatprep.subr.mxu0 0.0
    %1252 = vmatpush1.msra.mxu0 0.0
    %1253 = vmatprep.subr.mxu0 0.0
    %1254 = vmatpush1.msra.mxu0 0.0
    %1255 = vmatprep.subr.mxu0 0.0
    %1256 = vmatpush1.msra.mxu0 0.0
    %1257 = vmatprep.subr.mxu0 0.0
    %1258 = vmatpush1.msra.mxu0 0.0
    %1259 = vmatprep.subr.mxu0 0.0
    %1260 = vmatpush1.msra.mxu0 0.0
    %1261 = vmatprep.subr.mxu0 0.0
    %1262 = vmatpush1.msra.mxu0 0.0
    %1263 = vmatprep.subr.mxu0 0.0
    %1264 = vmatpush1.msra.mxu0 0.0
    %1265 = vmatprep.subr.mxu0 0.0
    %1266 = vmatpush1.msra.mxu0 0.0
    %1267 = vmatprep.subr.mxu0 0.0
    %1268 = vmatpush1.msra.mxu0 0.0
    %1269 = vmatprep.subr.mxu0 0.0
    %1270 = vmatpush1.msra.mxu0 0.0
    %1271 = vmatprep.subr.mxu0 0.0
    %1272 = vmatpush1.msra.mxu0 0.0
    %1273 = vmatprep.subr.mxu0 0.0
    %1274 = vmatpush1.msra.mxu0 0.0
    %1275 = vmatprep.subr.mxu0 0.0
    %1276 = vmatpush1.msra.mxu0 0.0
    %1277 = vmatprep.subr.mxu0 0.0
    %1278 = vmatpush1.msra.mxu0 0.0
    %1279 = vmatprep.subr.mxu0 0.0
    %1280 = vmatpush1.msra.mxu0 0.0
    %1281 = vmatprep.mubr.f32.mxu0 0.0
    %1282 = vmatmul.mubr.f32.gmra.mrb[0].mxu0 %v1138
    %v1283 = vpop.f32.mrb[0].mxu0
    %v1284 = vadd.f32 0.0, %v1283
    %v1285 = vpop.f32.mrb[0].mxu0
    %v1286 = vadd.f32 0.0, %v1285
    %1287 = vdwg.mxu0
    %v1288 = vadd.f32 %v1142, %v1213
    %v1289 = vadd.f32 %v1143, %v1215
    %v1290 = vadd.f32 %v1144, %v1284
    %v1291 = vadd.f32 %v1145, %v1286
    %v1292 = vxor.u32 %v1288, 2147483648
    %v1293 = vmul.f32 %v1292, 1.442695
    %v1294 = vpow.pop %v1293
    %v1295 = vadd.f32 %v1294, 1.0
    %v1296 = vrcp.pop %v1295
    %v1297 = vmul.f32 1.0, %v1296
    %v1298 = vxor.u32 %v1289, 2147483648
    %v1299 = vmul.f32 %v1298, 1.442695
    %v1300 = vpow.pop %v1299
    %v1301 = vadd.f32 %v1300, 1.0
    %v1302 = vrcp.pop %v1301
    %v1303 = vmul.f32 1.0, %v1302
    %v1304 = vtanh.pop %v1290
    %v1305 = vxor.u32 %v1291, 2147483648
    %v1306 = vmul.f32 %v1305, 1.442695
    %v1307 = vpow.pop %v1306
    %v1308 = vadd.f32 %v1307, 1.0
    %v1309 = vrcp.pop %v1308
    %v1310 = vmul.f32 1.0, %v1309
    %v1311 = vmul.f32 %v1303, %v1136
    %v1312 = vmul.f32 %v1297, %v1304
    %v1313 = vadd.f32 %v1311, %v1312
    %v1314 = vtanh.pop %v1313
    %v1315 = vmul.f32 %v1310, %v1314
    %s1316 = smul.u32 4, 4
    %s1317 = smul.addr %s1316, 8
    %s1318 = scalar_lea.vmem [#allocation2], %s1317
    %v1319 = vld [vmem:[%s1318] sm:$0xff]
    %v1320 = vld [vmem:[%s1318 + $0x8] sm:$0xff]
    %v1321 = vld [vmem:[%s1318 + $0x10] sm:$0xff]
    %v1322 = vld [vmem:[%s1318 + $0x18] sm:$0xff]
    %1323 = vmatprep.subr.mxu0 %v89
    %1324 = vmatpush1.msra.mxu0 %v88
    %1325 = vmatprep.subr.mxu0 %v93
    %1326 = vmatpush1.msra.mxu0 %v92
    %1327 = vmatprep.subr.mxu0 %v97
    %1328 = vmatpush1.msra.mxu0 %v96
    %1329 = vmatprep.subr.mxu0 %v101
    %1330 = vmatpush1.msra.mxu0 %v100
    %1331 = vmatprep.subr.mxu0 %v105
    %1332 = vmatpush1.msra.mxu0 %v104
    %1333 = vmatprep.subr.mxu0 %v109
    %1334 = vmatpush1.msra.mxu0 %v108
    %1335 = vmatprep.subr.mxu0 %v113
    %1336 = vmatpush1.msra.mxu0 %v112
    %1337 = vmatprep.subr.mxu0 %v117
    %1338 = vmatpush1.msra.mxu0 %v116
    %1339 = vmatprep.subr.mxu0 %v121
    %1340 = vmatpush1.msra.mxu0 %v120
    %1341 = vmatprep.subr.mxu0 %v125
    %1342 = vmatpush1.msra.mxu0 %v124
    %1343 = vmatprep.subr.mxu0 %v129
    %1344 = vmatpush1.msra.mxu0 %v128
    %1345 = vmatprep.subr.mxu0 %v133
    %1346 = vmatpush1.msra.mxu0 %v132
    %1347 = vmatprep.subr.mxu0 %v137
    %1348 = vmatpush1.msra.mxu0 %v136
    %1349 = vmatprep.subr.mxu0 %v141
    %1350 = vmatpush1.msra.mxu0 %v140
    %1351 = vmatprep.subr.mxu0 %v145
    %1352 = vmatpush1.msra.mxu0 %v144
    %1353 = vmatprep.subr.mxu0 %v149
    %1354 = vmatpush1.msra.mxu0 %v148
    %1355 = vmatprep.subr.mxu0 0.0
    %1356 = vmatpush1.msra.mxu0 0.0
    %1357 = vmatprep.subr.mxu0 0.0
    %1358 = vmatpush1.msra.mxu0 0.0
    %1359 = vmatprep.subr.mxu0 0.0
    %1360 = vmatpush1.msra.mxu0 0.0
    %1361 = vmatprep.subr.mxu0 0.0
    %1362 = vmatpush1.msra.mxu0 0.0
    %1363 = vmatprep.subr.mxu0 0.0
    %1364 = vmatpush1.msra.mxu0 0.0
    %1365 = vmatprep.subr.mxu0 0.0
    %1366 = vmatpush1.msra.mxu0 0.0
    %1367 = vmatprep.subr.mxu0 0.0
    %1368 = vmatpush1.msra.mxu0 0.0
    %1369 = vmatprep.subr.mxu0 0.0
    %1370 = vmatpush1.msra.mxu0 0.0
    %1371 = vmatprep.subr.mxu0 0.0
    %1372 = vmatpush1.msra.mxu0 0.0
    %1373 = vmatprep.subr.mxu0 0.0
    %1374 = vmatpush1.msra.mxu0 0.0
    %1375 = vmatprep.subr.mxu0 0.0
    %1376 = vmatpush1.msra.mxu0 0.0
    %1377 = vmatprep.subr.mxu0 0.0
    %1378 = vmatpush1.msra.mxu0 0.0
    %1379 = vmatprep.subr.mxu0 0.0
    %1380 = vmatpush1.msra.mxu0 0.0
    %1381 = vmatprep.subr.mxu0 0.0
    %1382 = vmatpush1.msra.mxu0 0.0
    %1383 = vmatprep.subr.mxu0 0.0
    %1384 = vmatpush1.msra.mxu0 0.0
    %1385 = vmatprep.subr.mxu0 0.0
    %1386 = vmatpush1.msra.mxu0 0.0
    %1387 = vmatprep.mubr.f32.mxu0 0.0
    %1388 = vmatmul.mubr.f32.gmra.mrb[0].mxu0 %v1315
    %v1389 = vpop.f32.mrb[0].mxu0
    %v1390 = vadd.f32 0.0, %v1389
    %v1391 = vpop.f32.mrb[0].mxu0
    %v1392 = vadd.f32 0.0, %v1391
    %1393 = vdwg.mxu0
    %1394 = vmatprep.subr.mxu0 %v91
    %1395 = vmatpush1.msra.mxu0 %v90
    %1396 = vmatprep.subr.mxu0 %v95
    %1397 = vmatpush1.msra.mxu0 %v94
    %1398 = vmatprep.subr.mxu0 %v99
    %1399 = vmatpush1.msra.mxu0 %v98
    %1400 = vmatprep.subr.mxu0 %v103
    %1401 = vmatpush1.msra.mxu0 %v102
    %1402 = vmatprep.subr.mxu0 %v107
    %1403 = vmatpush1.msra.mxu0 %v106
    %1404 = vmatprep.subr.mxu0 %v111
    %1405 = vmatpush1.msra.mxu0 %v110
    %1406 = vmatprep.subr.mxu0 %v115
    %1407 = vmatpush1.msra.mxu0 %v114
    %1408 = vmatprep.subr.mxu0 %v119
    %1409 = vmatpush1.msra.mxu0 %v118
    %1410 = vmatprep.subr.mxu0 %v123
    %1411 = vmatpush1.msra.mxu0 %v122
    %1412 = vmatprep.subr.mxu0 %v127
    %1413 = vmatpush1.msra.mxu0 %v126
    %1414 = vmatprep.subr.mxu0 %v131
    %1415 = vmatpush1.msra.mxu0 %v130
    %1416 = vmatprep.subr.mxu0 %v135
    %1417 = vmatpush1.msra.mxu0 %v134
    %1418 = vmatprep.subr.mxu0 %v139
    %1419 = vmatpush1.msra.mxu0 %v138
    %1420 = vmatprep.subr.mxu0 %v143
    %1421 = vmatpush1.msra.mxu0 %v142
    %1422 = vmatprep.subr.mxu0 %v147
    %1423 = vmatpush1.msra.mxu0 %v146
    %1424 = vmatprep.subr.mxu0 %v151
    %1425 = vmatpush1.msra.mxu0 %v150
    %1426 = vmatprep.subr.mxu0 0.0
    %1427 = vmatpush1.msra.mxu0 0.0
    %1428 = vmatprep.subr.mxu0 0.0
    %1429 = vmatpush1.msra.mxu0 0.0
    %1430 = vmatprep.subr.mxu0 0.0
    %1431 = vmatpush1.msra.mxu0 0.0
    %1432 = vmatprep.subr.mxu0 0.0
    %1433 = vmatpush1.msra.mxu0 0.0
    %1434 = vmatprep.subr.mxu0 0.0
    %1435 = vmatpush1.msra.mxu0 0.0
    %1436 = vmatprep.subr.mxu0 0.0
    %1437 = vmatpush1.msra.mxu0 0.0
    %1438 = vmatprep.subr.mxu0 0.0
    %1439 = vmatpush1.msra.mxu0 0.0
    %1440 = vmatprep.subr.mxu0 0.0
    %1441 = vmatpush1.msra.mxu0 0.0
    %1442 = vmatprep.subr.mxu0 0.0
    %1443 = vmatpush1.msra.mxu0 0.0
    %1444 = vmatprep.subr.mxu0 0.0
    %1445 = vmatpush1.msra.mxu0 0.0
    %1446 = vmatprep.subr.mxu0 0.0
    %1447 = vmatpush1.msra.mxu0 0.0
    %1448 = vmatprep.subr.mxu0 0.0
    %1449 = vmatpush1.msra.mxu0 0.0
    %1450 = vmatprep.subr.mxu0 0.0
    %1451 = vmatpush1.msra.mxu0 0.0
    %1452 = vmatprep.subr.mxu0 0.0
    %1453 = vmatpush1.msra.mxu0 0.0
    %1454 = vmatprep.subr.mxu0 0.0
    %1455 = vmatpush1.msra.mxu0 0.0
    %1456 = vmatprep.subr.mxu0 0.0
    %1457 = vmatpush1.msra.mxu0 0.0
    %1458 = vmatprep.mubr.f32.mxu0 0.0
    %1459 = vmatmul.mubr.f32.gmra.mrb[0].mxu0 %v1315
    %v1460 = vpop.f32.mrb[0].mxu0
    %v1461 = vadd.f32 0.0, %v1460
    %v1462 = vpop.f32.mrb[0].mxu0
    %v1463 = vadd.f32 0.0, %v1462
    %1464 = vdwg.mxu0
    %v1465 = vadd.f32 %v1319, %v1390
    %v1466 = vadd.f32 %v1320, %v1392
    %v1467 = vadd.f32 %v1321, %v1461
    %v1468 = vadd.f32 %v1322, %v1463
    %v1469 = vxor.u32 %v1465, 2147483648
    %v1470 = vmul.f32 %v1469, 1.442695
    %v1471 = vpow.pop %v1470
    %v1472 = vadd.f32 %v1471, 1.0
    %v1473 = vrcp.pop %v1472
    %v1474 = vmul.f32 1.0, %v1473
    %v1475 = vxor.u32 %v1466, 2147483648
    %v1476 = vmul.f32 %v1475, 1.442695
    %v1477 = vpow.pop %v1476
    %v1478 = vadd.f32 %v1477, 1.0
    %v1479 = vrcp.pop %v1478
    %v1480 = vmul.f32 1.0, %v1479
    %v1481 = vtanh.pop %v1467
    %v1482 = vxor.u32 %v1468, 2147483648
    %v1483 = vmul.f32 %v1482, 1.442695
    %v1484 = vpow.pop %v1483
    %v1485 = vadd.f32 %v1484, 1.0
    %v1486 = vrcp.pop %v1485
    %v1487 = vmul.f32 1.0, %v1486
    %v1488 = vmul.f32 %v1480, %v1313
    %v1489 = vmul.f32 %v1474, %v1481
    %v1490 = vadd.f32 %v1488, %v1489
    %v1491 = vtanh.pop %v1490
    %v1492 = vmul.f32 %v1487, %v1491
    %s1493 = smul.u32 5, 4
    %s1494 = smul.addr %s1493, 8
    %s1495 = scalar_lea.vmem [#allocation2], %s1494
    %v1496 = vld [vmem:[%s1495] sm:$0xff]
    %v1497 = vld [vmem:[%s1495 + $0x8] sm:$0xff]
    %v1498 = vld [vmem:[%s1495 + $0x10] sm:$0xff]
    %v1499 = vld [vmem:[%s1495 + $0x18] sm:$0xff]
    %1500 = vmatprep.subr.mxu0 %v89
    %1501 = vmatpush1.msra.mxu0 %v88
    %1502 = vmatprep.subr.mxu0 %v93
    %1503 = vmatpush1.msra.mxu0 %v92
    %1504 = vmatprep.subr.mxu0 %v97
    %1505 = vmatpush1.msra.mxu0 %v96
    %1506 = vmatprep.subr.mxu0 %v101
    %1507 = vmatpush1.msra.mxu0 %v100
    %1508 = vmatprep.subr.mxu0 %v105
    %1509 = vmatpush1.msra.mxu0 %v104
    %1510 = vmatprep.subr.mxu0 %v109
    %1511 = vmatpush1.msra.mxu0 %v108
    %1512 = vmatprep.subr.mxu0 %v113
    %1513 = vmatpush1.msra.mxu0 %v112
    %1514 = vmatprep.subr.mxu0 %v117
    %1515 = vmatpush1.msra.mxu0 %v116
    %1516 = vmatprep.subr.mxu0 %v121
    %1517 = vmatpush1.msra.mxu0 %v120
    %1518 = vmatprep.subr.mxu0 %v125
    %1519 = vmatpush1.msra.mxu0 %v124
    %1520 = vmatprep.subr.mxu0 %v129
    %1521 = vmatpush1.msra.mxu0 %v128
    %1522 = vmatprep.subr.mxu0 %v133
    %1523 = vmatpush1.msra.mxu0 %v132
    %1524 = vmatprep.subr.mxu0 %v137
    %1525 = vmatpush1.msra.mxu0 %v136
    %1526 = vmatprep.subr.mxu0 %v141
    %1527 = vmatpush1.msra.mxu0 %v140
    %1528 = vmatprep.subr.mxu0 %v145
    %1529 = vmatpush1.msra.mxu0 %v144
    %1530 = vmatprep.subr.mxu0 %v149
    %1531 = vmatpush1.msra.mxu0 %v148
    %1532 = vmatprep.subr.mxu0 0.0
    %1533 = vmatpush1.msra.mxu0 0.0
    %1534 = vmatprep.subr.mxu0 0.0
    %1535 = vmatpush1.msra.mxu0 0.0
    %1536 = vmatprep.subr.mxu0 0.0
    %1537 = vmatpush1.msra.mxu0 0.0
    %1538 = vmatprep.subr.mxu0 0.0
    %1539 = vmatpush1.msra.mxu0 0.0
    %1540 = vmatprep.subr.mxu0 0.0
    %1541 = vmatpush1.msra.mxu0 0.0
    %1542 = vmatprep.subr.mxu0 0.0
    %1543 = vmatpush1.msra.mxu0 0.0
    %1544 = vmatprep.subr.mxu0 0.0
    %1545 = vmatpush1.msra.mxu0 0.0
    %1546 = vmatprep.subr.mxu0 0.0
    %1547 = vmatpush1.msra.mxu0 0.0
    %1548 = vmatprep.subr.mxu0 0.0
    %1549 = vmatpush1.msra.mxu0 0.0
    %1550 = vmatprep.subr.mxu0 0.0
    %1551 = vmatpush1.msra.mxu0 0.0
    %1552 = vmatprep.subr.mxu0 0.0
    %1553 = vmatpush1.msra.mxu0 0.0
    %1554 = vmatprep.subr.mxu0 0.0
    %1555 = vmatpush1.msra.mxu0 0.0
    %1556 = vmatprep.subr.mxu0 0.0
    %1557 = vmatpush1.msra.mxu0 0.0
    %1558 = vmatprep.subr.mxu0 0.0
    %1559 = vmatpush1.msra.mxu0 0.0
    %1560 = vmatprep.subr.mxu0 0.0
    %1561 = vmatpush1.msra.mxu0 0.0
    %1562 = vmatprep.subr.mxu0 0.0
    %1563 = vmatpush1.msra.mxu0 0.0
    %1564 = vmatprep.mubr.f32.mxu0 0.0
    %1565 = vmatmul.mubr.f32.gmra.mrb[0].mxu0 %v1492
    %v1566 = vpop.f32.mrb[0].mxu0
    %v1567 = vadd.f32 0.0, %v1566
    %v1568 = vpop.f32.mrb[0].mxu0
    %v1569 = vadd.f32 0.0, %v1568
    %1570 = vdwg.mxu0
    %1571 = vmatprep.subr.mxu0 %v91
    %1572 = vmatpush1.msra.mxu0 %v90
    %1573 = vmatprep.subr.mxu0 %v95
    %1574 = vmatpush1.msra.mxu0 %v94
    %1575 = vmatprep.subr.mxu0 %v99
    %1576 = vmatpush1.msra.mxu0 %v98
    %1577 = vmatprep.subr.mxu0 %v103
    %1578 = vmatpush1.msra.mxu0 %v102
    %1579 = vmatprep.subr.mxu0 %v107
    %1580 = vmatpush1.msra.mxu0 %v106
    %1581 = vmatprep.subr.mxu0 %v111
    %1582 = vmatpush1.msra.mxu0 %v110
    %1583 = vmatprep.subr.mxu0 %v115
    %1584 = vmatpush1.msra.mxu0 %v114
    %1585 = vmatprep.subr.mxu0 %v119
    %1586 = vmatpush1.msra.mxu0 %v118
    %1587 = vmatprep.subr.mxu0 %v123
    %1588 = vmatpush1.msra.mxu0 %v122
    %1589 = vmatprep.subr.mxu0 %v127
    %1590 = vmatpush1.msra.mxu0 %v126
    %1591 = vmatprep.subr.mxu0 %v131
    %1592 = vmatpush1.msra.mxu0 %v130
    %1593 = vmatprep.subr.mxu0 %v135
    %1594 = vmatpush1.msra.mxu0 %v134
    %1595 = vmatprep.subr.mxu0 %v139
    %1596 = vmatpush1.msra.mxu0 %v138
    %1597 = vmatprep.subr.mxu0 %v143
    %1598 = vmatpush1.msra.mxu0 %v142
    %1599 = vmatprep.subr.mxu0 %v147
    %1600 = vmatpush1.msra.mxu0 %v146
    %1601 = vmatprep.subr.mxu0 %v151
    %1602 = vmatpush1.msra.mxu0 %v150
    %1603 = vmatprep.subr.mxu0 0.0
    %1604 = vmatpush1.msra.mxu0 0.0
    %1605 = vmatprep.subr.mxu0 0.0
    %1606 = vmatpush1.msra.mxu0 0.0
    %1607 = vmatprep.subr.mxu0 0.0
    %1608 = vmatpush1.msra.mxu0 0.0
    %1609 = vmatprep.subr.mxu0 0.0
    %1610 = vmatpush1.msra.mxu0 0.0
    %1611 = vmatprep.subr.mxu0 0.0
    %1612 = vmatpush1.msra.mxu0 0.0
    %1613 = vmatprep.subr.mxu0 0.0
    %1614 = vmatpush1.msra.mxu0 0.0
    %1615 = vmatprep.subr.mxu0 0.0
    %1616 = vmatpush1.msra.mxu0 0.0
    %1617 = vmatprep.subr.mxu0 0.0
    %1618 = vmatpush1.msra.mxu0 0.0
    %1619 = vmatprep.subr.mxu0 0.0
    %1620 = vmatpush1.msra.mxu0 0.0
    %1621 = vmatprep.subr.mxu0 0.0
    %1622 = vmatpush1.msra.mxu0 0.0
    %1623 = vmatprep.subr.mxu0 0.0
    %1624 = vmatpush1.msra.mxu0 0.0
    %1625 = vmatprep.subr.mxu0 0.0
    %1626 = vmatpush1.msra.mxu0 0.0
    %1627 = vmatprep.subr.mxu0 0.0
    %1628 = vmatpush1.msra.mxu0 0.0
    %1629 = vmatprep.subr.mxu0 0.0
    %1630 = vmatpush1.msra.mxu0 0.0
    %1631 = vmatprep.subr.mxu0 0.0
    %1632 = vmatpush1.msra.mxu0 0.0
    %1633 = vmatprep.subr.mxu0 0.0
    %1634 = vmatpush1.msra.mxu0 0.0
    %1635 = vmatprep.mubr.f32.mxu0 0.0
    %1636 = vmatmul.mubr.f32.gmra.mrb[0].mxu0 %v1492
    %v1637 = vpop.f32.mrb[0].mxu0
    %v1638 = vadd.f32 0.0, %v1637
    %v1639 = vpop.f32.mrb[0].mxu0
    %v1640 = vadd.f32 0.0, %v1639
    %1641 = vdwg.mxu0
    %v1642 = vadd.f32 %v1496, %v1567
    %v1643 = vadd.f32 %v1497, %v1569
    %v1644 = vadd.f32 %v1498, %v1638
    %v1645 = vadd.f32 %v1499, %v1640
    %v1646 = vxor.u32 %v1642, 2147483648
    %v1647 = vmul.f32 %v1646, 1.442695
    %v1648 = vpow.pop %v1647
    %v1649 = vadd.f32 %v1648, 1.0
    %v1650 = vrcp.pop %v1649
    %v1651 = vmul.f32 1.0, %v1650
    %v1652 = vxor.u32 %v1643, 2147483648
    %v1653 = vmul.f32 %v1652, 1.442695
    %v1654 = vpow.pop %v1653
    %v1655 = vadd.f32 %v1654, 1.0
    %v1656 = vrcp.pop %v1655
    %v1657 = vmul.f32 1.0, %v1656
    %v1658 = vtanh.pop %v1644
    %v1659 = vxor.u32 %v1645, 2147483648
    %v1660 = vmul.f32 %v1659, 1.442695
    %v1661 = vpow.pop %v1660
    %v1662 = vadd.f32 %v1661, 1.0
    %v1663 = vrcp.pop %v1662
    %v1664 = vmul.f32 1.0, %v1663
    %v1665 = vmul.f32 %v1657, %v1490
    %v1666 = vmul.f32 %v1651, %v1658
    %v1667 = vadd.f32 %v1665, %v1666
    %v1668 = vtanh.pop %v1667
    %v1669 = vmul.f32 %v1664, %v1668
    %s1670 = smul.u32 6, 4
    %s1671 = smul.addr %s1670, 8
    %s1672 = scalar_lea.vmem [#allocation2], %s1671
    %v1673 = vld [vmem:[%s1672] sm:$0xff]
    %v1674 = vld [vmem:[%s1672 + $0x8] sm:$0xff]
    %v1675 = vld [vmem:[%s1672 + $0x10] sm:$0xff]
    %v1676 = vld [vmem:[%s1672 + $0x18] sm:$0xff]
    %1677 = vmatprep.subr.mxu0 %v89
    %1678 = vmatpush1.msra.mxu0 %v88
    %1679 = vmatprep.subr.mxu0 %v93
    %1680 = vmatpush1.msra.mxu0 %v92
    %1681 = vmatprep.subr.mxu0 %v97
    %1682 = vmatpush1.msra.mxu0 %v96
    %1683 = vmatprep.subr.mxu0 %v101
    %1684 = vmatpush1.msra.mxu0 %v100
    %1685 = vmatprep.subr.mxu0 %v105
    %1686 = vmatpush1.msra.mxu0 %v104
    %1687 = vmatprep.subr.mxu0 %v109
    %1688 = vmatpush1.msra.mxu0 %v108
    %1689 = vmatprep.subr.mxu0 %v113
    %1690 = vmatpush1.msra.mxu0 %v112
    %1691 = vmatprep.subr.mxu0 %v117
    %1692 = vmatpush1.msra.mxu0 %v116
    %1693 = vmatprep.subr.mxu0 %v121
    %1694 = vmatpush1.msra.mxu0 %v120
    %1695 = vmatprep.subr.mxu0 %v125
    %1696 = vmatpush1.msra.mxu0 %v124
    %1697 = vmatprep.subr.mxu0 %v129
    %1698 = vmatpush1.msra.mxu0 %v128
    %1699 = vmatprep.subr.mxu0 %v133
    %1700 = vmatpush1.msra.mxu0 %v132
    %1701 = vmatprep.subr.mxu0 %v137
    %1702 = vmatpush1.msra.mxu0 %v136
    %1703 = vmatprep.subr.mxu0 %v141
    %1704 = vmatpush1.msra.mxu0 %v140
    %1705 = vmatprep.subr.mxu0 %v145
    %1706 = vmatpush1.msra.mxu0 %v144
    %1707 = vmatprep.subr.mxu0 %v149
    %1708 = vmatpush1.msra.mxu0 %v148
    %1709 = vmatprep.subr.mxu0 0.0
    %1710 = vmatpush1.msra.mxu0 0.0
    %1711 = vmatprep.subr.mxu0 0.0
    %1712 = vmatpush1.msra.mxu0 0.0
    %1713 = vmatprep.subr.mxu0 0.0
    %1714 = vmatpush1.msra.mxu0 0.0
    %1715 = vmatprep.subr.mxu0 0.0
    %1716 = vmatpush1.msra.mxu0 0.0
    %1717 = vmatprep.subr.mxu0 0.0
    %1718 = vmatpush1.msra.mxu0 0.0
    %1719 = vmatprep.subr.mxu0 0.0
    %1720 = vmatpush1.msra.mxu0 0.0
    %1721 = vmatprep.subr.mxu0 0.0
    %1722 = vmatpush1.msra.mxu0 0.0
    %1723 = vmatprep.subr.mxu0 0.0
    %1724 = vmatpush1.msra.mxu0 0.0
    %1725 = vmatprep.subr.mxu0 0.0
    %1726 = vmatpush1.msra.mxu0 0.0
    %1727 = vmatprep.subr.mxu0 0.0
    %1728 = vmatpush1.msra.mxu0 0.0
    %1729 = vmatprep.subr.mxu0 0.0
    %1730 = vmatpush1.msra.mxu0 0.0
    %1731 = vmatprep.subr.mxu0 0.0
    %1732 = vmatpush1.msra.mxu0 0.0
    %1733 = vmatprep.subr.mxu0 0.0
    %1734 = vmatpush1.msra.mxu0 0.0
    %1735 = vmatprep.subr.mxu0 0.0
    %1736 = vmatpush1.msra.mxu0 0.0
    %1737 = vmatprep.subr.mxu0 0.0
    %1738 = vmatpush1.msra.mxu0 0.0
    %1739 = vmatprep.subr.mxu0 0.0
    %1740 = vmatpush1.msra.mxu0 0.0
    %1741 = vmatprep.mubr.f32.mxu0 0.0
    %1742 = vmatmul.mubr.f32.gmra.mrb[0].mxu0 %v1669
    %v1743 = vpop.f32.mrb[0].mxu0
    %v1744 = vadd.f32 0.0, %v1743
    %v1745 = vpop.f32.mrb[0].mxu0
    %v1746 = vadd.f32 0.0, %v1745
    %1747 = vdwg.mxu0
    %1748 = vmatprep.subr.mxu0 %v91
    %1749 = vmatpush1.msra.mxu0 %v90
    %1750 = vmatprep.subr.mxu0 %v95
    %1751 = vmatpush1.msra.mxu0 %v94
    %1752 = vmatprep.subr.mxu0 %v99
    %1753 = vmatpush1.msra.mxu0 %v98
    %1754 = vmatprep.subr.mxu0 %v103
    %1755 = vmatpush1.msra.mxu0 %v102
    %1756 = vmatprep.subr.mxu0 %v107
    %1757 = vmatpush1.msra.mxu0 %v106
    %1758 = vmatprep.subr.mxu0 %v111
    %1759 = vmatpush1.msra.mxu0 %v110
    %1760 = vmatprep.subr.mxu0 %v115
    %1761 = vmatpush1.msra.mxu0 %v114
    %1762 = vmatprep.subr.mxu0 %v119
    %1763 = vmatpush1.msra.mxu0 %v118
    %1764 = vmatprep.subr.mxu0 %v123
    %1765 = vmatpush1.msra.mxu0 %v122
    %1766 = vmatprep.subr.mxu0 %v127
    %1767 = vmatpush1.msra.mxu0 %v126
    %1768 = vmatprep.subr.mxu0 %v131
    %1769 = vmatpush1.msra.mxu0 %v130
    %1770 = vmatprep.subr.mxu0 %v135
    %1771 = vmatpush1.msra.mxu0 %v134
    %1772 = vmatprep.subr.mxu0 %v139
    %1773 = vmatpush1.msra.mxu0 %v138
    %1774 = vmatprep.subr.mxu0 %v143
    %1775 = vmatpush1.msra.mxu0 %v142
    %1776 = vmatprep.subr.mxu0 %v147
    %1777 = vmatpush1.msra.mxu0 %v146
    %1778 = vmatprep.subr.mxu0 %v151
    %1779 = vmatpush1.msra.mxu0 %v150
    %1780 = vmatprep.subr.mxu0 0.0
    %1781 = vmatpush1.msra.mxu0 0.0
    %1782 = vmatprep.subr.mxu0 0.0
    %1783 = vmatpush1.msra.mxu0 0.0
    %1784 = vmatprep.subr.mxu0 0.0
    %1785 = vmatpush1.msra.mxu0 0.0
    %1786 = vmatprep.subr.mxu0 0.0
    %1787 = vmatpush1.msra.mxu0 0.0
    %1788 = vmatprep.subr.mxu0 0.0
    %1789 = vmatpush1.msra.mxu0 0.0
    %1790 = vmatprep.subr.mxu0 0.0
    %1791 = vmatpush1.msra.mxu0 0.0
    %1792 = vmatprep.subr.mxu0 0.0
    %1793 = vmatpush1.msra.mxu0 0.0
    %1794 = vmatprep.subr.mxu0 0.0
    %1795 = vmatpush1.msra.mxu0 0.0
    %1796 = vmatprep.subr.mxu0 0.0
    %1797 = vmatpush1.msra.mxu0 0.0
    %1798 = vmatprep.subr.mxu0 0.0
    %1799 = vmatpush1.msra.mxu0 0.0
    %1800 = vmatprep.subr.mxu0 0.0
    %1801 = vmatpush1.msra.mxu0 0.0
    %1802 = vmatprep.subr.mxu0 0.0
    %1803 = vmatpush1.msra.mxu0 0.0
    %1804 = vmatprep.subr.mxu0 0.0
    %1805 = vmatpush1.msra.mxu0 0.0
    %1806 = vmatprep.subr.mxu0 0.0
    %1807 = vmatpush1.msra.mxu0 0.0
    %1808 = vmatprep.subr.mxu0 0.0
    %1809 = vmatpush1.msra.mxu0 0.0
    %1810 = vmatprep.subr.mxu0 0.0
    %1811 = vmatpush1.msra.mxu0 0.0
    %1812 = vmatprep.mubr.f32.mxu0 0.0
    %1813 = vmatmul.mubr.f32.gmra.mrb[0].mxu0 %v1669
    %v1814 = vpop.f32.mrb[0].mxu0
    %v1815 = vadd.f32 0.0, %v1814
    %v1816 = vpop.f32.mrb[0].mxu0
    %v1817 = vadd.f32 0.0, %v1816
    %1818 = vdwg.mxu0
    %v1819 = vadd.f32 %v1673, %v1744
    %v1820 = vadd.f32 %v1674, %v1746
    %v1821 = vadd.f32 %v1675, %v1815
    %v1822 = vadd.f32 %v1676, %v1817
    %v1823 = vxor.u32 %v1819, 2147483648
    %v1824 = vmul.f32 %v1823, 1.442695
    %v1825 = vpow.pop %v1824
    %v1826 = vadd.f32 %v1825, 1.0
    %v1827 = vrcp.pop %v1826
    %v1828 = vmul.f32 1.0, %v1827
    %v1829 = vxor.u32 %v1820, 2147483648
    %v1830 = vmul.f32 %v1829, 1.442695
    %v1831 = vpow.pop %v1830
    %v1832 = vadd.f32 %v1831, 1.0
    %v1833 = vrcp.pop %v1832
    %v1834 = vmul.f32 1.0, %v1833
    %v1835 = vtanh.pop %v1821
    %v1836 = vxor.u32 %v1822, 2147483648
    %v1837 = vmul.f32 %v1836, 1.442695
    %v1838 = vpow.pop %v1837
    %v1839 = vadd.f32 %v1838, 1.0
    %v1840 = vrcp.pop %v1839
    %v1841 = vmul.f32 1.0, %v1840
    %v1842 = vmul.f32 %v1834, %v1667
    %v1843 = vmul.f32 %v1828, %v1835
    %v1844 = vadd.f32 %v1842, %v1843
    %v1845 = vtanh.pop %v1844
    %v1846 = vmul.f32 %v1841, %v1845
    %s1847 = smul.u32 7, 4
    %s1848 = smul.addr %s1847, 8
    %s1849 = scalar_lea.vmem [#allocation2], %s1848
    %v1850 = vld [vmem:[%s1849] sm:$0xff]
    %v1851 = vld [vmem:[%s1849 + $0x8] sm:$0xff]
    %v1852 = vld [vmem:[%s1849 + $0x10] sm:$0xff]
    %v1853 = vld [vmem:[%s1849 + $0x18] sm:$0xff]
    %1854 = vmatprep.subr.mxu0 %v89
    %1855 = vmatpush1.msra.mxu0 %v88
    %1856 = vmatprep.subr.mxu0 %v93
    %1857 = vmatpush1.msra.mxu0 %v92
    %1858 = vmatprep.subr.mxu0 %v97
    %1859 = vmatpush1.msra.mxu0 %v96
    %1860 = vmatprep.subr.mxu0 %v101
    %1861 = vmatpush1.msra.mxu0 %v100
    %1862 = vmatprep.subr.mxu0 %v105
    %1863 = vmatpush1.msra.mxu0 %v104
    %1864 = vmatprep.subr.mxu0 %v109
    %1865 = vmatpush1.msra.mxu0 %v108
    %1866 = vmatprep.subr.mxu0 %v113
    %1867 = vmatpush1.msra.mxu0 %v112
    %1868 = vmatprep.subr.mxu0 %v117
    %1869 = vmatpush1.msra.mxu0 %v116
    %1870 = vmatprep.subr.mxu0 %v121
    %1871 = vmatpush1.msra.mxu0 %v120
    %1872 = vmatprep.subr.mxu0 %v125
    %1873 = vmatpush1.msra.mxu0 %v124
    %1874 = vmatprep.subr.mxu0 %v129
    %1875 = vmatpush1.msra.mxu0 %v128
    %1876 = vmatprep.subr.mxu0 %v133
    %1877 = vmatpush1.msra.mxu0 %v132
    %1878 = vmatprep.subr.mxu0 %v137
    %1879 = vmatpush1.msra.mxu0 %v136
    %1880 = vmatprep.subr.mxu0 %v141
    %1881 = vmatpush1.msra.mxu0 %v140
    %1882 = vmatprep.subr.mxu0 %v145
    %1883 = vmatpush1.msra.mxu0 %v144
    %1884 = vmatprep.subr.mxu0 %v149
    %1885 = vmatpush1.msra.mxu0 %v148
    %1886 = vmatprep.subr.mxu0 0.0
    %1887 = vmatpush1.msra.mxu0 0.0
    %1888 = vmatprep.subr.mxu0 0.0
    %1889 = vmatpush1.msra.mxu0 0.0
    %1890 = vmatprep.subr.mxu0 0.0
    %1891 = vmatpush1.msra.mxu0 0.0
    %1892 = vmatprep.subr.mxu0 0.0
    %1893 = vmatpush1.msra.mxu0 0.0
    %1894 = vmatprep.subr.mxu0 0.0
    %1895 = vmatpush1.msra.mxu0 0.0
    %1896 = vmatprep.subr.mxu0 0.0
    %1897 = vmatpush1.msra.mxu0 0.0
    %1898 = vmatprep.subr.mxu0 0.0
    %1899 = vmatpush1.msra.mxu0 0.0
    %1900 = vmatprep.subr.mxu0 0.0
    %1901 = vmatpush1.msra.mxu0 0.0
    %1902 = vmatprep.subr.mxu0 0.0
    %1903 = vmatpush1.msra.mxu0 0.0
    %1904 = vmatprep.subr.mxu0 0.0
    %1905 = vmatpush1.msra.mxu0 0.0
    %1906 = vmatprep.subr.mxu0 0.0
    %1907 = vmatpush1.msra.mxu0 0.0
    %1908 = vmatprep.subr.mxu0 0.0
    %1909 = vmatpush1.msra.mxu0 0.0
    %1910 = vmatprep.subr.mxu0 0.0
    %1911 = vmatpush1.msra.mxu0 0.0
    %1912 = vmatprep.subr.mxu0 0.0
    %1913 = vmatpush1.msra.mxu0 0.0
    %1914 = vmatprep.subr.mxu0 0.0
    %1915 = vmatpush1.msra.mxu0 0.0
    %1916 = vmatprep.subr.mxu0 0.0
    %1917 = vmatpush1.msra.mxu0 0.0
    %1918 = vmatprep.mubr.f32.mxu0 0.0
    %1919 = vmatmul.mubr.f32.gmra.mrb[0].mxu0 %v1846
    %v1920 = vpop.f32.mrb[0].mxu0
    %v1921 = vadd.f32 0.0, %v1920
    %v1922 = vpop.f32.mrb[0].mxu0
    %v1923 = vadd.f32 0.0, %v1922
    %1924 = vdwg.mxu0
    %1925 = vmatprep.subr.mxu0 %v91
    %1926 = vmatpush1.msra.mxu0 %v90
    %1927 = vmatprep.subr.mxu0 %v95
    %1928 = vmatpush1.msra.mxu0 %v94
    %1929 = vmatprep.subr.mxu0 %v99
    %1930 = vmatpush1.msra.mxu0 %v98
    %1931 = vmatprep.subr.mxu0 %v103
    %1932 = vmatpush1.msra.mxu0 %v102
    %1933 = vmatprep.subr.mxu0 %v107
    %1934 = vmatpush1.msra.mxu0 %v106
    %1935 = vmatprep.subr.mxu0 %v111
    %1936 = vmatpush1.msra.mxu0 %v110
    %1937 = vmatprep.subr.mxu0 %v115
    %1938 = vmatpush1.msra.mxu0 %v114
    %1939 = vmatprep.subr.mxu0 %v119
    %1940 = vmatpush1.msra.mxu0 %v118
    %1941 = vmatprep.subr.mxu0 %v123
    %1942 = vmatpush1.msra.mxu0 %v122
    %1943 = vmatprep.subr.mxu0 %v127
    %1944 = vmatpush1.msra.mxu0 %v126
    %1945 = vmatprep.subr.mxu0 %v131
    %1946 = vmatpush1.msra.mxu0 %v130
    %1947 = vmatprep.subr.mxu0 %v135
    %1948 = vmatpush1.msra.mxu0 %v134
    %1949 = vmatprep.subr.mxu0 %v139
    %1950 = vmatpush1.msra.mxu0 %v138
    %1951 = vmatprep.subr.mxu0 %v143
    %1952 = vmatpush1.msra.mxu0 %v142
    %1953 = vmatprep.subr.mxu0 %v147
    %1954 = vmatpush1.msra.mxu0 %v146
    %1955 = vmatprep.subr.mxu0 %v151
    %1956 = vmatpush1.msra.mxu0 %v150
    %1957 = vmatprep.subr.mxu0 0.0
    %1958 = vmatpush1.msra.mxu0 0.0
    %1959 = vmatprep.subr.mxu0 0.0
    %1960 = vmatpush1.msra.mxu0 0.0
    %1961 = vmatprep.subr.mxu0 0.0
    %1962 = vmatpush1.msra.mxu0 0.0
    %1963 = vmatprep.subr.mxu0 0.0
    %1964 = vmatpush1.msra.mxu0 0.0
    %1965 = vmatprep.subr.mxu0 0.0
    %1966 = vmatpush1.msra.mxu0 0.0
    %1967 = vmatprep.subr.mxu0 0.0
    %1968 = vmatpush1.msra.mxu0 0.0
    %1969 = vmatprep.subr.mxu0 0.0
    %1970 = vmatpush1.msra.mxu0 0.0
    %1971 = vmatprep.subr.mxu0 0.0
    %1972 = vmatpush1.msra.mxu0 0.0
    %1973 = vmatprep.subr.mxu0 0.0
    %1974 = vmatpush1.msra.mxu0 0.0
    %1975 = vmatprep.subr.mxu0 0.0
    %1976 = vmatpush1.msra.mxu0 0.0
    %1977 = vmatprep.subr.mxu0 0.0
    %1978 = vmatpush1.msra.mxu0 0.0
    %1979 = vmatprep.subr.mxu0 0.0
    %1980 = vmatpush1.msra.mxu0 0.0
    %1981 = vmatprep.subr.mxu0 0.0
    %1982 = vmatpush1.msra.mxu0 0.0
    %1983 = vmatprep.subr.mxu0 0.0
    %1984 = vmatpush1.msra.mxu0 0.0
    %1985 = vmatprep.subr.mxu0 0.0
    %1986 = vmatpush1.msra.mxu0 0.0
    %1987 = vmatprep.subr.mxu0 0.0
    %1988 = vmatpush1.msra.mxu0 0.0
    %1989 = vmatprep.mubr.f32.mxu0 0.0
    %1990 = vmatmul.mubr.f32.gmra.mrb[0].mxu0 %v1846
    %v1991 = vpop.f32.mrb[0].mxu0
    %v1992 = vadd.f32 0.0, %v1991
    %v1993 = vpop.f32.mrb[0].mxu0
    %v1994 = vadd.f32 0.0, %v1993
    %1995 = vdwg.mxu0
    %v1996 = vadd.f32 %v1850, %v1921
    %v1997 = vadd.f32 %v1851, %v1923
    %v1998 = vadd.f32 %v1852, %v1992
    %v1999 = vadd.f32 %v1853, %v1994
    %v2000 = vxor.u32 %v1996, 2147483648
    %v2001 = vmul.f32 %v2000, 1.442695
    %v2002 = vpow.pop %v2001
    %v2003 = vadd.f32 %v2002, 1.0
    %v2004 = vrcp.pop %v2003
    %v2005 = vmul.f32 1.0, %v2004
    %v2006 = vxor.u32 %v1997, 2147483648
    %v2007 = vmul.f32 %v2006, 1.442695
    %v2008 = vpow.pop %v2007
    %v2009 = vadd.f32 %v2008, 1.0
    %v2010 = vrcp.pop %v2009
    %v2011 = vmul.f32 1.0, %v2010
    %v2012 = vtanh.pop %v1998
    %v2013 = vxor.u32 %v1999, 2147483648
    %v2014 = vmul.f32 %v2013, 1.442695
    %v2015 = vpow.pop %v2014
    %v2016 = vadd.f32 %v2015, 1.0
    %v2017 = vrcp.pop %v2016
    %v2018 = vmul.f32 1.0, %v2017
    %v2019 = vmul.f32 %v2011, %v1844
    %v2020 = vmul.f32 %v2005, %v2012
    %v2021 = vadd.f32 %v2019, %v2020
    %v2022 = vtanh.pop %v2021
    %v2023 = vmul.f32 %v2018, %v2022
    %v2024 = vld [vmem:[%s6] sm:$0xf]
    %v2026 = vlaneseq
    %v2027 = vshrl.u32 %v2026, 7
    %v2028 = vsub.s32 0, %v2027
    %v2029 = vrot.slane %v2024, %v2028
    %v2030 = vlaneseq
    %v2031 = vshrl.u32 %v2030, 7
    %v2032 = vsub.s32 1, %v2031
    %v2033 = vrot.slane %v2024, %v2032
    %v2034 = vlaneseq
    %v2035 = vshrl.u32 %v2034, 7
    %v2036 = vsub.s32 2, %v2035
    %v2037 = vrot.slane %v2024, %v2036
    %v2038 = vlaneseq
    %v2039 = vshrl.u32 %v2038, 7
    %v2040 = vsub.s32 3, %v2039
    %v2041 = vrot.slane %v2024, %v2040
    %2046 = vmatprep.subr.mxu0 %v217
    %2047 = vmatpush1.msra.mxu0 %v216
    %2048 = vmatprep.subr.mxu0 %v221
    %2049 = vmatpush1.msra.mxu0 %v220
    %2050 = vmatprep.subr.mxu0 %v225
    %2051 = vmatpush1.msra.mxu0 %v224
    %2052 = vmatprep.subr.mxu0 %v229
    %2053 = vmatpush1.msra.mxu0 %v228
    %2054 = vmatprep.subr.mxu0 %v233
    %2055 = vmatpush1.msra.mxu0 %v232
    %2056 = vmatprep.subr.mxu0 %v237
    %2057 = vmatpush1.msra.mxu0 %v236
    %2058 = vmatprep.subr.mxu0 %v241
    %2059 = vmatpush1.msra.mxu0 %v240
    %2060 = vmatprep.subr.mxu0 %v245
    %2061 = vmatpush1.msra.mxu0 %v244
    %2062 = vmatprep.subr.mxu0 %v249
    %2063 = vmatpush1.msra.mxu0 %v248
    %2064 = vmatprep.subr.mxu0 %v253
    %2065 = vmatpush1.msra.mxu0 %v252
    %2066 = vmatprep.subr.mxu0 %v257
    %2067 = vmatpush1.msra.mxu0 %v256
    %2068 = vmatprep.subr.mxu0 %v261
    %2069 = vmatpush1.msra.mxu0 %v260
    %2070 = vmatprep.subr.mxu0 %v265
    %2071 = vmatpush1.msra.mxu0 %v264
    %2072 = vmatprep.subr.mxu0 %v269
    %2073 = vmatpush1.msra.mxu0 %v268
    %2074 = vmatprep.subr.mxu0 %v273
    %2075 = vmatpush1.msra.mxu0 %v272
    %2076 = vmatprep.subr.mxu0 %v277
    %2077 = vmatpush1.msra.mxu0 %v276
    %2078 = vmatprep.subr.mxu0 0.0
    %2079 = vmatpush1.msra.mxu0 0.0
    %2080 = vmatprep.subr.mxu0 0.0
    %2081 = vmatpush1.msra.mxu0 0.0
    %2082 = vmatprep.subr.mxu0 0.0
    %2083 = vmatpush1.msra.mxu0 0.0
    %2084 = vmatprep.subr.mxu0 0.0
    %2085 = vmatpush1.msra.mxu0 0.0
    %2086 = vmatprep.subr.mxu0 0.0
    %2087 = vmatpush1.msra.mxu0 0.0
    %2088 = vmatprep.subr.mxu0 0.0
    %2089 = vmatpush1.msra.mxu0 0.0
    %2090 = vmatprep.subr.mxu0 0.0
    %2091 = vmatpush1.msra.mxu0 0.0
    %2092 = vmatprep.subr.mxu0 0.0
    %2093 = vmatpush1.msra.mxu0 0.0
    %2094 = vmatprep.subr.mxu0 0.0
    %2095 = vmatpush1.msra.mxu0 0.0
    %2096 = vmatprep.subr.mxu0 0.0
    %2097 = vmatpush1.msra.mxu0 0.0
    %2098 = vmatprep.subr.mxu0 0.0
    %2099 = vmatpush1.msra.mxu0 0.0
    %2100 = vmatprep.subr.mxu0 0.0
    %2101 = vmatpush1.msra.mxu0 0.0
    %2102 = vmatprep.subr.mxu0 0.0
    %2103 = vmatpush1.msra.mxu0 0.0
    %2104 = vmatprep.subr.mxu0 0.0
    %2105 = vmatpush1.msra.mxu0 0.0
    %2106 = vmatprep.subr.mxu0 0.0
    %2107 = vmatpush1.msra.mxu0 0.0
    %2108 = vmatprep.subr.mxu0 0.0
    %2109 = vmatpush1.msra.mxu0 0.0
    %2110 = vmatprep.mubr.f32.mxu0 0.0
    %2111 = vmatmul.mubr.f32.gmra.mrb[0].mxu0 %v2023
    %v2112 = vpop.f32.mrb[0].mxu0
    %v2113 = vadd.f32 0.0, %v2112
    %v2114 = vpop.f32.mrb[0].mxu0
    %v2115 = vadd.f32 0.0, %v2114
    %2116 = vdwg.mxu0
    %2117 = vmatprep.subr.mxu0 %v219
    %2118 = vmatpush1.msra.mxu0 %v218
    %2119 = vmatprep.subr.mxu0 %v223
    %2120 = vmatpush1.msra.mxu0 %v222
    %2121 = vmatprep.subr.mxu0 %v227
    %2122 = vmatpush1.msra.mxu0 %v226
    %2123 = vmatprep.subr.mxu0 %v231
    %2124 = vmatpush1.msra.mxu0 %v230
    %2125 = vmatprep.subr.mxu0 %v235
    %2126 = vmatpush1.msra.mxu0 %v234
    %2127 = vmatprep.subr.mxu0 %v239
    %2128 = vmatpush1.msra.mxu0 %v238
    %2129 = vmatprep.subr.mxu0 %v243
    %2130 = vmatpush1.msra.mxu0 %v242
    %2131 = vmatprep.subr.mxu0 %v247
    %2132 = vmatpush1.msra.mxu0 %v246
    %2133 = vmatprep.subr.mxu0 %v251
    %2134 = vmatpush1.msra.mxu0 %v250
    %2135 = vmatprep.subr.mxu0 %v255
    %2136 = vmatpush1.msra.mxu0 %v254
    %2137 = vmatprep.subr.mxu0 %v259
    %2138 = vmatpush1.msra.mxu0 %v258
    %2139 = vmatprep.subr.mxu0 %v263
    %2140 = vmatpush1.msra.mxu0 %v262
    %2141 = vmatprep.subr.mxu0 %v267
    %2142 = vmatpush1.msra.mxu0 %v266
    %2143 = vmatprep.subr.mxu0 %v271
    %2144 = vmatpush1.msra.mxu0 %v270
    %2145 = vmatprep.subr.mxu0 %v275
    %2146 = vmatpush1.msra.mxu0 %v274
    %2147 = vmatprep.subr.mxu0 %v279
    %2148 = vmatpush1.msra.mxu0 %v278
    %2149 = vmatprep.subr.mxu0 0.0
    %2150 = vmatpush1.msra.mxu0 0.0
    %2151 = vmatprep.subr.mxu0 0.0
    %2152 = vmatpush1.msra.mxu0 0.0
    %2153 = vmatprep.subr.mxu0 0.0
    %2154 = vmatpush1.msra.mxu0 0.0
    %2155 = vmatprep.subr.mxu0 0.0
    %2156 = vmatpush1.msra.mxu0 0.0
    %2157 = vmatprep.subr.mxu0 0.0
    %2158 = vmatpush1.msra.mxu0 0.0
    %2159 = vmatprep.subr.mxu0 0.0
    %2160 = vmatpush1.msra.mxu0 0.0
    %2161 = vmatprep.subr.mxu0 0.0
    %2162 = vmatpush1.msra.mxu0 0.0
    %2163 = vmatprep.subr.mxu0 0.0
    %2164 = vmatpush1.msra.mxu0 0.0
    %2165 = vmatprep.subr.mxu0 0.0
    %2166 = vmatpush1.msra.mxu0 0.0
    %2167 = vmatprep.subr.mxu0 0.0
    %2168 = vmatpush1.msra.mxu0 0.0
    %2169 = vmatprep.subr.mxu0 0.0
    %2170 = vmatpush1.msra.mxu0 0.0
    %2171 = vmatprep.subr.mxu0 0.0
    %2172 = vmatpush1.msra.mxu0 0.0
    %2173 = vmatprep.subr.mxu0 0.0
    %2174 = vmatpush1.msra.mxu0 0.0
    %2175 = vmatprep.subr.mxu0 0.0
    %2176 = vmatpush1.msra.mxu0 0.0
    %2177 = vmatprep.subr.mxu0 0.0
    %2178 = vmatpush1.msra.mxu0 0.0
    %2179 = vmatprep.subr.mxu0 0.0
    %2180 = vmatpush1.msra.mxu0 0.0
    %2181 = vmatprep.mubr.f32.mxu0 0.0
    %2182 = vmatmul.mubr.f32.gmra.mrb[0].mxu0 %v2023
    %v2183 = vpop.f32.mrb[0].mxu0
    %v2184 = vadd.f32 0.0, %v2183
    %v2185 = vpop.f32.mrb[0].mxu0
    %v2186 = vadd.f32 0.0, %v2185
    %2187 = vdwg.mxu0
    %2188 = vmatprep.subr.mxu0 %v153
    %2189 = vmatpush1.msra.mxu0 %v152
    %2190 = vmatprep.subr.mxu0 %v157
    %2191 = vmatpush1.msra.mxu0 %v156
    %2192 = vmatprep.subr.mxu0 %v161
    %2193 = vmatpush1.msra.mxu0 %v160
    %2194 = vmatprep.subr.mxu0 %v165
    %2195 = vmatpush1.msra.mxu0 %v164
    %2196 = vmatprep.subr.mxu0 %v169
    %2197 = vmatpush1.msra.mxu0 %v168
    %2198 = vmatprep.subr.mxu0 %v173
    %2199 = vmatpush1.msra.mxu0 %v172
    %2200 = vmatprep.subr.mxu0 %v177
    %2201 = vmatpush1.msra.mxu0 %v176
    %2202 = vmatprep.subr.mxu0 %v181
    %2203 = vmatpush1.msra.mxu0 %v180
    %2204 = vmatprep.subr.mxu0 %v185
    %2205 = vmatpush1.msra.mxu0 %v184
    %2206 = vmatprep.subr.mxu0 %v189
    %2207 = vmatpush1.msra.mxu0 %v188
    %2208 = vmatprep.subr.mxu0 %v193
    %2209 = vmatpush1.msra.mxu0 %v192
    %2210 = vmatprep.subr.mxu0 %v197
    %2211 = vmatpush1.msra.mxu0 %v196
    %2212 = vmatprep.subr.mxu0 %v201
    %2213 = vmatpush1.msra.mxu0 %v200
    %2214 = vmatprep.subr.mxu0 %v205
    %2215 = vmatpush1.msra.mxu0 %v204
    %2216 = vmatprep.subr.mxu0 %v209
    %2217 = vmatpush1.msra.mxu0 %v208
    %2218 = vmatprep.subr.mxu0 %v213
    %2219 = vmatpush1.msra.mxu0 %v212
    %2220 = vmatprep.subr.mxu0 0.0
    %2221 = vmatpush1.msra.mxu0 0.0
    %2222 = vmatprep.subr.mxu0 0.0
    %2223 = vmatpush1.msra.mxu0 0.0
    %2224 = vmatprep.subr.mxu0 0.0
    %2225 = vmatpush1.msra.mxu0 0.0
    %2226 = vmatprep.subr.mxu0 0.0
    %2227 = vmatpush1.msra.mxu0 0.0
    %2228 = vmatprep.subr.mxu0 0.0
    %2229 = vmatpush1.msra.mxu0 0.0
    %2230 = vmatprep.subr.mxu0 0.0
    %2231 = vmatpush1.msra.mxu0 0.0
    %2232 = vmatprep.subr.mxu0 0.0
    %2233 = vmatpush1.msra.mxu0 0.0
    %2234 = vmatprep.subr.mxu0 0.0
    %2235 = vmatpush1.msra.mxu0 0.0
    %2236 = vmatprep.subr.mxu0 0.0
    %2237 = vmatpush1.msra.mxu0 0.0
    %2238 = vmatprep.subr.mxu0 0.0
    %2239 = vmatpush1.msra.mxu0 0.0
    %2240 = vmatprep.subr.mxu0 0.0
    %2241 = vmatpush1.msra.mxu0 0.0
    %2242 = vmatprep.subr.mxu0 0.0
    %2243 = vmatpush1.msra.mxu0 0.0
    %2244 = vmatprep.subr.mxu0 0.0
    %2245 = vmatpush1.msra.mxu0 0.0
    %2246 = vmatprep.subr.mxu0 0.0
    %2247 = vmatpush1.msra.mxu0 0.0
    %2248 = vmatprep.subr.mxu0 0.0
    %2249 = vmatpush1.msra.mxu0 0.0
    %2250 = vmatprep.subr.mxu0 0.0
    %2251 = vmatpush1.msra.mxu0 0.0
    %2252 = vmatprep.mubr.f32.mxu0 0.0
    %2253 = vmatmul.mubr.f32.gmra.mrb[0].mxu0 %v2023
    %v2254 = vpop.f32.mrb[0].mxu0
    %v2255 = vadd.f32 %v2113, %v2254
    %v2256 = vpop.f32.mrb[0].mxu0
    %v2257 = vadd.f32 %v2115, %v2256
    %2258 = vdwg.mxu0
    %2259 = vmatprep.subr.mxu0 %v155
    %2260 = vmatpush1.msra.mxu0 %v154
    %2261 = vmatprep.subr.mxu0 %v159
    %2262 = vmatpush1.msra.mxu0 %v158
    %2263 = vmatprep.subr.mxu0 %v163
    %2264 = vmatpush1.msra.mxu0 %v162
    %2265 = vmatprep.subr.mxu0 %v167
    %2266 = vmatpush1.msra.mxu0 %v166
    %2267 = vmatprep.subr.mxu0 %v171
    %2268 = vmatpush1.msra.mxu0 %v170
    %2269 = vmatprep.subr.mxu0 %v175
    %2270 = vmatpush1.msra.mxu0 %v174
    %2271 = vmatprep.subr.mxu0 %v179
    %2272 = vmatpush1.msra.mxu0 %v178
    %2273 = vmatprep.subr.mxu0 %v183
    %2274 = vmatpush1.msra.mxu0 %v182
    %2275 = vmatprep.subr.mxu0 %v187
    %2276 = vmatpush1.msra.mxu0 %v186
    %2277 = vmatprep.subr.mxu0 %v191
    %2278 = vmatpush1.msra.mxu0 %v190
    %2279 = vmatprep.subr.mxu0 %v195
    %2280 = vmatpush1.msra.mxu0 %v194
    %2281 = vmatprep.subr.mxu0 %v199
    %2282 = vmatpush1.msra.mxu0 %v198
    %2283 = vmatprep.subr.mxu0 %v203
    %2284 = vmatpush1.msra.mxu0 %v202
    %2285 = vmatprep.subr.mxu0 %v207
    %2286 = vmatpush1.msra.mxu0 %v206
    %2287 = vmatprep.subr.mxu0 %v211
    %2288 = vmatpush1.msra.mxu0 %v210
    %2289 = vmatprep.subr.mxu0 %v215
    %2290 = vmatpush1.msra.mxu0 %v214
    %2291 = vmatprep.subr.mxu0 0.0
    %2292 = vmatpush1.msra.mxu0 0.0
    %2293 = vmatprep.subr.mxu0 0.0
    %2294 = vmatpush1.msra.mxu0 0.0
    %2295 = vmatprep.subr.mxu0 0.0
    %2296 = vmatpush1.msra.mxu0 0.0
    %2297 = vmatprep.subr.mxu0 0.0
    %2298 = vmatpush1.msra.mxu0 0.0
    %2299 = vmatprep.subr.mxu0 0.0
    %2300 = vmatpush1.msra.mxu0 0.0
    %2301 = vmatprep.subr.mxu0 0.0
    %2302 = vmatpush1.msra.mxu0 0.0
    %2303 = vmatprep.subr.mxu0 0.0
    %2304 = vmatpush1.msra.mxu0 0.0
    %2305 = vmatprep.subr.mxu0 0.0
    %2306 = vmatpush1.msra.mxu0 0.0
    %2307 = vmatprep.subr.mxu0 0.0
    %2308 = vmatpush1.msra.mxu0 0.0
    %2309 = vmatprep.subr.mxu0 0.0
    %2310 = vmatpush1.msra.mxu0 0.0
    %2311 = vmatprep.subr.mxu0 0.0
    %2312 = vmatpush1.msra.mxu0 0.0
    %2313 = vmatprep.subr.mxu0 0.0
    %2314 = vmatpush1.msra.mxu0 0.0
    %2315 = vmatprep.subr.mxu0 0.0
    %2316 = vmatpush1.msra.mxu0 0.0
    %2317 = vmatprep.subr.mxu0 0.0
    %2318 = vmatpush1.msra.mxu0 0.0
    %2319 = vmatprep.subr.mxu0 0.0
    %2320 = vmatpush1.msra.mxu0 0.0
    %2321 = vmatprep.subr.mxu0 0.0
    %2322 = vmatpush1.msra.mxu0 0.0
    %2323 = vmatprep.mubr.f32.mxu0 0.0
    %2324 = vmatmul.mubr.f32.gmra.mrb[0].mxu0 %v2023
    %v2325 = vpop.f32.mrb[0].mxu0
    %v2326 = vadd.f32 %v2184, %v2325
    %v2327 = vpop.f32.mrb[0].mxu0
    %v2328 = vadd.f32 %v2186, %v2327
    %2329 = vdwg.mxu0
    %v2330 = vadd.f32 %v2255, %v2029
    %v2331 = vadd.f32 %v2257, %v2033
    %v2332 = vadd.f32 %v2326, %v2037
    %v2333 = vadd.f32 %v2328, %v2041
    %v2334 = vxor.u32 %v2330, 2147483648
    %v2335 = vmul.f32 %v2334, 1.442695
    %v2336 = vpow.pop %v2335
    %v2337 = vadd.f32 %v2336, 1.0
    %v2338 = vrcp.pop %v2337
    %v2339 = vmul.f32 1.0, %v2338
    %v2340 = vxor.u32 %v2331, 2147483648
    %v2341 = vmul.f32 %v2340, 1.442695
    %v2342 = vpow.pop %v2341
    %v2343 = vadd.f32 %v2342, 1.0
    %v2344 = vrcp.pop %v2343
    %v2345 = vmul.f32 1.0, %v2344
    %v2346 = vtanh.pop %v2332
    %v2347 = vxor.u32 %v2333, 2147483648
    %v2348 = vmul.f32 %v2347, 1.442695
    %v2349 = vpow.pop %v2348
    %v2350 = vadd.f32 %v2349, 1.0
    %v2351 = vrcp.pop %v2350
    %v2352 = vmul.f32 1.0, %v2351
    %v2353 = vmul.f32 %v2345, %v2021
    %v2354 = vmul.f32 %v2339, %v2346
    %v2355 = vadd.f32 %v2353, %v2354
    %v2356 = vtanh.pop %v2355
    %v2357 = vmul.f32 %v2352, %v2356
    %2358 = vst [vmem:[#allocation3] sm:$0xff] %v2357
    %2359 = vmatprep.subr.mxu0 %v217
    %2360 = vmatpush1.msra.mxu0 %v216
    %2361 = vmatprep.subr.mxu0 %v221
    %2362 = vmatpush1.msra.mxu0 %v220
    %2363 = vmatprep.subr.mxu0 %v225
    %2364 = vmatpush1.msra.mxu0 %v224
    %2365 = vmatprep.subr.mxu0 %v229
    %2366 = vmatpush1.msra.mxu0 %v228
    %2367 = vmatprep.subr.mxu0 %v233
    %2368 = vmatpush1.msra.mxu0 %v232
    %2369 = vmatprep.subr.mxu0 %v237
    %2370 = vmatpush1.msra.mxu0 %v236
    %2371 = vmatprep.subr.mxu0 %v241
    %2372 = vmatpush1.msra.mxu0 %v240
    %2373 = vmatprep.subr.mxu0 %v245
    %2374 = vmatpush1.msra.mxu0 %v244
    %2375 = vmatprep.subr.mxu0 %v249
    %2376 = vmatpush1.msra.mxu0 %v248
    %2377 = vmatprep.subr.mxu0 %v253
    %2378 = vmatpush1.msra.mxu0 %v252
    %2379 = vmatprep.subr.mxu0 %v257
    %2380 = vmatpush1.msra.mxu0 %v256
    %2381 = vmatprep.subr.mxu0 %v261
    %2382 = vmatpush1.msra.mxu0 %v260
    %2383 = vmatprep.subr.mxu0 %v265
    %2384 = vmatpush1.msra.mxu0 %v264
    %2385 = vmatprep.subr.mxu0 %v269
    %2386 = vmatpush1.msra.mxu0 %v268
    %2387 = vmatprep.subr.mxu0 %v273
    %2388 = vmatpush1.msra.mxu0 %v272
    %2389 = vmatprep.subr.mxu0 %v277
    %2390 = vmatpush1.msra.mxu0 %v276
    %2391 = vmatprep.subr.mxu0 0.0
    %2392 = vmatpush1.msra.mxu0 0.0
    %2393 = vmatprep.subr.mxu0 0.0
    %2394 = vmatpush1.msra.mxu0 0.0
    %2395 = vmatprep.subr.mxu0 0.0
    %2396 = vmatpush1.msra.mxu0 0.0
    %2397 = vmatprep.subr.mxu0 0.0
    %2398 = vmatpush1.msra.mxu0 0.0
    %2399 = vmatprep.subr.mxu0 0.0
    %2400 = vmatpush1.msra.mxu0 0.0
    %2401 = vmatprep.subr.mxu0 0.0
    %2402 = vmatpush1.msra.mxu0 0.0
    %2403 = vmatprep.subr.mxu0 0.0
    %2404 = vmatpush1.msra.mxu0 0.0
    %2405 = vmatprep.subr.mxu0 0.0
    %2406 = vmatpush1.msra.mxu0 0.0
    %2407 = vmatprep.subr.mxu0 0.0
    %2408 = vmatpush1.msra.mxu0 0.0
    %2409 = vmatprep.subr.mxu0 0.0
    %2410 = vmatpush1.msra.mxu0 0.0
    %2411 = vmatprep.subr.mxu0 0.0
    %2412 = vmatpush1.msra.mxu0 0.0
    %2413 = vmatprep.subr.mxu0 0.0
    %2414 = vmatpush1.msra.mxu0 0.0
    %2415 = vmatprep.subr.mxu0 0.0
    %2416 = vmatpush1.msra.mxu0 0.0
    %2417 = vmatprep.subr.mxu0 0.0
    %2418 = vmatpush1.msra.mxu0 0.0
    %2419 = vmatprep.subr.mxu0 0.0
    %2420 = vmatpush1.msra.mxu0 0.0
    %2421 = vmatprep.subr.mxu0 0.0
    %2422 = vmatpush1.msra.mxu0 0.0
    %2423 = vmatprep.mubr.f32.mxu0 0.0
    %2424 = vmatmul.mubr.f32.gmra.mrb[0].mxu0 %v2357
    %v2425 = vpop.f32.mrb[0].mxu0
    %v2426 = vadd.f32 0.0, %v2425
    %v2427 = vpop.f32.mrb[0].mxu0
    %v2428 = vadd.f32 0.0, %v2427
    %2429 = vdwg.mxu0
    %2430 = vmatprep.subr.mxu0 %v219
    %2431 = vmatpush1.msra.mxu0 %v218
    %2432 = vmatprep.subr.mxu0 %v223
    %2433 = vmatpush1.msra.mxu0 %v222
    %2434 = vmatprep.subr.mxu0 %v227
    %2435 = vmatpush1.msra.mxu0 %v226
    %2436 = vmatprep.subr.mxu0 %v231
    %2437 = vmatpush1.msra.mxu0 %v230
    %2438 = vmatprep.subr.mxu0 %v235
    %2439 = vmatpush1.msra.mxu0 %v234
    %2440 = vmatprep.subr.mxu0 %v239
    %2441 = vmatpush1.msra.mxu0 %v238
    %2442 = vmatprep.subr.mxu0 %v243
    %2443 = vmatpush1.msra.mxu0 %v242
    %2444 = vmatprep.subr.mxu0 %v247
    %2445 = vmatpush1.msra.mxu0 %v246
    %2446 = vmatprep.subr.mxu0 %v251
    %2447 = vmatpush1.msra.mxu0 %v250
    %2448 = vmatprep.subr.mxu0 %v255
    %2449 = vmatpush1.msra.mxu0 %v254
    %2450 = vmatprep.subr.mxu0 %v259
    %2451 = vmatpush1.msra.mxu0 %v258
    %2452 = vmatprep.subr.mxu0 %v263
    %2453 = vmatpush1.msra.mxu0 %v262
    %2454 = vmatprep.subr.mxu0 %v267
    %2455 = vmatpush1.msra.mxu0 %v266
    %2456 = vmatprep.subr.mxu0 %v271
    %2457 = vmatpush1.msra.mxu0 %v270
    %2458 = vmatprep.subr.mxu0 %v275
    %2459 = vmatpush1.msra.mxu0 %v274
    %2460 = vmatprep.subr.mxu0 %v279
    %2461 = vmatpush1.msra.mxu0 %v278
    %2462 = vmatprep.subr.mxu0 0.0
    %2463 = vmatpush1.msra.mxu0 0.0
    %2464 = vmatprep.subr.mxu0 0.0
    %2465 = vmatpush1.msra.mxu0 0.0
    %2466 = vmatprep.subr.mxu0 0.0
    %2467 = vmatpush1.msra.mxu0 0.0
    %2468 = vmatprep.subr.mxu0 0.0
    %2469 = vmatpush1.msra.mxu0 0.0
    %2470 = vmatprep.subr.mxu0 0.0
    %2471 = vmatpush1.msra.mxu0 0.0
    %2472 = vmatprep.subr.mxu0 0.0
    %2473 = vmatpush1.msra.mxu0 0.0
    %2474 = vmatprep.subr.mxu0 0.0
    %2475 = vmatpush1.msra.mxu0 0.0
    %2476 = vmatprep.subr.mxu0 0.0
    %2477 = vmatpush1.msra.mxu0 0.0
    %2478 = vmatprep.subr.mxu0 0.0
    %2479 = vmatpush1.msra.mxu0 0.0
    %2480 = vmatprep.subr.mxu0 0.0
    %2481 = vmatpush1.msra.mxu0 0.0
    %2482 = vmatprep.subr.mxu0 0.0
    %2483 = vmatpush1.msra.mxu0 0.0
    %2484 = vmatprep.subr.mxu0 0.0
    %2485 = vmatpush1.msra.mxu0 0.0
    %2486 = vmatprep.subr.mxu0 0.0
    %2487 = vmatpush1.msra.mxu0 0.0
    %2488 = vmatprep.subr.mxu0 0.0
    %2489 = vmatpush1.msra.mxu0 0.0
    %2490 = vmatprep.subr.mxu0 0.0
    %2491 = vmatpush1.msra.mxu0 0.0
    %2492 = vmatprep.subr.mxu0 0.0
    %2493 = vmatpush1.msra.mxu0 0.0
    %2494 = vmatprep.mubr.f32.mxu0 0.0
    %2495 = vmatmul.mubr.f32.gmra.mrb[0].mxu0 %v2357
    %v2496 = vpop.f32.mrb[0].mxu0
    %v2497 = vadd.f32 0.0, %v2496
    %v2498 = vpop.f32.mrb[0].mxu0
    %v2499 = vadd.f32 0.0, %v2498
    %2500 = vdwg.mxu0
    %2501 = vmatprep.subr.mxu0 %v153
    %2502 = vmatpush1.msra.mxu0 %v152
    %2503 = vmatprep.subr.mxu0 %v157
    %2504 = vmatpush1.msra.mxu0 %v156
    %2505 = vmatprep.subr.mxu0 %v161
    %2506 = vmatpush1.msra.mxu0 %v160
    %2507 = vmatprep.subr.mxu0 %v165
    %2508 = vmatpush1.msra.mxu0 %v164
    %2509 = vmatprep.subr.mxu0 %v169
    %2510 = vmatpush1.msra.mxu0 %v168
    %2511 = vmatprep.subr.mxu0 %v173
    %2512 = vmatpush1.msra.mxu0 %v172
    %2513 = vmatprep.subr.mxu0 %v177
    %2514 = vmatpush1.msra.mxu0 %v176
    %2515 = vmatprep.subr.mxu0 %v181
    %2516 = vmatpush1.msra.mxu0 %v180
    %2517 = vmatprep.subr.mxu0 %v185
    %2518 = vmatpush1.msra.mxu0 %v184
    %2519 = vmatprep.subr.mxu0 %v189
    %2520 = vmatpush1.msra.mxu0 %v188
    %2521 = vmatprep.subr.mxu0 %v193
    %2522 = vmatpush1.msra.mxu0 %v192
    %2523 = vmatprep.subr.mxu0 %v197
    %2524 = vmatpush1.msra.mxu0 %v196
    %2525 = vmatprep.subr.mxu0 %v201
    %2526 = vmatpush1.msra.mxu0 %v200
    %2527 = vmatprep.subr.mxu0 %v205
    %2528 = vmatpush1.msra.mxu0 %v204
    %2529 = vmatprep.subr.mxu0 %v209
    %2530 = vmatpush1.msra.mxu0 %v208
    %2531 = vmatprep.subr.mxu0 %v213
    %2532 = vmatpush1.msra.mxu0 %v212
    %2533 = vmatprep.subr.mxu0 0.0
    %2534 = vmatpush1.msra.mxu0 0.0
    %2535 = vmatprep.subr.mxu0 0.0
    %2536 = vmatpush1.msra.mxu0 0.0
    %2537 = vmatprep.subr.mxu0 0.0
    %2538 = vmatpush1.msra.mxu0 0.0
    %2539 = vmatprep.subr.mxu0 0.0
    %2540 = vmatpush1.msra.mxu0 0.0
    %2541 = vmatprep.subr.mxu0 0.0
    %2542 = vmatpush1.msra.mxu0 0.0
    %2543 = vmatprep.subr.mxu0 0.0
    %2544 = vmatpush1.msra.mxu0 0.0
    %2545 = vmatprep.subr.mxu0 0.0
    %2546 = vmatpush1.msra.mxu0 0.0
    %2547 = vmatprep.subr.mxu0 0.0
    %2548 = vmatpush1.msra.mxu0 0.0
    %2549 = vmatprep.subr.mxu0 0.0
    %2550 = vmatpush1.msra.mxu0 0.0
    %2551 = vmatprep.subr.mxu0 0.0
    %2552 = vmatpush1.msra.mxu0 0.0
    %2553 = vmatprep.subr.mxu0 0.0
    %2554 = vmatpush1.msra.mxu0 0.0
    %2555 = vmatprep.subr.mxu0 0.0
    %2556 = vmatpush1.msra.mxu0 0.0
    %2557 = vmatprep.subr.mxu0 0.0
    %2558 = vmatpush1.msra.mxu0 0.0
    %2559 = vmatprep.subr.mxu0 0.0
    %2560 = vmatpush1.msra.mxu0 0.0
    %2561 = vmatprep.subr.mxu0 0.0
    %2562 = vmatpush1.msra.mxu0 0.0
    %2563 = vmatprep.subr.mxu0 0.0
    %2564 = vmatpush1.msra.mxu0 0.0
    %2565 = vmatprep.mubr.f32.mxu0 0.0
    %2566 = vmatmul.mubr.f32.gmra.mrb[0].mxu0 %v2357
    %v2567 = vpop.f32.mrb[0].mxu0
    %v2568 = vadd.f32 %v2426, %v2567
    %v2569 = vpop.f32.mrb[0].mxu0
    %v2570 = vadd.f32 %v2428, %v2569
    %2571 = vdwg.mxu0
    %2572 = vmatprep.subr.mxu0 %v155
    %2573 = vmatpush1.msra.mxu0 %v154
    %2574 = vmatprep.subr.mxu0 %v159
    %2575 = vmatpush1.msra.mxu0 %v158
    %2576 = vmatprep.subr.mxu0 %v163
    %2577 = vmatpush1.msra.mxu0 %v162
    %2578 = vmatprep.subr.mxu0 %v167
    %2579 = vmatpush1.msra.mxu0 %v166
    %2580 = vmatprep.subr.mxu0 %v171
    %2581 = vmatpush1.msra.mxu0 %v170
    %2582 = vmatprep.subr.mxu0 %v175
    %2583 = vmatpush1.msra.mxu0 %v174
    %2584 = vmatprep.subr.mxu0 %v179
    %2585 = vmatpush1.msra.mxu0 %v178
    %2586 = vmatprep.subr.mxu0 %v183
    %2587 = vmatpush1.msra.mxu0 %v182
    %2588 = vmatprep.subr.mxu0 %v187
    %2589 = vmatpush1.msra.mxu0 %v186
    %2590 = vmatprep.subr.mxu0 %v191
    %2591 = vmatpush1.msra.mxu0 %v190
    %2592 = vmatprep.subr.mxu0 %v195
    %2593 = vmatpush1.msra.mxu0 %v194
    %2594 = vmatprep.subr.mxu0 %v199
    %2595 = vmatpush1.msra.mxu0 %v198
    %2596 = vmatprep.subr.mxu0 %v203
    %2597 = vmatpush1.msra.mxu0 %v202
    %2598 = vmatprep.subr.mxu0 %v207
    %2599 = vmatpush1.msra.mxu0 %v206
    %2600 = vmatprep.subr.mxu0 %v211
    %2601 = vmatpush1.msra.mxu0 %v210
    %2602 = vmatprep.subr.mxu0 %v215
    %2603 = vmatpush1.msra.mxu0 %v214
    %2604 = vmatprep.subr.mxu0 0.0
    %2605 = vmatpush1.msra.mxu0 0.0
    %2606 = vmatprep.subr.mxu0 0.0
    %2607 = vmatpush1.msra.mxu0 0.0
    %2608 = vmatprep.subr.mxu0 0.0
    %2609 = vmatpush1.msra.mxu0 0.0
    %2610 = vmatprep.subr.mxu0 0.0
    %2611 = vmatpush1.msra.mxu0 0.0
    %2612 = vmatprep.subr.mxu0 0.0
    %2613 = vmatpush1.msra.mxu0 0.0
    %2614 = vmatprep.subr.mxu0 0.0
    %2615 = vmatpush1.msra.mxu0 0.0
    %2616 = vmatprep.subr.mxu0 0.0
    %2617 = vmatpush1.msra.mxu0 0.0
    %2618 = vmatprep.subr.mxu0 0.0
    %2619 = vmatpush1.msra.mxu0 0.0
    %2620 = vmatprep.subr.mxu0 0.0
    %2621 = vmatpush1.msra.mxu0 0.0
    %2622 = vmatprep.subr.mxu0 0.0
    %2623 = vmatpush1.msra.mxu0 0.0
    %2624 = vmatprep.subr.mxu0 0.0
    %2625 = vmatpush1.msra.mxu0 0.0
    %2626 = vmatprep.subr.mxu0 0.0
    %2627 = vmatpush1.msra.mxu0 0.0
    %2628 = vmatprep.subr.mxu0 0.0
    %2629 = vmatpush1.msra.mxu0 0.0
    %2630 = vmatprep.subr.mxu0 0.0
    %2631 = vmatpush1.msra.mxu0 0.0
    %2632 = vmatprep.subr.mxu0 0.0
    %2633 = vmatpush1.msra.mxu0 0.0
    %2634 = vmatprep.subr.mxu0 0.0
    %2635 = vmatpush1.msra.mxu0 0.0
    %2636 = vmatprep.mubr.f32.mxu0 0.0
    %2637 = vmatmul.mubr.f32.gmra.mrb[0].mxu0 %v2357
    %v2638 = vpop.f32.mrb[0].mxu0
    %v2639 = vadd.f32 %v2497, %v2638
    %v2640 = vpop.f32.mrb[0].mxu0
    %v2641 = vadd.f32 %v2499, %v2640
    %2642 = vdwg.mxu0
    %v2643 = vadd.f32 %v2568, %v2029
    %v2644 = vadd.f32 %v2570, %v2033
    %v2645 = vadd.f32 %v2639, %v2037
    %v2646 = vadd.f32 %v2641, %v2041
    %v2647 = vxor.u32 %v2643, 2147483648
    %v2648 = vmul.f32 %v2647, 1.442695
    %v2649 = vpow.pop %v2648
    %v2650 = vadd.f32 %v2649, 1.0
    %v2651 = vrcp.pop %v2650
    %v2652 = vmul.f32 1.0, %v2651
    %v2653 = vxor.u32 %v2644, 2147483648
    %v2654 = vmul.f32 %v2653, 1.442695
    %v2655 = vpow.pop %v2654
    %v2656 = vadd.f32 %v2655, 1.0
    %v2657 = vrcp.pop %v2656
    %v2658 = vmul.f32 1.0, %v2657
    %v2659 = vtanh.pop %v2645
    %v2660 = vxor.u32 %v2646, 2147483648
    %v2661 = vmul.f32 %v2660, 1.442695
    %v2662 = vpow.pop %v2661
    %v2663 = vadd.f32 %v2662, 1.0
    %v2664 = vrcp.pop %v2663
    %v2665 = vmul.f32 1.0, %v2664
    %v2666 = vmul.f32 %v2658, %v2355
    %v2667 = vmul.f32 %v2652, %v2659
    %v2668 = vadd.f32 %v2666, %v2667
    %v2669 = vtanh.pop %v2668
    %v2670 = vmul.f32 %v2665, %v2669
    %s2671 = scalar_lea.vmem [#allocation3], 8
    %2672 = vst [vmem:[%s2671] sm:$0xff] %v2670
    %2673 = vmatprep.subr.mxu0 %v217
    %2674 = vmatpush1.msra.mxu0 %v216
    %2675 = vmatprep.subr.mxu0 %v221
    %2676 = vmatpush1.msra.mxu0 %v220
    %2677 = vmatprep.subr.mxu0 %v225
    %2678 = vmatpush1.msra.mxu0 %v224
    %2679 = vmatprep.subr.mxu0 %v229
    %2680 = vmatpush1.msra.mxu0 %v228
    %2681 = vmatprep.subr.mxu0 %v233
    %2682 = vmatpush1.msra.mxu0 %v232
    %2683 = vmatprep.subr.mxu0 %v237
    %2684 = vmatpush1.msra.mxu0 %v236
    %2685 = vmatprep.subr.mxu0 %v241
    %2686 = vmatpush1.msra.mxu0 %v240
    %2687 = vmatprep.subr.mxu0 %v245
    %2688 = vmatpush1.msra.mxu0 %v244
    %2689 = vmatprep.subr.mxu0 %v249
    %2690 = vmatpush1.msra.mxu0 %v248
    %2691 = vmatprep.subr.mxu0 %v253
    %2692 = vmatpush1.msra.mxu0 %v252
    %2693 = vmatprep.subr.mxu0 %v257
    %2694 = vmatpush1.msra.mxu0 %v256
    %2695 = vmatprep.subr.mxu0 %v261
    %2696 = vmatpush1.msra.mxu0 %v260
    %2697 = vmatprep.subr.mxu0 %v265
    %2698 = vmatpush1.msra.mxu0 %v264
    %2699 = vmatprep.subr.mxu0 %v269
    %2700 = vmatpush1.msra.mxu0 %v268
    %2701 = vmatprep.subr.mxu0 %v273
    %2702 = vmatpush1.msra.mxu0 %v272
    %2703 = vmatprep.subr.mxu0 %v277
    %2704 = vmatpush1.msra.mxu0 %v276
    %2705 = vmatprep.subr.mxu0 0.0
    %2706 = vmatpush1.msra.mxu0 0.0
    %2707 = vmatprep.subr.mxu0 0.0
    %2708 = vmatpush1.msra.mxu0 0.0
    %2709 = vmatprep.subr.mxu0 0.0
    %2710 = vmatpush1.msra.mxu0 0.0
    %2711 = vmatprep.subr.mxu0 0.0
    %2712 = vmatpush1.msra.mxu0 0.0
    %2713 = vmatprep.subr.mxu0 0.0
    %2714 = vmatpush1.msra.mxu0 0.0
    %2715 = vmatprep.subr.mxu0 0.0
    %2716 = vmatpush1.msra.mxu0 0.0
    %2717 = vmatprep.subr.mxu0 0.0
    %2718 = vmatpush1.msra.mxu0 0.0
    %2719 = vmatprep.subr.mxu0 0.0
    %2720 = vmatpush1.msra.mxu0 0.0
    %2721 = vmatprep.subr.mxu0 0.0
    %2722 = vmatpush1.msra.mxu0 0.0
    %2723 = vmatprep.subr.mxu0 0.0
    %2724 = vmatpush1.msra.mxu0 0.0
    %2725 = vmatprep.subr.mxu0 0.0
    %2726 = vmatpush1.msra.mxu0 0.0
    %2727 = vmatprep.subr.mxu0 0.0
    %2728 = vmatpush1.msra.mxu0 0.0
    %2729 = vmatprep.subr.mxu0 0.0
    %2730 = vmatpush1.msra.mxu0 0.0
    %2731 = vmatprep.subr.mxu0 0.0
    %2732 = vmatpush1.msra.mxu0 0.0
    %2733 = vmatprep.subr.mxu0 0.0
    %2734 = vmatpush1.msra.mxu0 0.0
    %2735 = vmatprep.subr.mxu0 0.0
    %2736 = vmatpush1.msra.mxu0 0.0
    %2737 = vmatprep.mubr.f32.mxu0 0.0
    %2738 = vmatmul.mubr.f32.gmra.mrb[0].mxu0 %v2670
    %v2739 = vpop.f32.mrb[0].mxu0
    %v2740 = vadd.f32 0.0, %v2739
    %v2741 = vpop.f32.mrb[0].mxu0
    %v2742 = vadd.f32 0.0, %v2741
    %2743 = vdwg.mxu0
    %2744 = vmatprep.subr.mxu0 %v219
    %2745 = vmatpush1.msra.mxu0 %v218
    %2746 = vmatprep.subr.mxu0 %v223
    %2747 = vmatpush1.msra.mxu0 %v222
    %2748 = vmatprep.subr.mxu0 %v227
    %2749 = vmatpush1.msra.mxu0 %v226
    %2750 = vmatprep.subr.mxu0 %v231
    %2751 = vmatpush1.msra.mxu0 %v230
    %2752 = vmatprep.subr.mxu0 %v235
    %2753 = vmatpush1.msra.mxu0 %v234
    %2754 = vmatprep.subr.mxu0 %v239
    %2755 = vmatpush1.msra.mxu0 %v238
    %2756 = vmatprep.subr.mxu0 %v243
    %2757 = vmatpush1.msra.mxu0 %v242
    %2758 = vmatprep.subr.mxu0 %v247
    %2759 = vmatpush1.msra.mxu0 %v246
    %2760 = vmatprep.subr.mxu0 %v251
    %2761 = vmatpush1.msra.mxu0 %v250
    %2762 = vmatprep.subr.mxu0 %v255
    %2763 = vmatpush1.msra.mxu0 %v254
    %2764 = vmatprep.subr.mxu0 %v259
    %2765 = vmatpush1.msra.mxu0 %v258
    %2766 = vmatprep.subr.mxu0 %v263
    %2767 = vmatpush1.msra.mxu0 %v262
    %2768 = vmatprep.subr.mxu0 %v267
    %2769 = vmatpush1.msra.mxu0 %v266
    %2770 = vmatprep.subr.mxu0 %v271
    %2771 = vmatpush1.msra.mxu0 %v270
    %2772 = vmatprep.subr.mxu0 %v275
    %2773 = vmatpush1.msra.mxu0 %v274
    %2774 = vmatprep.subr.mxu0 %v279
    %2775 = vmatpush1.msra.mxu0 %v278
    %2776 = vmatprep.subr.mxu0 0.0
    %2777 = vmatpush1.msra.mxu0 0.0
    %2778 = vmatprep.subr.mxu0 0.0
    %2779 = vmatpush1.msra.mxu0 0.0
    %2780 = vmatprep.subr.mxu0 0.0
    %2781 = vmatpush1.msra.mxu0 0.0
    %2782 = vmatprep.subr.mxu0 0.0
    %2783 = vmatpush1.msra.mxu0 0.0
    %2784 = vmatprep.subr.mxu0 0.0
    %2785 = vmatpush1.msra.mxu0 0.0
    %2786 = vmatprep.subr.mxu0 0.0
    %2787 = vmatpush1.msra.mxu0 0.0
    %2788 = vmatprep.subr.mxu0 0.0
    %2789 = vmatpush1.msra.mxu0 0.0
    %2790 = vmatprep.subr.mxu0 0.0
    %2791 = vmatpush1.msra.mxu0 0.0
    %2792 = vmatprep.subr.mxu0 0.0
    %2793 = vmatpush1.msra.mxu0 0.0
    %2794 = vmatprep.subr.mxu0 0.0
    %2795 = vmatpush1.msra.mxu0 0.0
    %2796 = vmatprep.subr.mxu0 0.0
    %2797 = vmatpush1.msra.mxu0 0.0
    %2798 = vmatprep.subr.mxu0 0.0
    %2799 = vmatpush1.msra.mxu0 0.0
    %2800 = vmatprep.subr.mxu0 0.0
    %2801 = vmatpush1.msra.mxu0 0.0
    %2802 = vmatprep.subr.mxu0 0.0
    %2803 = vmatpush1.msra.mxu0 0.0
    %2804 = vmatprep.subr.mxu0 0.0
    %2805 = vmatpush1.msra.mxu0 0.0
    %2806 = vmatprep.subr.mxu0 0.0
    %2807 = vmatpush1.msra.mxu0 0.0
    %2808 = vmatprep.mubr.f32.mxu0 0.0
    %2809 = vmatmul.mubr.f32.gmra.mrb[0].mxu0 %v2670
    %v2810 = vpop.f32.mrb[0].mxu0
    %v2811 = vadd.f32 0.0, %v2810
    %v2812 = vpop.f32.mrb[0].mxu0
    %v2813 = vadd.f32 0.0, %v2812
    %2814 = vdwg.mxu0
    %2815 = vmatprep.subr.mxu0 %v153
    %2816 = vmatpush1.msra.mxu0 %v152
    %2817 = vmatprep.subr.mxu0 %v157
    %2818 = vmatpush1.msra.mxu0 %v156
    %2819 = vmatprep.subr.mxu0 %v161
    %2820 = vmatpush1.msra.mxu0 %v160
    %2821 = vmatprep.subr.mxu0 %v165
    %2822 = vmatpush1.msra.mxu0 %v164
    %2823 = vmatprep.subr.mxu0 %v169
    %2824 = vmatpush1.msra.mxu0 %v168
    %2825 = vmatprep.subr.mxu0 %v173
    %2826 = vmatpush1.msra.mxu0 %v172
    %2827 = vmatprep.subr.mxu0 %v177
    %2828 = vmatpush1.msra.mxu0 %v176
    %2829 = vmatprep.subr.mxu0 %v181
    %2830 = vmatpush1.msra.mxu0 %v180
    %2831 = vmatprep.subr.mxu0 %v185
    %2832 = vmatpush1.msra.mxu0 %v184
    %2833 = vmatprep.subr.mxu0 %v189
    %2834 = vmatpush1.msra.mxu0 %v188
    %2835 = vmatprep.subr.mxu0 %v193
    %2836 = vmatpush1.msra.mxu0 %v192
    %2837 = vmatprep.subr.mxu0 %v197
    %2838 = vmatpush1.msra.mxu0 %v196
    %2839 = vmatprep.subr.mxu0 %v201
    %2840 = vmatpush1.msra.mxu0 %v200
    %2841 = vmatprep.subr.mxu0 %v205
    %2842 = vmatpush1.msra.mxu0 %v204
    %2843 = vmatprep.subr.mxu0 %v209
    %2844 = vmatpush1.msra.mxu0 %v208
    %2845 = vmatprep.subr.mxu0 %v213
    %2846 = vmatpush1.msra.mxu0 %v212
    %2847 = vmatprep.subr.mxu0 0.0
    %2848 = vmatpush1.msra.mxu0 0.0
    %2849 = vmatprep.subr.mxu0 0.0
    %2850 = vmatpush1.msra.mxu0 0.0
    %2851 = vmatprep.subr.mxu0 0.0
    %2852 = vmatpush1.msra.mxu0 0.0
    %2853 = vmatprep.subr.mxu0 0.0
    %2854 = vmatpush1.msra.mxu0 0.0
    %2855 = vmatprep.subr.mxu0 0.0
    %2856 = vmatpush1.msra.mxu0 0.0
    %2857 = vmatprep.subr.mxu0 0.0
    %2858 = vmatpush1.msra.mxu0 0.0
    %2859 = vmatprep.subr.mxu0 0.0
    %2860 = vmatpush1.msra.mxu0 0.0
    %2861 = vmatprep.subr.mxu0 0.0
    %2862 = vmatpush1.msra.mxu0 0.0
    %2863 = vmatprep.subr.mxu0 0.0
    %2864 = vmatpush1.msra.mxu0 0.0
    %2865 = vmatprep.subr.mxu0 0.0
    %2866 = vmatpush1.msra.mxu0 0.0
    %2867 = vmatprep.subr.mxu0 0.0
    %2868 = vmatpush1.msra.mxu0 0.0
    %2869 = vmatprep.subr.mxu0 0.0
    %2870 = vmatpush1.msra.mxu0 0.0
    %2871 = vmatprep.subr.mxu0 0.0
    %2872 = vmatpush1.msra.mxu0 0.0
    %2873 = vmatprep.subr.mxu0 0.0
    %2874 = vmatpush1.msra.mxu0 0.0
    %2875 = vmatprep.subr.mxu0 0.0
    %2876 = vmatpush1.msra.mxu0 0.0
    %2877 = vmatprep.subr.mxu0 0.0
    %2878 = vmatpush1.msra.mxu0 0.0
    %2879 = vmatprep.mubr.f32.mxu0 0.0
    %2880 = vmatmul.mubr.f32.gmra.mrb[0].mxu0 %v2670
    %v2881 = vpop.f32.mrb[0].mxu0
    %v2882 = vadd.f32 %v2740, %v2881
    %v2883 = vpop.f32.mrb[0].mxu0
    %v2884 = vadd.f32 %v2742, %v2883
    %2885 = vdwg.mxu0
    %2886 = vmatprep.subr.mxu0 %v155
    %2887 = vmatpush1.msra.mxu0 %v154
    %2888 = vmatprep.subr.mxu0 %v159
    %2889 = vmatpush1.msra.mxu0 %v158
    %2890 = vmatprep.subr.mxu0 %v163
    %2891 = vmatpush1.msra.mxu0 %v162
    %2892 = vmatprep.subr.mxu0 %v167
    %2893 = vmatpush1.msra.mxu0 %v166
    %2894 = vmatprep.subr.mxu0 %v171
    %2895 = vmatpush1.msra.mxu0 %v170
    %2896 = vmatprep.subr.mxu0 %v175
    %2897 = vmatpush1.msra.mxu0 %v174
    %2898 = vmatprep.subr.mxu0 %v179
    %2899 = vmatpush1.msra.mxu0 %v178
    %2900 = vmatprep.subr.mxu0 %v183
    %2901 = vmatpush1.msra.mxu0 %v182
    %2902 = vmatprep.subr.mxu0 %v187
    %2903 = vmatpush1.msra.mxu0 %v186
    %2904 = vmatprep.subr.mxu0 %v191
    %2905 = vmatpush1.msra.mxu0 %v190
    %2906 = vmatprep.subr.mxu0 %v195
    %2907 = vmatpush1.msra.mxu0 %v194
    %2908 = vmatprep.subr.mxu0 %v199
    %2909 = vmatpush1.msra.mxu0 %v198
    %2910 = vmatprep.subr.mxu0 %v203
    %2911 = vmatpush1.msra.mxu0 %v202
    %2912 = vmatprep.subr.mxu0 %v207
    %2913 = vmatpush1.msra.mxu0 %v206
    %2914 = vmatprep.subr.mxu0 %v211
    %2915 = vmatpush1.msra.mxu0 %v210
    %2916 = vmatprep.subr.mxu0 %v215
    %2917 = vmatpush1.msra.mxu0 %v214
    %2918 = vmatprep.subr.mxu0 0.0
    %2919 = vmatpush1.msra.mxu0 0.0
    %2920 = vmatprep.subr.mxu0 0.0
    %2921 = vmatpush1.msra.mxu0 0.0
    %2922 = vmatprep.subr.mxu0 0.0
    %2923 = vmatpush1.msra.mxu0 0.0
    %2924 = vmatprep.subr.mxu0 0.0
    %2925 = vmatpush1.msra.mxu0 0.0
    %2926 = vmatprep.subr.mxu0 0.0
    %2927 = vmatpush1.msra.mxu0 0.0
    %2928 = vmatprep.subr.mxu0 0.0
    %2929 = vmatpush1.msra.mxu0 0.0
    %2930 = vmatprep.subr.mxu0 0.0
    %2931 = vmatpush1.msra.mxu0 0.0
    %2932 = vmatprep.subr.mxu0 0.0
    %2933 = vmatpush1.msra.mxu0 0.0
    %2934 = vmatprep.subr.mxu0 0.0
    %2935 = vmatpush1.msra.mxu0 0.0
    %2936 = vmatprep.subr.mxu0 0.0
    %2937 = vmatpush1.msra.mxu0 0.0
    %2938 = vmatprep.subr.mxu0 0.0
    %2939 = vmatpush1.msra.mxu0 0.0
    %2940 = vmatprep.subr.mxu0 0.0
    %2941 = vmatpush1.msra.mxu0 0.0
    %2942 = vmatprep.subr.mxu0 0.0
    %2943 = vmatpush1.msra.mxu0 0.0
    %2944 = vmatprep.subr.mxu0 0.0
    %2945 = vmatpush1.msra.mxu0 0.0
    %2946 = vmatprep.subr.mxu0 0.0
    %2947 = vmatpush1.msra.mxu0 0.0
    %2948 = vmatprep.subr.mxu0 0.0
    %2949 = vmatpush1.msra.mxu0 0.0
    %2950 = vmatprep.mubr.f32.mxu0 0.0
    %2951 = vmatmul.mubr.f32.gmra.mrb[0].mxu0 %v2670
    %v2952 = vpop.f32.mrb[0].mxu0
    %v2953 = vadd.f32 %v2811, %v2952
    %v2954 = vpop.f32.mrb[0].mxu0
    %v2955 = vadd.f32 %v2813, %v2954
    %2956 = vdwg.mxu0
    %v2957 = vadd.f32 %v2882, %v2029
    %v2958 = vadd.f32 %v2884, %v2033
    %v2959 = vadd.f32 %v2953, %v2037
    %v2960 = vadd.f32 %v2955, %v2041
    %v2961 = vxor.u32 %v2957, 2147483648
    %v2962 = vmul.f32 %v2961, 1.442695
    %v2963 = vpow.pop %v2962
    %v2964 = vadd.f32 %v2963, 1.0
    %v2965 = vrcp.pop %v2964
    %v2966 = vmul.f32 1.0, %v2965
    %v2967 = vxor.u32 %v2958, 2147483648
    %v2968 = vmul.f32 %v2967, 1.442695
    %v2969 = vpow.pop %v2968
    %v2970 = vadd.f32 %v2969, 1.0
    %v2971 = vrcp.pop %v2970
    %v2972 = vmul.f32 1.0, %v2971
    %v2973 = vtanh.pop %v2959
    %v2974 = vxor.u32 %v2960, 2147483648
    %v2975 = vmul.f32 %v2974, 1.442695
    %v2976 = vpow.pop %v2975
    %v2977 = vadd.f32 %v2976, 1.0
    %v2978 = vrcp.pop %v2977
    %v2979 = vmul.f32 1.0, %v2978
    %v2980 = vmul.f32 %v2972, %v2668
    %v2981 = vmul.f32 %v2966, %v2973
    %v2982 = vadd.f32 %v2980, %v2981
    %v2983 = vtanh.pop %v2982
    %v2984 = vmul.f32 %v2979, %v2983
    %s2985 = scalar_lea.vmem [#allocation3], 16
    %2986 = vst [vmem:[%s2985] sm:$0xff] %v2984
    %2987 = vmatprep.subr.mxu0 %v217
    %2988 = vmatpush1.msra.mxu0 %v216
    %2989 = vmatprep.subr.mxu0 %v221
    %2990 = vmatpush1.msra.mxu0 %v220
    %2991 = vmatprep.subr.mxu0 %v225
    %2992 = vmatpush1.msra.mxu0 %v224
    %2993 = vmatprep.subr.mxu0 %v229
    %2994 = vmatpush1.msra.mxu0 %v228
    %2995 = vmatprep.subr.mxu0 %v233
    %2996 = vmatpush1.msra.mxu0 %v232
    %2997 = vmatprep.subr.mxu0 %v237
    %2998 = vmatpush1.msra.mxu0 %v236
    %2999 = vmatprep.subr.mxu0 %v241
    %3000 = vmatpush1.msra.mxu0 %v240
    %3001 = vmatprep.subr.mxu0 %v245
    %3002 = vmatpush1.msra.mxu0 %v244
    %3003 = vmatprep.subr.mxu0 %v249
    %3004 = vmatpush1.msra.mxu0 %v248
    %3005 = vmatprep.subr.mxu0 %v253
    %3006 = vmatpush1.msra.mxu0 %v252
    %3007 = vmatprep.subr.mxu0 %v257
    %3008 = vmatpush1.msra.mxu0 %v256
    %3009 = vmatprep.subr.mxu0 %v261
    %3010 = vmatpush1.msra.mxu0 %v260
    %3011 = vmatprep.subr.mxu0 %v265
    %3012 = vmatpush1.msra.mxu0 %v264
    %3013 = vmatprep.subr.mxu0 %v269
    %3014 = vmatpush1.msra.mxu0 %v268
    %3015 = vmatprep.subr.mxu0 %v273
    %3016 = vmatpush1.msra.mxu0 %v272
    %3017 = vmatprep.subr.mxu0 %v277
    %3018 = vmatpush1.msra.mxu0 %v276
    %3019 = vmatprep.subr.mxu0 0.0
    %3020 = vmatpush1.msra.mxu0 0.0
    %3021 = vmatprep.subr.mxu0 0.0
    %3022 = vmatpush1.msra.mxu0 0.0
    %3023 = vmatprep.subr.mxu0 0.0
    %3024 = vmatpush1.msra.mxu0 0.0
    %3025 = vmatprep.subr.mxu0 0.0
    %3026 = vmatpush1.msra.mxu0 0.0
    %3027 = vmatprep.subr.mxu0 0.0
    %3028 = vmatpush1.msra.mxu0 0.0
    %3029 = vmatprep.subr.mxu0 0.0
    %3030 = vmatpush1.msra.mxu0 0.0
    %3031 = vmatprep.subr.mxu0 0.0
    %3032 = vmatpush1.msra.mxu0 0.0
    %3033 = vmatprep.subr.mxu0 0.0
    %3034 = vmatpush1.msra.mxu0 0.0
    %3035 = vmatprep.subr.mxu0 0.0
    %3036 = vmatpush1.msra.mxu0 0.0
    %3037 = vmatprep.subr.mxu0 0.0
    %3038 = vmatpush1.msra.mxu0 0.0
    %3039 = vmatprep.subr.mxu0 0.0
    %3040 = vmatpush1.msra.mxu0 0.0
    %3041 = vmatprep.subr.mxu0 0.0
    %3042 = vmatpush1.msra.mxu0 0.0
    %3043 = vmatprep.subr.mxu0 0.0
    %3044 = vmatpush1.msra.mxu0 0.0
    %3045 = vmatprep.subr.mxu0 0.0
    %3046 = vmatpush1.msra.mxu0 0.0
    %3047 = vmatprep.subr.mxu0 0.0
    %3048 = vmatpush1.msra.mxu0 0.0
    %3049 = vmatprep.subr.mxu0 0.0
    %3050 = vmatpush1.msra.mxu0 0.0
    %3051 = vmatprep.mubr.f32.mxu0 0.0
    %3052 = vmatmul.mubr.f32.gmra.mrb[0].mxu0 %v2984
    %v3053 = vpop.f32.mrb[0].mxu0
    %v3054 = vadd.f32 0.0, %v3053
    %v3055 = vpop.f32.mrb[0].mxu0
    %v3056 = vadd.f32 0.0, %v3055
    %3057 = vdwg.mxu0
    %3058 = vmatprep.subr.mxu0 %v219
    %3059 = vmatpush1.msra.mxu0 %v218
    %3060 = vmatprep.subr.mxu0 %v223
    %3061 = vmatpush1.msra.mxu0 %v222
    %3062 = vmatprep.subr.mxu0 %v227
    %3063 = vmatpush1.msra.mxu0 %v226
    %3064 = vmatprep.subr.mxu0 %v231
    %3065 = vmatpush1.msra.mxu0 %v230
    %3066 = vmatprep.subr.mxu0 %v235
    %3067 = vmatpush1.msra.mxu0 %v234
    %3068 = vmatprep.subr.mxu0 %v239
    %3069 = vmatpush1.msra.mxu0 %v238
    %3070 = vmatprep.subr.mxu0 %v243
    %3071 = vmatpush1.msra.mxu0 %v242
    %3072 = vmatprep.subr.mxu0 %v247
    %3073 = vmatpush1.msra.mxu0 %v246
    %3074 = vmatprep.subr.mxu0 %v251
    %3075 = vmatpush1.msra.mxu0 %v250
    %3076 = vmatprep.subr.mxu0 %v255
    %3077 = vmatpush1.msra.mxu0 %v254
    %3078 = vmatprep.subr.mxu0 %v259
    %3079 = vmatpush1.msra.mxu0 %v258
    %3080 = vmatprep.subr.mxu0 %v263
    %3081 = vmatpush1.msra.mxu0 %v262
    %3082 = vmatprep.subr.mxu0 %v267
    %3083 = vmatpush1.msra.mxu0 %v266
    %3084 = vmatprep.subr.mxu0 %v271
    %3085 = vmatpush1.msra.mxu0 %v270
    %3086 = vmatprep.subr.mxu0 %v275
    %3087 = vmatpush1.msra.mxu0 %v274
    %3088 = vmatprep.subr.mxu0 %v279
    %3089 = vmatpush1.msra.mxu0 %v278
    %3090 = vmatprep.subr.mxu0 0.0
    %3091 = vmatpush1.msra.mxu0 0.0
    %3092 = vmatprep.subr.mxu0 0.0
    %3093 = vmatpush1.msra.mxu0 0.0
    %3094 = vmatprep.subr.mxu0 0.0
    %3095 = vmatpush1.msra.mxu0 0.0
    %3096 = vmatprep.subr.mxu0 0.0
    %3097 = vmatpush1.msra.mxu0 0.0
    %3098 = vmatprep.subr.mxu0 0.0
    %3099 = vmatpush1.msra.mxu0 0.0
    %3100 = vmatprep.subr.mxu0 0.0
    %3101 = vmatpush1.msra.mxu0 0.0
    %3102 = vmatprep.subr.mxu0 0.0
    %3103 = vmatpush1.msra.mxu0 0.0
    %3104 = vmatprep.subr.mxu0 0.0
    %3105 = vmatpush1.msra.mxu0 0.0
    %3106 = vmatprep.subr.mxu0 0.0
    %3107 = vmatpush1.msra.mxu0 0.0
    %3108 = vmatprep.subr.mxu0 0.0
    %3109 = vmatpush1.msra.mxu0 0.0
    %3110 = vmatprep.subr.mxu0 0.0
    %3111 = vmatpush1.msra.mxu0 0.0
    %3112 = vmatprep.subr.mxu0 0.0
    %3113 = vmatpush1.msra.mxu0 0.0
    %3114 = vmatprep.subr.mxu0 0.0
    %3115 = vmatpush1.msra.mxu0 0.0
    %3116 = vmatprep.subr.mxu0 0.0
    %3117 = vmatpush1.msra.mxu0 0.0
    %3118 = vmatprep.subr.mxu0 0.0
    %3119 = vmatpush1.msra.mxu0 0.0
    %3120 = vmatprep.subr.mxu0 0.0
    %3121 = vmatpush1.msra.mxu0 0.0
    %3122 = vmatprep.mubr.f32.mxu0 0.0
    %3123 = vmatmul.mubr.f32.gmra.mrb[0].mxu0 %v2984
    %v3124 = vpop.f32.mrb[0].mxu0
    %v3125 = vadd.f32 0.0, %v3124
    %v3126 = vpop.f32.mrb[0].mxu0
    %v3127 = vadd.f32 0.0, %v3126
    %3128 = vdwg.mxu0
    %3129 = vmatprep.subr.mxu0 %v153
    %3130 = vmatpush1.msra.mxu0 %v152
    %3131 = vmatprep.subr.mxu0 %v157
    %3132 = vmatpush1.msra.mxu0 %v156
    %3133 = vmatprep.subr.mxu0 %v161
    %3134 = vmatpush1.msra.mxu0 %v160
    %3135 = vmatprep.subr.mxu0 %v165
    %3136 = vmatpush1.msra.mxu0 %v164
    %3137 = vmatprep.subr.mxu0 %v169
    %3138 = vmatpush1.msra.mxu0 %v168
    %3139 = vmatprep.subr.mxu0 %v173
    %3140 = vmatpush1.msra.mxu0 %v172
    %3141 = vmatprep.subr.mxu0 %v177
    %3142 = vmatpush1.msra.mxu0 %v176
    %3143 = vmatprep.subr.mxu0 %v181
    %3144 = vmatpush1.msra.mxu0 %v180
    %3145 = vmatprep.subr.mxu0 %v185
    %3146 = vmatpush1.msra.mxu0 %v184
    %3147 = vmatprep.subr.mxu0 %v189
    %3148 = vmatpush1.msra.mxu0 %v188
    %3149 = vmatprep.subr.mxu0 %v193
    %3150 = vmatpush1.msra.mxu0 %v192
    %3151 = vmatprep.subr.mxu0 %v197
    %3152 = vmatpush1.msra.mxu0 %v196
    %3153 = vmatprep.subr.mxu0 %v201
    %3154 = vmatpush1.msra.mxu0 %v200
    %3155 = vmatprep.subr.mxu0 %v205
    %3156 = vmatpush1.msra.mxu0 %v204
    %3157 = vmatprep.subr.mxu0 %v209
    %3158 = vmatpush1.msra.mxu0 %v208
    %3159 = vmatprep.subr.mxu0 %v213
    %3160 = vmatpush1.msra.mxu0 %v212
    %3161 = vmatprep.subr.mxu0 0.0
    %3162 = vmatpush1.msra.mxu0 0.0
    %3163 = vmatprep.subr.mxu0 0.0
    %3164 = vmatpush1.msra.mxu0 0.0
    %3165 = vmatprep.subr.mxu0 0.0
    %3166 = vmatpush1.msra.mxu0 0.0
    %3167 = vmatprep.subr.mxu0 0.0
    %3168 = vmatpush1.msra.mxu0 0.0
    %3169 = vmatprep.subr.mxu0 0.0
    %3170 = vmatpush1.msra.mxu0 0.0
    %3171 = vmatprep.subr.mxu0 0.0
    %3172 = vmatpush1.msra.mxu0 0.0
    %3173 = vmatprep.subr.mxu0 0.0
    %3174 = vmatpush1.msra.mxu0 0.0
    %3175 = vmatprep.subr.mxu0 0.0
    %3176 = vmatpush1.msra.mxu0 0.0
    %3177 = vmatprep.subr.mxu0 0.0
    %3178 = vmatpush1.msra.mxu0 0.0
    %3179 = vmatprep.subr.mxu0 0.0
    %3180 = vmatpush1.msra.mxu0 0.0
    %3181 = vmatprep.subr.mxu0 0.0
    %3182 = vmatpush1.msra.mxu0 0.0
    %3183 = vmatprep.subr.mxu0 0.0
    %3184 = vmatpush1.msra.mxu0 0.0
    %3185 = vmatprep.subr.mxu0 0.0
    %3186 = vmatpush1.msra.mxu0 0.0
    %3187 = vmatprep.subr.mxu0 0.0
    %3188 = vmatpush1.msra.mxu0 0.0
    %3189 = vmatprep.subr.mxu0 0.0
    %3190 = vmatpush1.msra.mxu0 0.0
    %3191 = vmatprep.subr.mxu0 0.0
    %3192 = vmatpush1.msra.mxu0 0.0
    %3193 = vmatprep.mubr.f32.mxu0 0.0
    %3194 = vmatmul.mubr.f32.gmra.mrb[0].mxu0 %v2984
    %v3195 = vpop.f32.mrb[0].mxu0
    %v3196 = vadd.f32 %v3054, %v3195
    %v3197 = vpop.f32.mrb[0].mxu0
    %v3198 = vadd.f32 %v3056, %v3197
    %3199 = vdwg.mxu0
    %3200 = vmatprep.subr.mxu0 %v155
    %3201 = vmatpush1.msra.mxu0 %v154
    %3202 = vmatprep.subr.mxu0 %v159
    %3203 = vmatpush1.msra.mxu0 %v158
    %3204 = vmatprep.subr.mxu0 %v163
    %3205 = vmatpush1.msra.mxu0 %v162
    %3206 = vmatprep.subr.mxu0 %v167
    %3207 = vmatpush1.msra.mxu0 %v166
    %3208 = vmatprep.subr.mxu0 %v171
    %3209 = vmatpush1.msra.mxu0 %v170
    %3210 = vmatprep.subr.mxu0 %v175
    %3211 = vmatpush1.msra.mxu0 %v174
    %3212 = vmatprep.subr.mxu0 %v179
    %3213 = vmatpush1.msra.mxu0 %v178
    %3214 = vmatprep.subr.mxu0 %v183
    %3215 = vmatpush1.msra.mxu0 %v182
    %3216 = vmatprep.subr.mxu0 %v187
    %3217 = vmatpush1.msra.mxu0 %v186
    %3218 = vmatprep.subr.mxu0 %v191
    %3219 = vmatpush1.msra.mxu0 %v190
    %3220 = vmatprep.subr.mxu0 %v195
    %3221 = vmatpush1.msra.mxu0 %v194
    %3222 = vmatprep.subr.mxu0 %v199
    %3223 = vmatpush1.msra.mxu0 %v198
    %3224 = vmatprep.subr.mxu0 %v203
    %3225 = vmatpush1.msra.mxu0 %v202
    %3226 = vmatprep.subr.mxu0 %v207
    %3227 = vmatpush1.msra.mxu0 %v206
    %3228 = vmatprep.subr.mxu0 %v211
    %3229 = vmatpush1.msra.mxu0 %v210
    %3230 = vmatprep.subr.mxu0 %v215
    %3231 = vmatpush1.msra.mxu0 %v214
    %3232 = vmatprep.subr.mxu0 0.0
    %3233 = vmatpush1.msra.mxu0 0.0
    %3234 = vmatprep.subr.mxu0 0.0
    %3235 = vmatpush1.msra.mxu0 0.0
    %3236 = vmatprep.subr.mxu0 0.0
    %3237 = vmatpush1.msra.mxu0 0.0
    %3238 = vmatprep.subr.mxu0 0.0
    %3239 = vmatpush1.msra.mxu0 0.0
    %3240 = vmatprep.subr.mxu0 0.0
    %3241 = vmatpush1.msra.mxu0 0.0
    %3242 = vmatprep.subr.mxu0 0.0
    %3243 = vmatpush1.msra.mxu0 0.0
    %3244 = vmatprep.subr.mxu0 0.0
    %3245 = vmatpush1.msra.mxu0 0.0
    %3246 = vmatprep.subr.mxu0 0.0
    %3247 = vmatpush1.msra.mxu0 0.0
    %3248 = vmatprep.subr.mxu0 0.0
    %3249 = vmatpush1.msra.mxu0 0.0
    %3250 = vmatprep.subr.mxu0 0.0
    %3251 = vmatpush1.msra.mxu0 0.0
    %3252 = vmatprep.subr.mxu0 0.0
    %3253 = vmatpush1.msra.mxu0 0.0
    %3254 = vmatprep.subr.mxu0 0.0
    %3255 = vmatpush1.msra.mxu0 0.0
    %3256 = vmatprep.subr.mxu0 0.0
    %3257 = vmatpush1.msra.mxu0 0.0
    %3258 = vmatprep.subr.mxu0 0.0
    %3259 = vmatpush1.msra.mxu0 0.0
    %3260 = vmatprep.subr.mxu0 0.0
    %3261 = vmatpush1.msra.mxu0 0.0
    %3262 = vmatprep.subr.mxu0 0.0
    %3263 = vmatpush1.msra.mxu0 0.0
    %3264 = vmatprep.mubr.f32.mxu0 0.0
    %3265 = vmatmul.mubr.f32.gmra.mrb[0].mxu0 %v2984
    %v3266 = vpop.f32.mrb[0].mxu0
    %v3267 = vadd.f32 %v3125, %v3266
    %v3268 = vpop.f32.mrb[0].mxu0
    %v3269 = vadd.f32 %v3127, %v3268
    %3270 = vdwg.mxu0
    %v3271 = vadd.f32 %v3196, %v2029
    %v3272 = vadd.f32 %v3198, %v2033
    %v3273 = vadd.f32 %v3267, %v2037
    %v3274 = vadd.f32 %v3269, %v2041
    %v3275 = vxor.u32 %v3271, 2147483648
    %v3276 = vmul.f32 %v3275, 1.442695
    %v3277 = vpow.pop %v3276
    %v3278 = vadd.f32 %v3277, 1.0
    %v3279 = vrcp.pop %v3278
    %v3280 = vmul.f32 1.0, %v3279
    %v3281 = vxor.u32 %v3272, 2147483648
    %v3282 = vmul.f32 %v3281, 1.442695
    %v3283 = vpow.pop %v3282
    %v3284 = vadd.f32 %v3283, 1.0
    %v3285 = vrcp.pop %v3284
    %v3286 = vmul.f32 1.0, %v3285
    %v3287 = vtanh.pop %v3273
    %v3288 = vxor.u32 %v3274, 2147483648
    %v3289 = vmul.f32 %v3288, 1.442695
    %v3290 = vpow.pop %v3289
    %v3291 = vadd.f32 %v3290, 1.0
    %v3292 = vrcp.pop %v3291
    %v3293 = vmul.f32 1.0, %v3292
    %v3294 = vmul.f32 %v3286, %v2982
    %v3295 = vmul.f32 %v3280, %v3287
    %v3296 = vadd.f32 %v3294, %v3295
    %v3297 = vtanh.pop %v3296
    %v3298 = vmul.f32 %v3293, %v3297
    %s3299 = scalar_lea.vmem [#allocation3], 24
    %3300 = vst [vmem:[%s3299] sm:$0xff] %v3298
    %3301 = vmatprep.subr.mxu0 %v217
    %3302 = vmatpush1.msra.mxu0 %v216
    %3303 = vmatprep.subr.mxu0 %v221
    %3304 = vmatpush1.msra.mxu0 %v220
    %3305 = vmatprep.subr.mxu0 %v225
    %3306 = vmatpush1.msra.mxu0 %v224
    %3307 = vmatprep.subr.mxu0 %v229
    %3308 = vmatpush1.msra.mxu0 %v228
    %3309 = vmatprep.subr.mxu0 %v233
    %3310 = vmatpush1.msra.mxu0 %v232
    %3311 = vmatprep.subr.mxu0 %v237
    %3312 = vmatpush1.msra.mxu0 %v236
    %3313 = vmatprep.subr.mxu0 %v241
    %3314 = vmatpush1.msra.mxu0 %v240
    %3315 = vmatprep.subr.mxu0 %v245
    %3316 = vmatpush1.msra.mxu0 %v244
    %3317 = vmatprep.subr.mxu0 %v249
    %3318 = vmatpush1.msra.mxu0 %v248
    %3319 = vmatprep.subr.mxu0 %v253
    %3320 = vmatpush1.msra.mxu0 %v252
    %3321 = vmatprep.subr.mxu0 %v257
    %3322 = vmatpush1.msra.mxu0 %v256
    %3323 = vmatprep.subr.mxu0 %v261
    %3324 = vmatpush1.msra.mxu0 %v260
    %3325 = vmatprep.subr.mxu0 %v265
    %3326 = vmatpush1.msra.mxu0 %v264
    %3327 = vmatprep.subr.mxu0 %v269
    %3328 = vmatpush1.msra.mxu0 %v268
    %3329 = vmatprep.subr.mxu0 %v273
    %3330 = vmatpush1.msra.mxu0 %v272
    %3331 = vmatprep.subr.mxu0 %v277
    %3332 = vmatpush1.msra.mxu0 %v276
    %3333 = vmatprep.subr.mxu0 0.0
    %3334 = vmatpush1.msra.mxu0 0.0
    %3335 = vmatprep.subr.mxu0 0.0
    %3336 = vmatpush1.msra.mxu0 0.0
    %3337 = vmatprep.subr.mxu0 0.0
    %3338 = vmatpush1.msra.mxu0 0.0
    %3339 = vmatprep.subr.mxu0 0.0
    %3340 = vmatpush1.msra.mxu0 0.0
    %3341 = vmatprep.subr.mxu0 0.0
    %3342 = vmatpush1.msra.mxu0 0.0
    %3343 = vmatprep.subr.mxu0 0.0
    %3344 = vmatpush1.msra.mxu0 0.0
    %3345 = vmatprep.subr.mxu0 0.0
    %3346 = vmatpush1.msra.mxu0 0.0
    %3347 = vmatprep.subr.mxu0 0.0
    %3348 = vmatpush1.msra.mxu0 0.0
    %3349 = vmatprep.subr.mxu0 0.0
    %3350 = vmatpush1.msra.mxu0 0.0
    %3351 = vmatprep.subr.mxu0 0.0
    %3352 = vmatpush1.msra.mxu0 0.0
    %3353 = vmatprep.subr.mxu0 0.0
    %3354 = vmatpush1.msra.mxu0 0.0
    %3355 = vmatprep.subr.mxu0 0.0
    %3356 = vmatpush1.msra.mxu0 0.0
    %3357 = vmatprep.subr.mxu0 0.0
    %3358 = vmatpush1.msra.mxu0 0.0
    %3359 = vmatprep.subr.mxu0 0.0
    %3360 = vmatpush1.msra.mxu0 0.0
    %3361 = vmatprep.subr.mxu0 0.0
    %3362 = vmatpush1.msra.mxu0 0.0
    %3363 = vmatprep.subr.mxu0 0.0
    %3364 = vmatpush1.msra.mxu0 0.0
    %3365 = vmatprep.mubr.f32.mxu0 0.0
    %3366 = vmatmul.mubr.f32.gmra.mrb[0].mxu0 %v3298
    %v3367 = vpop.f32.mrb[0].mxu0
    %v3368 = vadd.f32 0.0, %v3367
    %v3369 = vpop.f32.mrb[0].mxu0
    %v3370 = vadd.f32 0.0, %v3369
    %3371 = vdwg.mxu0
    %3372 = vmatprep.subr.mxu0 %v219
    %3373 = vmatpush1.msra.mxu0 %v218
    %3374 = vmatprep.subr.mxu0 %v223
    %3375 = vmatpush1.msra.mxu0 %v222
    %3376 = vmatprep.subr.mxu0 %v227
    %3377 = vmatpush1.msra.mxu0 %v226
    %3378 = vmatprep.subr.mxu0 %v231
    %3379 = vmatpush1.msra.mxu0 %v230
    %3380 = vmatprep.subr.mxu0 %v235
    %3381 = vmatpush1.msra.mxu0 %v234
    %3382 = vmatprep.subr.mxu0 %v239
    %3383 = vmatpush1.msra.mxu0 %v238
    %3384 = vmatprep.subr.mxu0 %v243
    %3385 = vmatpush1.msra.mxu0 %v242
    %3386 = vmatprep.subr.mxu0 %v247
    %3387 = vmatpush1.msra.mxu0 %v246
    %3388 = vmatprep.subr.mxu0 %v251
    %3389 = vmatpush1.msra.mxu0 %v250
    %3390 = vmatprep.subr.mxu0 %v255
    %3391 = vmatpush1.msra.mxu0 %v254
    %3392 = vmatprep.subr.mxu0 %v259
    %3393 = vmatpush1.msra.mxu0 %v258
    %3394 = vmatprep.subr.mxu0 %v263
    %3395 = vmatpush1.msra.mxu0 %v262
    %3396 = vmatprep.subr.mxu0 %v267
    %3397 = vmatpush1.msra.mxu0 %v266
    %3398 = vmatprep.subr.mxu0 %v271
    %3399 = vmatpush1.msra.mxu0 %v270
    %3400 = vmatprep.subr.mxu0 %v275
    %3401 = vmatpush1.msra.mxu0 %v274
    %3402 = vmatprep.subr.mxu0 %v279
    %3403 = vmatpush1.msra.mxu0 %v278
    %3404 = vmatprep.subr.mxu0 0.0
    %3405 = vmatpush1.msra.mxu0 0.0
    %3406 = vmatprep.subr.mxu0 0.0
    %3407 = vmatpush1.msra.mxu0 0.0
    %3408 = vmatprep.subr.mxu0 0.0
    %3409 = vmatpush1.msra.mxu0 0.0
    %3410 = vmatprep.subr.mxu0 0.0
    %3411 = vmatpush1.msra.mxu0 0.0
    %3412 = vmatprep.subr.mxu0 0.0
    %3413 = vmatpush1.msra.mxu0 0.0
    %3414 = vmatprep.subr.mxu0 0.0
    %3415 = vmatpush1.msra.mxu0 0.0
    %3416 = vmatprep.subr.mxu0 0.0
    %3417 = vmatpush1.msra.mxu0 0.0
    %3418 = vmatprep.subr.mxu0 0.0
    %3419 = vmatpush1.msra.mxu0 0.0
    %3420 = vmatprep.subr.mxu0 0.0
    %3421 = vmatpush1.msra.mxu0 0.0
    %3422 = vmatprep.subr.mxu0 0.0
    %3423 = vmatpush1.msra.mxu0 0.0
    %3424 = vmatprep.subr.mxu0 0.0
    %3425 = vmatpush1.msra.mxu0 0.0
    %3426 = vmatprep.subr.mxu0 0.0
    %3427 = vmatpush1.msra.mxu0 0.0
    %3428 = vmatprep.subr.mxu0 0.0
    %3429 = vmatpush1.msra.mxu0 0.0
    %3430 = vmatprep.subr.mxu0 0.0
    %3431 = vmatpush1.msra.mxu0 0.0
    %3432 = vmatprep.subr.mxu0 0.0
    %3433 = vmatpush1.msra.mxu0 0.0
    %3434 = vmatprep.subr.mxu0 0.0
    %3435 = vmatpush1.msra.mxu0 0.0
    %3436 = vmatprep.mubr.f32.mxu0 0.0
    %3437 = vmatmul.mubr.f32.gmra.mrb[0].mxu0 %v3298
    %v3438 = vpop.f32.mrb[0].mxu0
    %v3439 = vadd.f32 0.0, %v3438
    %v3440 = vpop.f32.mrb[0].mxu0
    %v3441 = vadd.f32 0.0, %v3440
    %3442 = vdwg.mxu0
    %3443 = vmatprep.subr.mxu0 %v153
    %3444 = vmatpush1.msra.mxu0 %v152
    %3445 = vmatprep.subr.mxu0 %v157
    %3446 = vmatpush1.msra.mxu0 %v156
    %3447 = vmatprep.subr.mxu0 %v161
    %3448 = vmatpush1.msra.mxu0 %v160
    %3449 = vmatprep.subr.mxu0 %v165
    %3450 = vmatpush1.msra.mxu0 %v164
    %3451 = vmatprep.subr.mxu0 %v169
    %3452 = vmatpush1.msra.mxu0 %v168
    %3453 = vmatprep.subr.mxu0 %v173
    %3454 = vmatpush1.msra.mxu0 %v172
    %3455 = vmatprep.subr.mxu0 %v177
    %3456 = vmatpush1.msra.mxu0 %v176
    %3457 = vmatprep.subr.mxu0 %v181
    %3458 = vmatpush1.msra.mxu0 %v180
    %3459 = vmatprep.subr.mxu0 %v185
    %3460 = vmatpush1.msra.mxu0 %v184
    %3461 = vmatprep.subr.mxu0 %v189
    %3462 = vmatpush1.msra.mxu0 %v188
    %3463 = vmatprep.subr.mxu0 %v193
    %3464 = vmatpush1.msra.mxu0 %v192
    %3465 = vmatprep.subr.mxu0 %v197
    %3466 = vmatpush1.msra.mxu0 %v196
    %3467 = vmatprep.subr.mxu0 %v201
    %3468 = vmatpush1.msra.mxu0 %v200
    %3469 = vmatprep.subr.mxu0 %v205
    %3470 = vmatpush1.msra.mxu0 %v204
    %3471 = vmatprep.subr.mxu0 %v209
    %3472 = vmatpush1.msra.mxu0 %v208
    %3473 = vmatprep.subr.mxu0 %v213
    %3474 = vmatpush1.msra.mxu0 %v212
    %3475 = vmatprep.subr.mxu0 0.0
    %3476 = vmatpush1.msra.mxu0 0.0
    %3477 = vmatprep.subr.mxu0 0.0
    %3478 = vmatpush1.msra.mxu0 0.0
    %3479 = vmatprep.subr.mxu0 0.0
    %3480 = vmatpush1.msra.mxu0 0.0
    %3481 = vmatprep.subr.mxu0 0.0
    %3482 = vmatpush1.msra.mxu0 0.0
    %3483 = vmatprep.subr.mxu0 0.0
    %3484 = vmatpush1.msra.mxu0 0.0
    %3485 = vmatprep.subr.mxu0 0.0
    %3486 = vmatpush1.msra.mxu0 0.0
    %3487 = vmatprep.subr.mxu0 0.0
    %3488 = vmatpush1.msra.mxu0 0.0
    %3489 = vmatprep.subr.mxu0 0.0
    %3490 = vmatpush1.msra.mxu0 0.0
    %3491 = vmatprep.subr.mxu0 0.0
    %3492 = vmatpush1.msra.mxu0 0.0
    %3493 = vmatprep.subr.mxu0 0.0
    %3494 = vmatpush1.msra.mxu0 0.0
    %3495 = vmatprep.subr.mxu0 0.0
    %3496 = vmatpush1.msra.mxu0 0.0
    %3497 = vmatprep.subr.mxu0 0.0
    %3498 = vmatpush1.msra.mxu0 0.0
    %3499 = vmatprep.subr.mxu0 0.0
    %3500 = vmatpush1.msra.mxu0 0.0
    %3501 = vmatprep.subr.mxu0 0.0
    %3502 = vmatpush1.msra.mxu0 0.0
    %3503 = vmatprep.subr.mxu0 0.0
    %3504 = vmatpush1.msra.mxu0 0.0
    %3505 = vmatprep.subr.mxu0 0.0
    %3506 = vmatpush1.msra.mxu0 0.0
    %3507 = vmatprep.mubr.f32.mxu0 0.0
    %3508 = vmatmul.mubr.f32.gmra.mrb[0].mxu0 %v3298
    %v3509 = vpop.f32.mrb[0].mxu0
    %v3510 = vadd.f32 %v3368, %v3509
    %v3511 = vpop.f32.mrb[0].mxu0
    %v3512 = vadd.f32 %v3370, %v3511
    %3513 = vdwg.mxu0
    %3514 = vmatprep.subr.mxu0 %v155
    %3515 = vmatpush1.msra.mxu0 %v154
    %3516 = vmatprep.subr.mxu0 %v159
    %3517 = vmatpush1.msra.mxu0 %v158
    %3518 = vmatprep.subr.mxu0 %v163
    %3519 = vmatpush1.msra.mxu0 %v162
    %3520 = vmatprep.subr.mxu0 %v167
    %3521 = vmatpush1.msra.mxu0 %v166
    %3522 = vmatprep.subr.mxu0 %v171
    %3523 = vmatpush1.msra.mxu0 %v170
    %3524 = vmatprep.subr.mxu0 %v175
    %3525 = vmatpush1.msra.mxu0 %v174
    %3526 = vmatprep.subr.mxu0 %v179
    %3527 = vmatpush1.msra.mxu0 %v178
    %3528 = vmatprep.subr.mxu0 %v183
    %3529 = vmatpush1.msra.mxu0 %v182
    %3530 = vmatprep.subr.mxu0 %v187
    %3531 = vmatpush1.msra.mxu0 %v186
    %3532 = vmatprep.subr.mxu0 %v191
    %3533 = vmatpush1.msra.mxu0 %v190
    %3534 = vmatprep.subr.mxu0 %v195
    %3535 = vmatpush1.msra.mxu0 %v194
    %3536 = vmatprep.subr.mxu0 %v199
    %3537 = vmatpush1.msra.mxu0 %v198
    %3538 = vmatprep.subr.mxu0 %v203
    %3539 = vmatpush1.msra.mxu0 %v202
    %3540 = vmatprep.subr.mxu0 %v207
    %3541 = vmatpush1.msra.mxu0 %v206
    %3542 = vmatprep.subr.mxu0 %v211
    %3543 = vmatpush1.msra.mxu0 %v210
    %3544 = vmatprep.subr.mxu0 %v215
    %3545 = vmatpush1.msra.mxu0 %v214
    %3546 = vmatprep.subr.mxu0 0.0
    %3547 = vmatpush1.msra.mxu0 0.0
    %3548 = vmatprep.subr.mxu0 0.0
    %3549 = vmatpush1.msra.mxu0 0.0
    %3550 = vmatprep.subr.mxu0 0.0
    %3551 = vmatpush1.msra.mxu0 0.0
    %3552 = vmatprep.subr.mxu0 0.0
    %3553 = vmatpush1.msra.mxu0 0.0
    %3554 = vmatprep.subr.mxu0 0.0
    %3555 = vmatpush1.msra.mxu0 0.0
    %3556 = vmatprep.subr.mxu0 0.0
    %3557 = vmatpush1.msra.mxu0 0.0
    %3558 = vmatprep.subr.mxu0 0.0
    %3559 = vmatpush1.msra.mxu0 0.0
    %3560 = vmatprep.subr.mxu0 0.0
    %3561 = vmatpush1.msra.mxu0 0.0
    %3562 = vmatprep.subr.mxu0 0.0
    %3563 = vmatpush1.msra.mxu0 0.0
    %3564 = vmatprep.subr.mxu0 0.0
    %3565 = vmatpush1.msra.mxu0 0.0
    %3566 = vmatprep.subr.mxu0 0.0
    %3567 = vmatpush1.msra.mxu0 0.0
    %3568 = vmatprep.subr.mxu0 0.0
    %3569 = vmatpush1.msra.mxu0 0.0
    %3570 = vmatprep.subr.mxu0 0.0
    %3571 = vmatpush1.msra.mxu0 0.0
    %3572 = vmatprep.subr.mxu0 0.0
    %3573 = vmatpush1.msra.mxu0 0.0
    %3574 = vmatprep.subr.mxu0 0.0
    %3575 = vmatpush1.msra.mxu0 0.0
    %3576 = vmatprep.subr.mxu0 0.0
    %3577 = vmatpush1.msra.mxu0 0.0
    %3578 = vmatprep.mubr.f32.mxu0 0.0
    %3579 = vmatmul.mubr.f32.gmra.mrb[0].mxu0 %v3298
    %v3580 = vpop.f32.mrb[0].mxu0
    %v3581 = vadd.f32 %v3439, %v3580
    %v3582 = vpop.f32.mrb[0].mxu0
    %v3583 = vadd.f32 %v3441, %v3582
    %3584 = vdwg.mxu0
    %v3585 = vadd.f32 %v3510, %v2029
    %v3586 = vadd.f32 %v3512, %v2033
    %v3587 = vadd.f32 %v3581, %v2037
    %v3588 = vadd.f32 %v3583, %v2041
    %v3589 = vxor.u32 %v3585, 2147483648
    %v3590 = vmul.f32 %v3589, 1.442695
    %v3591 = vpow.pop %v3590
    %v3592 = vadd.f32 %v3591, 1.0
    %v3593 = vrcp.pop %v3592
    %v3594 = vmul.f32 1.0, %v3593
    %v3595 = vxor.u32 %v3586, 2147483648
    %v3596 = vmul.f32 %v3595, 1.442695
    %v3597 = vpow.pop %v3596
    %v3598 = vadd.f32 %v3597, 1.0
    %v3599 = vrcp.pop %v3598
    %v3600 = vmul.f32 1.0, %v3599
    %v3601 = vtanh.pop %v3587
    %v3602 = vxor.u32 %v3588, 2147483648
    %v3603 = vmul.f32 %v3602, 1.442695
    %v3604 = vpow.pop %v3603
    %v3605 = vadd.f32 %v3604, 1.0
    %v3606 = vrcp.pop %v3605
    %v3607 = vmul.f32 1.0, %v3606
    %v3608 = vmul.f32 %v3600, %v3296
    %v3609 = vmul.f32 %v3594, %v3601
    %v3610 = vadd.f32 %v3608, %v3609
    %v3611 = vtanh.pop %v3610
    %v3612 = vmul.f32 %v3607, %v3611
    %s3613 = scalar_lea.vmem [#allocation3], 32
    %3614 = vst [vmem:[%s3613] sm:$0xff] %v3612
    %3615 = vmatprep.subr.mxu0 %v217
    %3616 = vmatpush1.msra.mxu0 %v216
    %3617 = vmatprep.subr.mxu0 %v221
    %3618 = vmatpush1.msra.mxu0 %v220
    %3619 = vmatprep.subr.mxu0 %v225
    %3620 = vmatpush1.msra.mxu0 %v224
    %3621 = vmatprep.subr.mxu0 %v229
    %3622 = vmatpush1.msra.mxu0 %v228
    %3623 = vmatprep.subr.mxu0 %v233
    %3624 = vmatpush1.msra.mxu0 %v232
    %3625 = vmatprep.subr.mxu0 %v237
    %3626 = vmatpush1.msra.mxu0 %v236
    %3627 = vmatprep.subr.mxu0 %v241
    %3628 = vmatpush1.msra.mxu0 %v240
    %3629 = vmatprep.subr.mxu0 %v245
    %3630 = vmatpush1.msra.mxu0 %v244
    %3631 = vmatprep.subr.mxu0 %v249
    %3632 = vmatpush1.msra.mxu0 %v248
    %3633 = vmatprep.subr.mxu0 %v253
    %3634 = vmatpush1.msra.mxu0 %v252
    %3635 = vmatprep.subr.mxu0 %v257
    %3636 = vmatpush1.msra.mxu0 %v256
    %3637 = vmatprep.subr.mxu0 %v261
    %3638 = vmatpush1.msra.mxu0 %v260
    %3639 = vmatprep.subr.mxu0 %v265
    %3640 = vmatpush1.msra.mxu0 %v264
    %3641 = vmatprep.subr.mxu0 %v269
    %3642 = vmatpush1.msra.mxu0 %v268
    %3643 = vmatprep.subr.mxu0 %v273
    %3644 = vmatpush1.msra.mxu0 %v272
    %3645 = vmatprep.subr.mxu0 %v277
    %3646 = vmatpush1.msra.mxu0 %v276
    %3647 = vmatprep.subr.mxu0 0.0
    %3648 = vmatpush1.msra.mxu0 0.0
    %3649 = vmatprep.subr.mxu0 0.0
    %3650 = vmatpush1.msra.mxu0 0.0
    %3651 = vmatprep.subr.mxu0 0.0
    %3652 = vmatpush1.msra.mxu0 0.0
    %3653 = vmatprep.subr.mxu0 0.0
    %3654 = vmatpush1.msra.mxu0 0.0
    %3655 = vmatprep.subr.mxu0 0.0
    %3656 = vmatpush1.msra.mxu0 0.0
    %3657 = vmatprep.subr.mxu0 0.0
    %3658 = vmatpush1.msra.mxu0 0.0
    %3659 = vmatprep.subr.mxu0 0.0
    %3660 = vmatpush1.msra.mxu0 0.0
    %3661 = vmatprep.subr.mxu0 0.0
    %3662 = vmatpush1.msra.mxu0 0.0
    %3663 = vmatprep.subr.mxu0 0.0
    %3664 = vmatpush1.msra.mxu0 0.0
    %3665 = vmatprep.subr.mxu0 0.0
    %3666 = vmatpush1.msra.mxu0 0.0
    %3667 = vmatprep.subr.mxu0 0.0
    %3668 = vmatpush1.msra.mxu0 0.0
    %3669 = vmatprep.subr.mxu0 0.0
    %3670 = vmatpush1.msra.mxu0 0.0
    %3671 = vmatprep.subr.mxu0 0.0
    %3672 = vmatpush1.msra.mxu0 0.0
    %3673 = vmatprep.subr.mxu0 0.0
    %3674 = vmatpush1.msra.mxu0 0.0
    %3675 = vmatprep.subr.mxu0 0.0
    %3676 = vmatpush1.msra.mxu0 0.0
    %3677 = vmatprep.subr.mxu0 0.0
    %3678 = vmatpush1.msra.mxu0 0.0
    %3679 = vmatprep.mubr.f32.mxu0 0.0
    %3680 = vmatmul.mubr.f32.gmra.mrb[0].mxu0 %v3612
    %v3681 = vpop.f32.mrb[0].mxu0
    %v3682 = vadd.f32 0.0, %v3681
    %v3683 = vpop.f32.mrb[0].mxu0
    %v3684 = vadd.f32 0.0, %v3683
    %3685 = vdwg.mxu0
    %3686 = vmatprep.subr.mxu0 %v219
    %3687 = vmatpush1.msra.mxu0 %v218
    %3688 = vmatprep.subr.mxu0 %v223
    %3689 = vmatpush1.msra.mxu0 %v222
    %3690 = vmatprep.subr.mxu0 %v227
    %3691 = vmatpush1.msra.mxu0 %v226
    %3692 = vmatprep.subr.mxu0 %v231
    %3693 = vmatpush1.msra.mxu0 %v230
    %3694 = vmatprep.subr.mxu0 %v235
    %3695 = vmatpush1.msra.mxu0 %v234
    %3696 = vmatprep.subr.mxu0 %v239
    %3697 = vmatpush1.msra.mxu0 %v238
    %3698 = vmatprep.subr.mxu0 %v243
    %3699 = vmatpush1.msra.mxu0 %v242
    %3700 = vmatprep.subr.mxu0 %v247
    %3701 = vmatpush1.msra.mxu0 %v246
    %3702 = vmatprep.subr.mxu0 %v251
    %3703 = vmatpush1.msra.mxu0 %v250
    %3704 = vmatprep.subr.mxu0 %v255
    %3705 = vmatpush1.msra.mxu0 %v254
    %3706 = vmatprep.subr.mxu0 %v259
    %3707 = vmatpush1.msra.mxu0 %v258
    %3708 = vmatprep.subr.mxu0 %v263
    %3709 = vmatpush1.msra.mxu0 %v262
    %3710 = vmatprep.subr.mxu0 %v267
    %3711 = vmatpush1.msra.mxu0 %v266
    %3712 = vmatprep.subr.mxu0 %v271
    %3713 = vmatpush1.msra.mxu0 %v270
    %3714 = vmatprep.subr.mxu0 %v275
    %3715 = vmatpush1.msra.mxu0 %v274
    %3716 = vmatprep.subr.mxu0 %v279
    %3717 = vmatpush1.msra.mxu0 %v278
    %3718 = vmatprep.subr.mxu0 0.0
    %3719 = vmatpush1.msra.mxu0 0.0
    %3720 = vmatprep.subr.mxu0 0.0
    %3721 = vmatpush1.msra.mxu0 0.0
    %3722 = vmatprep.subr.mxu0 0.0
    %3723 = vmatpush1.msra.mxu0 0.0
    %3724 = vmatprep.subr.mxu0 0.0
    %3725 = vmatpush1.msra.mxu0 0.0
    %3726 = vmatprep.subr.mxu0 0.0
    %3727 = vmatpush1.msra.mxu0 0.0
    %3728 = vmatprep.subr.mxu0 0.0
    %3729 = vmatpush1.msra.mxu0 0.0
    %3730 = vmatprep.subr.mxu0 0.0
    %3731 = vmatpush1.msra.mxu0 0.0
    %3732 = vmatprep.subr.mxu0 0.0
    %3733 = vmatpush1.msra.mxu0 0.0
    %3734 = vmatprep.subr.mxu0 0.0
    %3735 = vmatpush1.msra.mxu0 0.0
    %3736 = vmatprep.subr.mxu0 0.0
    %3737 = vmatpush1.msra.mxu0 0.0
    %3738 = vmatprep.subr.mxu0 0.0
    %3739 = vmatpush1.msra.mxu0 0.0
    %3740 = vmatprep.subr.mxu0 0.0
    %3741 = vmatpush1.msra.mxu0 0.0
    %3742 = vmatprep.subr.mxu0 0.0
    %3743 = vmatpush1.msra.mxu0 0.0
    %3744 = vmatprep.subr.mxu0 0.0
    %3745 = vmatpush1.msra.mxu0 0.0
    %3746 = vmatprep.subr.mxu0 0.0
    %3747 = vmatpush1.msra.mxu0 0.0
    %3748 = vmatprep.subr.mxu0 0.0
    %3749 = vmatpush1.msra.mxu0 0.0
    %3750 = vmatprep.mubr.f32.mxu0 0.0
    %3751 = vmatmul.mubr.f32.gmra.mrb[0].mxu0 %v3612
    %v3752 = vpop.f32.mrb[0].mxu0
    %v3753 = vadd.f32 0.0, %v3752
    %v3754 = vpop.f32.mrb[0].mxu0
    %v3755 = vadd.f32 0.0, %v3754
    %3756 = vdwg.mxu0
    %3757 = vmatprep.subr.mxu0 %v153
    %3758 = vmatpush1.msra.mxu0 %v152
    %3759 = vmatprep.subr.mxu0 %v157
    %3760 = vmatpush1.msra.mxu0 %v156
    %3761 = vmatprep.subr.mxu0 %v161
    %3762 = vmatpush1.msra.mxu0 %v160
    %3763 = vmatprep.subr.mxu0 %v165
    %3764 = vmatpush1.msra.mxu0 %v164
    %3765 = vmatprep.subr.mxu0 %v169
    %3766 = vmatpush1.msra.mxu0 %v168
    %3767 = vmatprep.subr.mxu0 %v173
    %3768 = vmatpush1.msra.mxu0 %v172
    %3769 = vmatprep.subr.mxu0 %v177
    %3770 = vmatpush1.msra.mxu0 %v176
    %3771 = vmatprep.subr.mxu0 %v181
    %3772 = vmatpush1.msra.mxu0 %v180
    %3773 = vmatprep.subr.mxu0 %v185
    %3774 = vmatpush1.msra.mxu0 %v184
    %3775 = vmatprep.subr.mxu0 %v189
    %3776 = vmatpush1.msra.mxu0 %v188
    %3777 = vmatprep.subr.mxu0 %v193
    %3778 = vmatpush1.msra.mxu0 %v192
    %3779 = vmatprep.subr.mxu0 %v197
    %3780 = vmatpush1.msra.mxu0 %v196
    %3781 = vmatprep.subr.mxu0 %v201
    %3782 = vmatpush1.msra.mxu0 %v200
    %3783 = vmatprep.subr.mxu0 %v205
    %3784 = vmatpush1.msra.mxu0 %v204
    %3785 = vmatprep.subr.mxu0 %v209
    %3786 = vmatpush1.msra.mxu0 %v208
    %3787 = vmatprep.subr.mxu0 %v213
    %3788 = vmatpush1.msra.mxu0 %v212
    %3789 = vmatprep.subr.mxu0 0.0
    %3790 = vmatpush1.msra.mxu0 0.0
    %3791 = vmatprep.subr.mxu0 0.0
    %3792 = vmatpush1.msra.mxu0 0.0
    %3793 = vmatprep.subr.mxu0 0.0
    %3794 = vmatpush1.msra.mxu0 0.0
    %3795 = vmatprep.subr.mxu0 0.0
    %3796 = vmatpush1.msra.mxu0 0.0
    %3797 = vmatprep.subr.mxu0 0.0
    %3798 = vmatpush1.msra.mxu0 0.0
    %3799 = vmatprep.subr.mxu0 0.0
    %3800 = vmatpush1.msra.mxu0 0.0
    %3801 = vmatprep.subr.mxu0 0.0
    %3802 = vmatpush1.msra.mxu0 0.0
    %3803 = vmatprep.subr.mxu0 0.0
    %3804 = vmatpush1.msra.mxu0 0.0
    %3805 = vmatprep.subr.mxu0 0.0
    %3806 = vmatpush1.msra.mxu0 0.0
    %3807 = vmatprep.subr.mxu0 0.0
    %3808 = vmatpush1.msra.mxu0 0.0
    %3809 = vmatprep.subr.mxu0 0.0
    %3810 = vmatpush1.msra.mxu0 0.0
    %3811 = vmatprep.subr.mxu0 0.0
    %3812 = vmatpush1.msra.mxu0 0.0
    %3813 = vmatprep.subr.mxu0 0.0
    %3814 = vmatpush1.msra.mxu0 0.0
    %3815 = vmatprep.subr.mxu0 0.0
    %3816 = vmatpush1.msra.mxu0 0.0
    %3817 = vmatprep.subr.mxu0 0.0
    %3818 = vmatpush1.msra.mxu0 0.0
    %3819 = vmatprep.subr.mxu0 0.0
    %3820 = vmatpush1.msra.mxu0 0.0
    %3821 = vmatprep.mubr.f32.mxu0 0.0
    %3822 = vmatmul.mubr.f32.gmra.mrb[0].mxu0 %v3612
    %v3823 = vpop.f32.mrb[0].mxu0
    %v3824 = vadd.f32 %v3682, %v3823
    %v3825 = vpop.f32.mrb[0].mxu0
    %v3826 = vadd.f32 %v3684, %v3825
    %3827 = vdwg.mxu0
    %3828 = vmatprep.subr.mxu0 %v155
    %3829 = vmatpush1.msra.mxu0 %v154
    %3830 = vmatprep.subr.mxu0 %v159
    %3831 = vmatpush1.msra.mxu0 %v158
    %3832 = vmatprep.subr.mxu0 %v163
    %3833 = vmatpush1.msra.mxu0 %v162
    %3834 = vmatprep.subr.mxu0 %v167
    %3835 = vmatpush1.msra.mxu0 %v166
    %3836 = vmatprep.subr.mxu0 %v171
    %3837 = vmatpush1.msra.mxu0 %v170
    %3838 = vmatprep.subr.mxu0 %v175
    %3839 = vmatpush1.msra.mxu0 %v174
    %3840 = vmatprep.subr.mxu0 %v179
    %3841 = vmatpush1.msra.mxu0 %v178
    %3842 = vmatprep.subr.mxu0 %v183
    %3843 = vmatpush1.msra.mxu0 %v182
    %3844 = vmatprep.subr.mxu0 %v187
    %3845 = vmatpush1.msra.mxu0 %v186
    %3846 = vmatprep.subr.mxu0 %v191
    %3847 = vmatpush1.msra.mxu0 %v190
    %3848 = vmatprep.subr.mxu0 %v195
    %3849 = vmatpush1.msra.mxu0 %v194
    %3850 = vmatprep.subr.mxu0 %v199
    %3851 = vmatpush1.msra.mxu0 %v198
    %3852 = vmatprep.subr.mxu0 %v203
    %3853 = vmatpush1.msra.mxu0 %v202
    %3854 = vmatprep.subr.mxu0 %v207
    %3855 = vmatpush1.msra.mxu0 %v206
    %3856 = vmatprep.subr.mxu0 %v211
    %3857 = vmatpush1.msra.mxu0 %v210
    %3858 = vmatprep.subr.mxu0 %v215
    %3859 = vmatpush1.msra.mxu0 %v214
    %3860 = vmatprep.subr.mxu0 0.0
    %3861 = vmatpush1.msra.mxu0 0.0
    %3862 = vmatprep.subr.mxu0 0.0
    %3863 = vmatpush1.msra.mxu0 0.0
    %3864 = vmatprep.subr.mxu0 0.0
    %3865 = vmatpush1.msra.mxu0 0.0
    %3866 = vmatprep.subr.mxu0 0.0
    %3867 = vmatpush1.msra.mxu0 0.0
    %3868 = vmatprep.subr.mxu0 0.0
    %3869 = vmatpush1.msra.mxu0 0.0
    %3870 = vmatprep.subr.mxu0 0.0
    %3871 = vmatpush1.msra.mxu0 0.0
    %3872 = vmatprep.subr.mxu0 0.0
    %3873 = vmatpush1.msra.mxu0 0.0
    %3874 = vmatprep.subr.mxu0 0.0
    %3875 = vmatpush1.msra.mxu0 0.0
    %3876 = vmatprep.subr.mxu0 0.0
    %3877 = vmatpush1.msra.mxu0 0.0
    %3878 = vmatprep.subr.mxu0 0.0
    %3879 = vmatpush1.msra.mxu0 0.0
    %3880 = vmatprep.subr.mxu0 0.0
    %3881 = vmatpush1.msra.mxu0 0.0
    %3882 = vmatprep.subr.mxu0 0.0
    %3883 = vmatpush1.msra.mxu0 0.0
    %3884 = vmatprep.subr.mxu0 0.0
    %3885 = vmatpush1.msra.mxu0 0.0
    %3886 = vmatprep.subr.mxu0 0.0
    %3887 = vmatpush1.msra.mxu0 0.0
    %3888 = vmatprep.subr.mxu0 0.0
    %3889 = vmatpush1.msra.mxu0 0.0
    %3890 = vmatprep.subr.mxu0 0.0
    %3891 = vmatpush1.msra.mxu0 0.0
    %3892 = vmatprep.mubr.f32.mxu0 0.0
    %3893 = vmatmul.mubr.f32.gmra.mrb[0].mxu0 %v3612
    %v3894 = vpop.f32.mrb[0].mxu0
    %v3895 = vadd.f32 %v3753, %v3894
    %v3896 = vpop.f32.mrb[0].mxu0
    %v3897 = vadd.f32 %v3755, %v3896
    %3898 = vdwg.mxu0
    %v3899 = vadd.f32 %v3824, %v2029
    %v3900 = vadd.f32 %v3826, %v2033
    %v3901 = vadd.f32 %v3895, %v2037
    %v3902 = vadd.f32 %v3897, %v2041
    %v3903 = vxor.u32 %v3899, 2147483648
    %v3904 = vmul.f32 %v3903, 1.442695
    %v3905 = vpow.pop %v3904
    %v3906 = vadd.f32 %v3905, 1.0
    %v3907 = vrcp.pop %v3906
    %v3908 = vmul.f32 1.0, %v3907
    %v3909 = vxor.u32 %v3900, 2147483648
    %v3910 = vmul.f32 %v3909, 1.442695
    %v3911 = vpow.pop %v3910
    %v3912 = vadd.f32 %v3911, 1.0
    %v3913 = vrcp.pop %v3912
    %v3914 = vmul.f32 1.0, %v3913
    %v3915 = vtanh.pop %v3901
    %v3916 = vxor.u32 %v3902, 2147483648
    %v3917 = vmul.f32 %v3916, 1.442695
    %v3918 = vpow.pop %v3917
    %v3919 = vadd.f32 %v3918, 1.0
    %v3920 = vrcp.pop %v3919
    %v3921 = vmul.f32 1.0, %v3920
    %v3922 = vmul.f32 %v3914, %v3610
    %v3923 = vmul.f32 %v3908, %v3915
    %v3924 = vadd.f32 %v3922, %v3923
    %v3925 = vtanh.pop %v3924
    %v3926 = vmul.f32 %v3921, %v3925
    %s3927 = scalar_lea.vmem [#allocation3], 40
    %3928 = vst [vmem:[%s3927] sm:$0xff] %v3926
    %3929 = vmatprep.subr.mxu0 %v217
    %3930 = vmatpush1.msra.mxu0 %v216
    %3931 = vmatprep.subr.mxu0 %v221
    %3932 = vmatpush1.msra.mxu0 %v220
    %3933 = vmatprep.subr.mxu0 %v225
    %3934 = vmatpush1.msra.mxu0 %v224
    %3935 = vmatprep.subr.mxu0 %v229
    %3936 = vmatpush1.msra.mxu0 %v228
    %3937 = vmatprep.subr.mxu0 %v233
    %3938 = vmatpush1.msra.mxu0 %v232
    %3939 = vmatprep.subr.mxu0 %v237
    %3940 = vmatpush1.msra.mxu0 %v236
    %3941 = vmatprep.subr.mxu0 %v241
    %3942 = vmatpush1.msra.mxu0 %v240
    %3943 = vmatprep.subr.mxu0 %v245
    %3944 = vmatpush1.msra.mxu0 %v244
    %3945 = vmatprep.subr.mxu0 %v249
    %3946 = vmatpush1.msra.mxu0 %v248
    %3947 = vmatprep.subr.mxu0 %v253
    %3948 = vmatpush1.msra.mxu0 %v252
    %3949 = vmatprep.subr.mxu0 %v257
    %3950 = vmatpush1.msra.mxu0 %v256
    %3951 = vmatprep.subr.mxu0 %v261
    %3952 = vmatpush1.msra.mxu0 %v260
    %3953 = vmatprep.subr.mxu0 %v265
    %3954 = vmatpush1.msra.mxu0 %v264
    %3955 = vmatprep.subr.mxu0 %v269
    %3956 = vmatpush1.msra.mxu0 %v268
    %3957 = vmatprep.subr.mxu0 %v273
    %3958 = vmatpush1.msra.mxu0 %v272
    %3959 = vmatprep.subr.mxu0 %v277
    %3960 = vmatpush1.msra.mxu0 %v276
    %3961 = vmatprep.subr.mxu0 0.0
    %3962 = vmatpush1.msra.mxu0 0.0
    %3963 = vmatprep.subr.mxu0 0.0
    %3964 = vmatpush1.msra.mxu0 0.0
    %3965 = vmatprep.subr.mxu0 0.0
    %3966 = vmatpush1.msra.mxu0 0.0
    %3967 = vmatprep.subr.mxu0 0.0
    %3968 = vmatpush1.msra.mxu0 0.0
    %3969 = vmatprep.subr.mxu0 0.0
    %3970 = vmatpush1.msra.mxu0 0.0
    %3971 = vmatprep.subr.mxu0 0.0
    %3972 = vmatpush1.msra.mxu0 0.0
    %3973 = vmatprep.subr.mxu0 0.0
    %3974 = vmatpush1.msra.mxu0 0.0
    %3975 = vmatprep.subr.mxu0 0.0
    %3976 = vmatpush1.msra.mxu0 0.0
    %3977 = vmatprep.subr.mxu0 0.0
    %3978 = vmatpush1.msra.mxu0 0.0
    %3979 = vmatprep.subr.mxu0 0.0
    %3980 = vmatpush1.msra.mxu0 0.0
    %3981 = vmatprep.subr.mxu0 0.0
    %3982 = vmatpush1.msra.mxu0 0.0
    %3983 = vmatprep.subr.mxu0 0.0
    %3984 = vmatpush1.msra.mxu0 0.0
    %3985 = vmatprep.subr.mxu0 0.0
    %3986 = vmatpush1.msra.mxu0 0.0
    %3987 = vmatprep.subr.mxu0 0.0
    %3988 = vmatpush1.msra.mxu0 0.0
    %3989 = vmatprep.subr.mxu0 0.0
    %3990 = vmatpush1.msra.mxu0 0.0
    %3991 = vmatprep.subr.mxu0 0.0
    %3992 = vmatpush1.msra.mxu0 0.0
    %3993 = vmatprep.mubr.f32.mxu0 0.0
    %3994 = vmatmul.mubr.f32.gmra.mrb[0].mxu0 %v3926
    %v3995 = vpop.f32.mrb[0].mxu0
    %v3996 = vadd.f32 0.0, %v3995
    %v3997 = vpop.f32.mrb[0].mxu0
    %v3998 = vadd.f32 0.0, %v3997
    %3999 = vdwg.mxu0
    %4000 = vmatprep.subr.mxu0 %v219
    %4001 = vmatpush1.msra.mxu0 %v218
    %4002 = vmatprep.subr.mxu0 %v223
    %4003 = vmatpush1.msra.mxu0 %v222
    %4004 = vmatprep.subr.mxu0 %v227
    %4005 = vmatpush1.msra.mxu0 %v226
    %4006 = vmatprep.subr.mxu0 %v231
    %4007 = vmatpush1.msra.mxu0 %v230
    %4008 = vmatprep.subr.mxu0 %v235
    %4009 = vmatpush1.msra.mxu0 %v234
    %4010 = vmatprep.subr.mxu0 %v239
    %4011 = vmatpush1.msra.mxu0 %v238
    %4012 = vmatprep.subr.mxu0 %v243
    %4013 = vmatpush1.msra.mxu0 %v242
    %4014 = vmatprep.subr.mxu0 %v247
    %4015 = vmatpush1.msra.mxu0 %v246
    %4016 = vmatprep.subr.mxu0 %v251
    %4017 = vmatpush1.msra.mxu0 %v250
    %4018 = vmatprep.subr.mxu0 %v255
    %4019 = vmatpush1.msra.mxu0 %v254
    %4020 = vmatprep.subr.mxu0 %v259
    %4021 = vmatpush1.msra.mxu0 %v258
    %4022 = vmatprep.subr.mxu0 %v263
    %4023 = vmatpush1.msra.mxu0 %v262
    %4024 = vmatprep.subr.mxu0 %v267
    %4025 = vmatpush1.msra.mxu0 %v266
    %4026 = vmatprep.subr.mxu0 %v271
    %4027 = vmatpush1.msra.mxu0 %v270
    %4028 = vmatprep.subr.mxu0 %v275
    %4029 = vmatpush1.msra.mxu0 %v274
    %4030 = vmatprep.subr.mxu0 %v279
    %4031 = vmatpush1.msra.mxu0 %v278
    %4032 = vmatprep.subr.mxu0 0.0
    %4033 = vmatpush1.msra.mxu0 0.0
    %4034 = vmatprep.subr.mxu0 0.0
    %4035 = vmatpush1.msra.mxu0 0.0
    %4036 = vmatprep.subr.mxu0 0.0
    %4037 = vmatpush1.msra.mxu0 0.0
    %4038 = vmatprep.subr.mxu0 0.0
    %4039 = vmatpush1.msra.mxu0 0.0
    %4040 = vmatprep.subr.mxu0 0.0
    %4041 = vmatpush1.msra.mxu0 0.0
    %4042 = vmatprep.subr.mxu0 0.0
    %4043 = vmatpush1.msra.mxu0 0.0
    %4044 = vmatprep.subr.mxu0 0.0
    %4045 = vmatpush1.msra.mxu0 0.0
    %4046 = vmatprep.subr.mxu0 0.0
    %4047 = vmatpush1.msra.mxu0 0.0
    %4048 = vmatprep.subr.mxu0 0.0
    %4049 = vmatpush1.msra.mxu0 0.0
    %4050 = vmatprep.subr.mxu0 0.0
    %4051 = vmatpush1.msra.mxu0 0.0
    %4052 = vmatprep.subr.mxu0 0.0
    %4053 = vmatpush1.msra.mxu0 0.0
    %4054 = vmatprep.subr.mxu0 0.0
    %4055 = vmatpush1.msra.mxu0 0.0
    %4056 = vmatprep.subr.mxu0 0.0
    %4057 = vmatpush1.msra.mxu0 0.0
    %4058 = vmatprep.subr.mxu0 0.0
    %4059 = vmatpush1.msra.mxu0 0.0
    %4060 = vmatprep.subr.mxu0 0.0
    %4061 = vmatpush1.msra.mxu0 0.0
    %4062 = vmatprep.subr.mxu0 0.0
    %4063 = vmatpush1.msra.mxu0 0.0
    %4064 = vmatprep.mubr.f32.mxu0 0.0
    %4065 = vmatmul.mubr.f32.gmra.mrb[0].mxu0 %v3926
    %v4066 = vpop.f32.mrb[0].mxu0
    %v4067 = vadd.f32 0.0, %v4066
    %v4068 = vpop.f32.mrb[0].mxu0
    %v4069 = vadd.f32 0.0, %v4068
    %4070 = vdwg.mxu0
    %4071 = vmatprep.subr.mxu0 %v153
    %4072 = vmatpush1.msra.mxu0 %v152
    %4073 = vmatprep.subr.mxu0 %v157
    %4074 = vmatpush1.msra.mxu0 %v156
    %4075 = vmatprep.subr.mxu0 %v161
    %4076 = vmatpush1.msra.mxu0 %v160
    %4077 = vmatprep.subr.mxu0 %v165
    %4078 = vmatpush1.msra.mxu0 %v164
    %4079 = vmatprep.subr.mxu0 %v169
    %4080 = vmatpush1.msra.mxu0 %v168
    %4081 = vmatprep.subr.mxu0 %v173
    %4082 = vmatpush1.msra.mxu0 %v172
    %4083 = vmatprep.subr.mxu0 %v177
    %4084 = vmatpush1.msra.mxu0 %v176
    %4085 = vmatprep.subr.mxu0 %v181
    %4086 = vmatpush1.msra.mxu0 %v180
    %4087 = vmatprep.subr.mxu0 %v185
    %4088 = vmatpush1.msra.mxu0 %v184
    %4089 = vmatprep.subr.mxu0 %v189
    %4090 = vmatpush1.msra.mxu0 %v188
    %4091 = vmatprep.subr.mxu0 %v193
    %4092 = vmatpush1.msra.mxu0 %v192
    %4093 = vmatprep.subr.mxu0 %v197
    %4094 = vmatpush1.msra.mxu0 %v196
    %4095 = vmatprep.subr.mxu0 %v201
    %4096 = vmatpush1.msra.mxu0 %v200
    %4097 = vmatprep.subr.mxu0 %v205
    %4098 = vmatpush1.msra.mxu0 %v204
    %4099 = vmatprep.subr.mxu0 %v209
    %4100 = vmatpush1.msra.mxu0 %v208
    %4101 = vmatprep.subr.mxu0 %v213
    %4102 = vmatpush1.msra.mxu0 %v212
    %4103 = vmatprep.subr.mxu0 0.0
    %4104 = vmatpush1.msra.mxu0 0.0
    %4105 = vmatprep.subr.mxu0 0.0
    %4106 = vmatpush1.msra.mxu0 0.0
    %4107 = vmatprep.subr.mxu0 0.0
    %4108 = vmatpush1.msra.mxu0 0.0
    %4109 = vmatprep.subr.mxu0 0.0
    %4110 = vmatpush1.msra.mxu0 0.0
    %4111 = vmatprep.subr.mxu0 0.0
    %4112 = vmatpush1.msra.mxu0 0.0
    %4113 = vmatprep.subr.mxu0 0.0
    %4114 = vmatpush1.msra.mxu0 0.0
    %4115 = vmatprep.subr.mxu0 0.0
    %4116 = vmatpush1.msra.mxu0 0.0
    %4117 = vmatprep.subr.mxu0 0.0
    %4118 = vmatpush1.msra.mxu0 0.0
    %4119 = vmatprep.subr.mxu0 0.0
    %4120 = vmatpush1.msra.mxu0 0.0
    %4121 = vmatprep.subr.mxu0 0.0
    %4122 = vmatpush1.msra.mxu0 0.0
    %4123 = vmatprep.subr.mxu0 0.0
    %4124 = vmatpush1.msra.mxu0 0.0
    %4125 = vmatprep.subr.mxu0 0.0
    %4126 = vmatpush1.msra.mxu0 0.0
    %4127 = vmatprep.subr.mxu0 0.0
    %4128 = vmatpush1.msra.mxu0 0.0
    %4129 = vmatprep.subr.mxu0 0.0
    %4130 = vmatpush1.msra.mxu0 0.0
    %4131 = vmatprep.subr.mxu0 0.0
    %4132 = vmatpush1.msra.mxu0 0.0
    %4133 = vmatprep.subr.mxu0 0.0
    %4134 = vmatpush1.msra.mxu0 0.0
    %4135 = vmatprep.mubr.f32.mxu0 0.0
    %4136 = vmatmul.mubr.f32.gmra.mrb[0].mxu0 %v3926
    %v4137 = vpop.f32.mrb[0].mxu0
    %v4138 = vadd.f32 %v3996, %v4137
    %v4139 = vpop.f32.mrb[0].mxu0
    %v4140 = vadd.f32 %v3998, %v4139
    %4141 = vdwg.mxu0
    %4142 = vmatprep.subr.mxu0 %v155
    %4143 = vmatpush1.msra.mxu0 %v154
    %4144 = vmatprep.subr.mxu0 %v159
    %4145 = vmatpush1.msra.mxu0 %v158
    %4146 = vmatprep.subr.mxu0 %v163
    %4147 = vmatpush1.msra.mxu0 %v162
    %4148 = vmatprep.subr.mxu0 %v167
    %4149 = vmatpush1.msra.mxu0 %v166
    %4150 = vmatprep.subr.mxu0 %v171
    %4151 = vmatpush1.msra.mxu0 %v170
    %4152 = vmatprep.subr.mxu0 %v175
    %4153 = vmatpush1.msra.mxu0 %v174
    %4154 = vmatprep.subr.mxu0 %v179
    %4155 = vmatpush1.msra.mxu0 %v178
    %4156 = vmatprep.subr.mxu0 %v183
    %4157 = vmatpush1.msra.mxu0 %v182
    %4158 = vmatprep.subr.mxu0 %v187
    %4159 = vmatpush1.msra.mxu0 %v186
    %4160 = vmatprep.subr.mxu0 %v191
    %4161 = vmatpush1.msra.mxu0 %v190
    %4162 = vmatprep.subr.mxu0 %v195
    %4163 = vmatpush1.msra.mxu0 %v194
    %4164 = vmatprep.subr.mxu0 %v199
    %4165 = vmatpush1.msra.mxu0 %v198
    %4166 = vmatprep.subr.mxu0 %v203
    %4167 = vmatpush1.msra.mxu0 %v202
    %4168 = vmatprep.subr.mxu0 %v207
    %4169 = vmatpush1.msra.mxu0 %v206
    %4170 = vmatprep.subr.mxu0 %v211
    %4171 = vmatpush1.msra.mxu0 %v210
    %4172 = vmatprep.subr.mxu0 %v215
    %4173 = vmatpush1.msra.mxu0 %v214
    %4174 = vmatprep.subr.mxu0 0.0
    %4175 = vmatpush1.msra.mxu0 0.0
    %4176 = vmatprep.subr.mxu0 0.0
    %4177 = vmatpush1.msra.mxu0 0.0
    %4178 = vmatprep.subr.mxu0 0.0
    %4179 = vmatpush1.msra.mxu0 0.0
    %4180 = vmatprep.subr.mxu0 0.0
    %4181 = vmatpush1.msra.mxu0 0.0
    %4182 = vmatprep.subr.mxu0 0.0
    %4183 = vmatpush1.msra.mxu0 0.0
    %4184 = vmatprep.subr.mxu0 0.0
    %4185 = vmatpush1.msra.mxu0 0.0
    %4186 = vmatprep.subr.mxu0 0.0
    %4187 = vmatpush1.msra.mxu0 0.0
    %4188 = vmatprep.subr.mxu0 0.0
    %4189 = vmatpush1.msra.mxu0 0.0
    %4190 = vmatprep.subr.mxu0 0.0
    %4191 = vmatpush1.msra.mxu0 0.0
    %4192 = vmatprep.subr.mxu0 0.0
    %4193 = vmatpush1.msra.mxu0 0.0
    %4194 = vmatprep.subr.mxu0 0.0
    %4195 = vmatpush1.msra.mxu0 0.0
    %4196 = vmatprep.subr.mxu0 0.0
    %4197 = vmatpush1.msra.mxu0 0.0
    %4198 = vmatprep.subr.mxu0 0.0
    %4199 = vmatpush1.msra.mxu0 0.0
    %4200 = vmatprep.subr.mxu0 0.0
    %4201 = vmatpush1.msra.mxu0 0.0
    %4202 = vmatprep.subr.mxu0 0.0
    %4203 = vmatpush1.msra.mxu0 0.0
    %4204 = vmatprep.subr.mxu0 0.0
    %4205 = vmatpush1.msra.mxu0 0.0
    %4206 = vmatprep.mubr.f32.mxu0 0.0
    %4207 = vmatmul.mubr.f32.gmra.mrb[0].mxu0 %v3926
    %v4208 = vpop.f32.mrb[0].mxu0
    %v4209 = vadd.f32 %v4067, %v4208
    %v4210 = vpop.f32.mrb[0].mxu0
    %v4211 = vadd.f32 %v4069, %v4210
    %4212 = vdwg.mxu0
    %v4213 = vadd.f32 %v4138, %v2029
    %v4214 = vadd.f32 %v4140, %v2033
    %v4215 = vadd.f32 %v4209, %v2037
    %v4216 = vadd.f32 %v4211, %v2041
    %v4217 = vxor.u32 %v4213, 2147483648
    %v4218 = vmul.f32 %v4217, 1.442695
    %v4219 = vpow.pop %v4218
    %v4220 = vadd.f32 %v4219, 1.0
    %v4221 = vrcp.pop %v4220
    %v4222 = vmul.f32 1.0, %v4221
    %v4223 = vxor.u32 %v4214, 2147483648
    %v4224 = vmul.f32 %v4223, 1.442695
    %v4225 = vpow.pop %v4224
    %v4226 = vadd.f32 %v4225, 1.0
    %v4227 = vrcp.pop %v4226
    %v4228 = vmul.f32 1.0, %v4227
    %v4229 = vtanh.pop %v4215
    %v4230 = vxor.u32 %v4216, 2147483648
    %v4231 = vmul.f32 %v4230, 1.442695
    %v4232 = vpow.pop %v4231
    %v4233 = vadd.f32 %v4232, 1.0
    %v4234 = vrcp.pop %v4233
    %v4235 = vmul.f32 1.0, %v4234
    %v4236 = vmul.f32 %v4228, %v3924
    %v4237 = vmul.f32 %v4222, %v4229
    %v4238 = vadd.f32 %v4236, %v4237
    %v4239 = vtanh.pop %v4238
    %v4240 = vmul.f32 %v4235, %v4239
    %s4241 = scalar_lea.vmem [#allocation3], 48
    %4242 = vst [vmem:[%s4241] sm:$0xff] %v4240
    %4243 = vmatprep.subr.mxu0 %v217
    %4244 = vmatpush1.msra.mxu0 %v216
    %4245 = vmatprep.subr.mxu0 %v221
    %4246 = vmatpush1.msra.mxu0 %v220
    %4247 = vmatprep.subr.mxu0 %v225
    %4248 = vmatpush1.msra.mxu0 %v224
    %4249 = vmatprep.subr.mxu0 %v229
    %4250 = vmatpush1.msra.mxu0 %v228
    %4251 = vmatprep.subr.mxu0 %v233
    %4252 = vmatpush1.msra.mxu0 %v232
    %4253 = vmatprep.subr.mxu0 %v237
    %4254 = vmatpush1.msra.mxu0 %v236
    %4255 = vmatprep.subr.mxu0 %v241
    %4256 = vmatpush1.msra.mxu0 %v240
    %4257 = vmatprep.subr.mxu0 %v245
    %4258 = vmatpush1.msra.mxu0 %v244
    %4259 = vmatprep.subr.mxu0 %v249
    %4260 = vmatpush1.msra.mxu0 %v248
    %4261 = vmatprep.subr.mxu0 %v253
    %4262 = vmatpush1.msra.mxu0 %v252
    %4263 = vmatprep.subr.mxu0 %v257
    %4264 = vmatpush1.msra.mxu0 %v256
    %4265 = vmatprep.subr.mxu0 %v261
    %4266 = vmatpush1.msra.mxu0 %v260
    %4267 = vmatprep.subr.mxu0 %v265
    %4268 = vmatpush1.msra.mxu0 %v264
    %4269 = vmatprep.subr.mxu0 %v269
    %4270 = vmatpush1.msra.mxu0 %v268
    %4271 = vmatprep.subr.mxu0 %v273
    %4272 = vmatpush1.msra.mxu0 %v272
    %4273 = vmatprep.subr.mxu0 %v277
    %4274 = vmatpush1.msra.mxu0 %v276
    %4275 = vmatprep.subr.mxu0 0.0
    %4276 = vmatpush1.msra.mxu0 0.0
    %4277 = vmatprep.subr.mxu0 0.0
    %4278 = vmatpush1.msra.mxu0 0.0
    %4279 = vmatprep.subr.mxu0 0.0
    %4280 = vmatpush1.msra.mxu0 0.0
    %4281 = vmatprep.subr.mxu0 0.0
    %4282 = vmatpush1.msra.mxu0 0.0
    %4283 = vmatprep.subr.mxu0 0.0
    %4284 = vmatpush1.msra.mxu0 0.0
    %4285 = vmatprep.subr.mxu0 0.0
    %4286 = vmatpush1.msra.mxu0 0.0
    %4287 = vmatprep.subr.mxu0 0.0
    %4288 = vmatpush1.msra.mxu0 0.0
    %4289 = vmatprep.subr.mxu0 0.0
    %4290 = vmatpush1.msra.mxu0 0.0
    %4291 = vmatprep.subr.mxu0 0.0
    %4292 = vmatpush1.msra.mxu0 0.0
    %4293 = vmatprep.subr.mxu0 0.0
    %4294 = vmatpush1.msra.mxu0 0.0
    %4295 = vmatprep.subr.mxu0 0.0
    %4296 = vmatpush1.msra.mxu0 0.0
    %4297 = vmatprep.subr.mxu0 0.0
    %4298 = vmatpush1.msra.mxu0 0.0
    %4299 = vmatprep.subr.mxu0 0.0
    %4300 = vmatpush1.msra.mxu0 0.0
    %4301 = vmatprep.subr.mxu0 0.0
    %4302 = vmatpush1.msra.mxu0 0.0
    %4303 = vmatprep.subr.mxu0 0.0
    %4304 = vmatpush1.msra.mxu0 0.0
    %4305 = vmatprep.subr.mxu0 0.0
    %4306 = vmatpush1.msra.mxu0 0.0
    %4307 = vmatprep.mubr.f32.mxu0 0.0
    %4308 = vmatmul.mubr.f32.gmra.mrb[0].mxu0 %v4240
    %v4309 = vpop.f32.mrb[0].mxu0
    %v4310 = vadd.f32 0.0, %v4309
    %v4311 = vpop.f32.mrb[0].mxu0
    %v4312 = vadd.f32 0.0, %v4311
    %4313 = vdwg.mxu0
    %4314 = vmatprep.subr.mxu0 %v219
    %4315 = vmatpush1.msra.mxu0 %v218
    %4316 = vmatprep.subr.mxu0 %v223
    %4317 = vmatpush1.msra.mxu0 %v222
    %4318 = vmatprep.subr.mxu0 %v227
    %4319 = vmatpush1.msra.mxu0 %v226
    %4320 = vmatprep.subr.mxu0 %v231
    %4321 = vmatpush1.msra.mxu0 %v230
    %4322 = vmatprep.subr.mxu0 %v235
    %4323 = vmatpush1.msra.mxu0 %v234
    %4324 = vmatprep.subr.mxu0 %v239
    %4325 = vmatpush1.msra.mxu0 %v238
    %4326 = vmatprep.subr.mxu0 %v243
    %4327 = vmatpush1.msra.mxu0 %v242
    %4328 = vmatprep.subr.mxu0 %v247
    %4329 = vmatpush1.msra.mxu0 %v246
    %4330 = vmatprep.subr.mxu0 %v251
    %4331 = vmatpush1.msra.mxu0 %v250
    %4332 = vmatprep.subr.mxu0 %v255
    %4333 = vmatpush1.msra.mxu0 %v254
    %4334 = vmatprep.subr.mxu0 %v259
    %4335 = vmatpush1.msra.mxu0 %v258
    %4336 = vmatprep.subr.mxu0 %v263
    %4337 = vmatpush1.msra.mxu0 %v262
    %4338 = vmatprep.subr.mxu0 %v267
    %4339 = vmatpush1.msra.mxu0 %v266
    %4340 = vmatprep.subr.mxu0 %v271
    %4341 = vmatpush1.msra.mxu0 %v270
    %4342 = vmatprep.subr.mxu0 %v275
    %4343 = vmatpush1.msra.mxu0 %v274
    %4344 = vmatprep.subr.mxu0 %v279
    %4345 = vmatpush1.msra.mxu0 %v278
    %4346 = vmatprep.subr.mxu0 0.0
    %4347 = vmatpush1.msra.mxu0 0.0
    %4348 = vmatprep.subr.mxu0 0.0
    %4349 = vmatpush1.msra.mxu0 0.0
    %4350 = vmatprep.subr.mxu0 0.0
    %4351 = vmatpush1.msra.mxu0 0.0
    %4352 = vmatprep.subr.mxu0 0.0
    %4353 = vmatpush1.msra.mxu0 0.0
    %4354 = vmatprep.subr.mxu0 0.0
    %4355 = vmatpush1.msra.mxu0 0.0
    %4356 = vmatprep.subr.mxu0 0.0
    %4357 = vmatpush1.msra.mxu0 0.0
    %4358 = vmatprep.subr.mxu0 0.0
    %4359 = vmatpush1.msra.mxu0 0.0
    %4360 = vmatprep.subr.mxu0 0.0
    %4361 = vmatpush1.msra.mxu0 0.0
    %4362 = vmatprep.subr.mxu0 0.0
    %4363 = vmatpush1.msra.mxu0 0.0
    %4364 = vmatprep.subr.mxu0 0.0
    %4365 = vmatpush1.msra.mxu0 0.0
    %4366 = vmatprep.subr.mxu0 0.0
    %4367 = vmatpush1.msra.mxu0 0.0
    %4368 = vmatprep.subr.mxu0 0.0
    %4369 = vmatpush1.msra.mxu0 0.0
    %4370 = vmatprep.subr.mxu0 0.0
    %4371 = vmatpush1.msra.mxu0 0.0
    %4372 = vmatprep.subr.mxu0 0.0
    %4373 = vmatpush1.msra.mxu0 0.0
    %4374 = vmatprep.subr.mxu0 0.0
    %4375 = vmatpush1.msra.mxu0 0.0
    %4376 = vmatprep.subr.mxu0 0.0
    %4377 = vmatpush1.msra.mxu0 0.0
    %4378 = vmatprep.mubr.f32.mxu0 0.0
    %4379 = vmatmul.mubr.f32.gmra.mrb[0].mxu0 %v4240
    %v4380 = vpop.f32.mrb[0].mxu0
    %v4381 = vadd.f32 0.0, %v4380
    %v4382 = vpop.f32.mrb[0].mxu0
    %v4383 = vadd.f32 0.0, %v4382
    %4384 = vdwg.mxu0
    %4385 = vmatprep.subr.mxu0 %v153
    %4386 = vmatpush1.msra.mxu0 %v152
    %4387 = vmatprep.subr.mxu0 %v157
    %4388 = vmatpush1.msra.mxu0 %v156
    %4389 = vmatprep.subr.mxu0 %v161
    %4390 = vmatpush1.msra.mxu0 %v160
    %4391 = vmatprep.subr.mxu0 %v165
    %4392 = vmatpush1.msra.mxu0 %v164
    %4393 = vmatprep.subr.mxu0 %v169
    %4394 = vmatpush1.msra.mxu0 %v168
    %4395 = vmatprep.subr.mxu0 %v173
    %4396 = vmatpush1.msra.mxu0 %v172
    %4397 = vmatprep.subr.mxu0 %v177
    %4398 = vmatpush1.msra.mxu0 %v176
    %4399 = vmatprep.subr.mxu0 %v181
    %4400 = vmatpush1.msra.mxu0 %v180
    %4401 = vmatprep.subr.mxu0 %v185
    %4402 = vmatpush1.msra.mxu0 %v184
    %4403 = vmatprep.subr.mxu0 %v189
    %4404 = vmatpush1.msra.mxu0 %v188
    %4405 = vmatprep.subr.mxu0 %v193
    %4406 = vmatpush1.msra.mxu0 %v192
    %4407 = vmatprep.subr.mxu0 %v197
    %4408 = vmatpush1.msra.mxu0 %v196
    %4409 = vmatprep.subr.mxu0 %v201
    %4410 = vmatpush1.msra.mxu0 %v200
    %4411 = vmatprep.subr.mxu0 %v205
    %4412 = vmatpush1.msra.mxu0 %v204
    %4413 = vmatprep.subr.mxu0 %v209
    %4414 = vmatpush1.msra.mxu0 %v208
    %4415 = vmatprep.subr.mxu0 %v213
    %4416 = vmatpush1.msra.mxu0 %v212
    %4417 = vmatprep.subr.mxu0 0.0
    %4418 = vmatpush1.msra.mxu0 0.0
    %4419 = vmatprep.subr.mxu0 0.0
    %4420 = vmatpush1.msra.mxu0 0.0
    %4421 = vmatprep.subr.mxu0 0.0
    %4422 = vmatpush1.msra.mxu0 0.0
    %4423 = vmatprep.subr.mxu0 0.0
    %4424 = vmatpush1.msra.mxu0 0.0
    %4425 = vmatprep.subr.mxu0 0.0
    %4426 = vmatpush1.msra.mxu0 0.0
    %4427 = vmatprep.subr.mxu0 0.0
    %4428 = vmatpush1.msra.mxu0 0.0
    %4429 = vmatprep.subr.mxu0 0.0
    %4430 = vmatpush1.msra.mxu0 0.0
    %4431 = vmatprep.subr.mxu0 0.0
    %4432 = vmatpush1.msra.mxu0 0.0
    %4433 = vmatprep.subr.mxu0 0.0
    %4434 = vmatpush1.msra.mxu0 0.0
    %4435 = vmatprep.subr.mxu0 0.0
    %4436 = vmatpush1.msra.mxu0 0.0
    %4437 = vmatprep.subr.mxu0 0.0
    %4438 = vmatpush1.msra.mxu0 0.0
    %4439 = vmatprep.subr.mxu0 0.0
    %4440 = vmatpush1.msra.mxu0 0.0
    %4441 = vmatprep.subr.mxu0 0.0
    %4442 = vmatpush1.msra.mxu0 0.0
    %4443 = vmatprep.subr.mxu0 0.0
    %4444 = vmatpush1.msra.mxu0 0.0
    %4445 = vmatprep.subr.mxu0 0.0
    %4446 = vmatpush1.msra.mxu0 0.0
    %4447 = vmatprep.subr.mxu0 0.0
    %4448 = vmatpush1.msra.mxu0 0.0
    %4449 = vmatprep.mubr.f32.mxu0 0.0
    %4450 = vmatmul.mubr.f32.gmra.mrb[0].mxu0 %v4240
    %v4451 = vpop.f32.mrb[0].mxu0
    %v4452 = vadd.f32 %v4310, %v4451
    %v4453 = vpop.f32.mrb[0].mxu0
    %v4454 = vadd.f32 %v4312, %v4453
    %4455 = vdwg.mxu0
    %4456 = vmatprep.subr.mxu0 %v155
    %4457 = vmatpush1.msra.mxu0 %v154
    %4458 = vmatprep.subr.mxu0 %v159
    %4459 = vmatpush1.msra.mxu0 %v158
    %4460 = vmatprep.subr.mxu0 %v163
    %4461 = vmatpush1.msra.mxu0 %v162
    %4462 = vmatprep.subr.mxu0 %v167
    %4463 = vmatpush1.msra.mxu0 %v166
    %4464 = vmatprep.subr.mxu0 %v171
    %4465 = vmatpush1.msra.mxu0 %v170
    %4466 = vmatprep.subr.mxu0 %v175
    %4467 = vmatpush1.msra.mxu0 %v174
    %4468 = vmatprep.subr.mxu0 %v179
    %4469 = vmatpush1.msra.mxu0 %v178
    %4470 = vmatprep.subr.mxu0 %v183
    %4471 = vmatpush1.msra.mxu0 %v182
    %4472 = vmatprep.subr.mxu0 %v187
    %4473 = vmatpush1.msra.mxu0 %v186
    %4474 = vmatprep.subr.mxu0 %v191
    %4475 = vmatpush1.msra.mxu0 %v190
    %4476 = vmatprep.subr.mxu0 %v195
    %4477 = vmatpush1.msra.mxu0 %v194
    %4478 = vmatprep.subr.mxu0 %v199
    %4479 = vmatpush1.msra.mxu0 %v198
    %4480 = vmatprep.subr.mxu0 %v203
    %4481 = vmatpush1.msra.mxu0 %v202
    %4482 = vmatprep.subr.mxu0 %v207
    %4483 = vmatpush1.msra.mxu0 %v206
    %4484 = vmatprep.subr.mxu0 %v211
    %4485 = vmatpush1.msra.mxu0 %v210
    %4486 = vmatprep.subr.mxu0 %v215
    %4487 = vmatpush1.msra.mxu0 %v214
    %4488 = vmatprep.subr.mxu0 0.0
    %4489 = vmatpush1.msra.mxu0 0.0
    %4490 = vmatprep.subr.mxu0 0.0
    %4491 = vmatpush1.msra.mxu0 0.0
    %4492 = vmatprep.subr.mxu0 0.0
    %4493 = vmatpush1.msra.mxu0 0.0
    %4494 = vmatprep.subr.mxu0 0.0
    %4495 = vmatpush1.msra.mxu0 0.0
    %4496 = vmatprep.subr.mxu0 0.0
    %4497 = vmatpush1.msra.mxu0 0.0
    %4498 = vmatprep.subr.mxu0 0.0
    %4499 = vmatpush1.msra.mxu0 0.0
    %4500 = vmatprep.subr.mxu0 0.0
    %4501 = vmatpush1.msra.mxu0 0.0
    %4502 = vmatprep.subr.mxu0 0.0
    %4503 = vmatpush1.msra.mxu0 0.0
    %4504 = vmatprep.subr.mxu0 0.0
    %4505 = vmatpush1.msra.mxu0 0.0
    %4506 = vmatprep.subr.mxu0 0.0
    %4507 = vmatpush1.msra.mxu0 0.0
    %4508 = vmatprep.subr.mxu0 0.0
    %4509 = vmatpush1.msra.mxu0 0.0
    %4510 = vmatprep.subr.mxu0 0.0
    %4511 = vmatpush1.msra.mxu0 0.0
    %4512 = vmatprep.subr.mxu0 0.0
    %4513 = vmatpush1.msra.mxu0 0.0
    %4514 = vmatprep.subr.mxu0 0.0
    %4515 = vmatpush1.msra.mxu0 0.0
    %4516 = vmatprep.subr.mxu0 0.0
    %4517 = vmatpush1.msra.mxu0 0.0
    %4518 = vmatprep.subr.mxu0 0.0
    %4519 = vmatpush1.msra.mxu0 0.0
    %4520 = vmatprep.mubr.f32.mxu0 0.0
    %4521 = vmatmul.mubr.f32.gmra.mrb[0].mxu0 %v4240
    %v4522 = vpop.f32.mrb[0].mxu0
    %v4523 = vadd.f32 %v4381, %v4522
    %v4524 = vpop.f32.mrb[0].mxu0
    %v4525 = vadd.f32 %v4383, %v4524
    %4526 = vdwg.mxu0
    %v4527 = vadd.f32 %v4452, %v2029
    %v4528 = vadd.f32 %v4454, %v2033
    %v4529 = vadd.f32 %v4523, %v2037
    %v4530 = vadd.f32 %v4525, %v2041
    %v4531 = vxor.u32 %v4527, 2147483648
    %v4532 = vmul.f32 %v4531, 1.442695
    %v4533 = vpow.pop %v4532
    %v4534 = vadd.f32 %v4533, 1.0
    %v4535 = vrcp.pop %v4534
    %v4536 = vmul.f32 1.0, %v4535
    %v4537 = vxor.u32 %v4528, 2147483648
    %v4538 = vmul.f32 %v4537, 1.442695
    %v4539 = vpow.pop %v4538
    %v4540 = vadd.f32 %v4539, 1.0
    %v4541 = vrcp.pop %v4540
    %v4542 = vmul.f32 1.0, %v4541
    %v4543 = vtanh.pop %v4529
    %v4544 = vxor.u32 %v4530, 2147483648
    %v4545 = vmul.f32 %v4544, 1.442695
    %v4546 = vpow.pop %v4545
    %v4547 = vadd.f32 %v4546, 1.0
    %v4548 = vrcp.pop %v4547
    %v4549 = vmul.f32 1.0, %v4548
    %v4550 = vmul.f32 %v4542, %v4238
    %v4551 = vmul.f32 %v4536, %v4543
    %v4552 = vadd.f32 %v4550, %v4551
    %v4553 = vtanh.pop %v4552
    %v4554 = vmul.f32 %v4549, %v4553
    %s4555 = scalar_lea.vmem [#allocation3], 56
    %4556 = vst [vmem:[%s4555] sm:$0xff] %v4554
    %v4557 = vld [vmem:[#allocation3] sm:$0xff]
    %v4558 = vld [vmem:[#allocation3 + $0x8] sm:$0xff]
    %v4559 = vld [vmem:[#allocation3 + $0x10] sm:$0xff]
    %v4560 = vld [vmem:[#allocation3 + $0x18] sm:$0xff]
    %v4561 = vld [vmem:[#allocation3 + $0x20] sm:$0xff]
    %v4562 = vld [vmem:[#allocation3 + $0x28] sm:$0xff]
    %v4563 = vld [vmem:[#allocation3 + $0x30] sm:$0xff]
    %v4564 = vld [vmem:[#allocation3 + $0x38] sm:$0xff]
    %v4565 = vld [vmem:[#allocation10] sm:$0xff]
    %v4566 = vld [vmem:[#allocation10 + $0x8] sm:$0xff]
    %v4567 = vld [vmem:[#allocation10 + $0x10] sm:$0xff]
    %v4568 = vld [vmem:[#allocation10 + $0x18] sm:$0xff]
    %v4569 = vld [vmem:[#allocation10 + $0x20] sm:$0xff]
    %v4570 = vld [vmem:[#allocation10 + $0x28] sm:$0xff]
    %v4571 = vld [vmem:[#allocation10 + $0x30] sm:$0xff]
    %v4572 = vld [vmem:[#allocation10 + $0x38] sm:$0xff]
    %v4573 = vld [vmem:[#allocation10 + $0x40] sm:$0xff]
    %v4574 = vld [vmem:[#allocation10 + $0x48] sm:$0xff]
    %v4575 = vld [vmem:[#allocation10 + $0x50] sm:$0xff]
    %v4576 = vld [vmem:[#allocation10 + $0x58] sm:$0xff]
    %v4577 = vld [vmem:[#allocation10 + $0x60] sm:$0xff]
    %v4578 = vld [vmem:[#allocation10 + $0x68] sm:$0xff]
    %v4579 = vld [vmem:[#allocation10 + $0x70] sm:$0xff]
    %v4580 = vld [vmem:[#allocation10 + $0x78] sm:$0xff]
    %v4581 = vld [vmem:[%s8] sm:$0x1]
    %v4583 = vlaneseq
    %v4584 = vshrl.u32 %v4583, 7
    %v4585 = vsub.s32 0, %v4584
    %v4586 = vrot.slane %v4581, %v4585
    %4588 = vmatprep.subr.mxu0 0.0
    %4589 = vmatpush1.msra.mxu0 %v4565
    %4590 = vmatprep.subr.mxu0 0.0
    %4591 = vmatpush1.msra.mxu0 %v4566
    %4592 = vmatprep.subr.mxu0 0.0
    %4593 = vmatpush1.msra.mxu0 %v4567
    %4594 = vmatprep.subr.mxu0 0.0
    %4595 = vmatpush1.msra.mxu0 %v4568
    %4596 = vmatprep.subr.mxu0 0.0
    %4597 = vmatpush1.msra.mxu0 %v4569
    %4598 = vmatprep.subr.mxu0 0.0
    %4599 = vmatpush1.msra.mxu0 %v4570
    %4600 = vmatprep.subr.mxu0 0.0
    %4601 = vmatpush1.msra.mxu0 %v4571
    %4602 = vmatprep.subr.mxu0 0.0
    %4603 = vmatpush1.msra.mxu0 %v4572
    %4604 = vmatprep.subr.mxu0 0.0
    %4605 = vmatpush1.msra.mxu0 %v4573
    %4606 = vmatprep.subr.mxu0 0.0
    %4607 = vmatpush1.msra.mxu0 %v4574
    %4608 = vmatprep.subr.mxu0 0.0
    %4609 = vmatpush1.msra.mxu0 %v4575
    %4610 = vmatprep.subr.mxu0 0.0
    %4611 = vmatpush1.msra.mxu0 %v4576
    %4612 = vmatprep.subr.mxu0 0.0
    %4613 = vmatpush1.msra.mxu0 %v4577
    %4614 = vmatprep.subr.mxu0 0.0
    %4615 = vmatpush1.msra.mxu0 %v4578
    %4616 = vmatprep.subr.mxu0 0.0
    %4617 = vmatpush1.msra.mxu0 %v4579
    %4618 = vmatprep.subr.mxu0 0.0
    %4619 = vmatpush1.msra.mxu0 %v4580
    %4620 = vmatprep.subr.mxu0 0.0
    %4621 = vmatpush1.msra.mxu0 0.0
    %4622 = vmatprep.subr.mxu0 0.0
    %4623 = vmatpush1.msra.mxu0 0.0
    %4624 = vmatprep.subr.mxu0 0.0
    %4625 = vmatpush1.msra.mxu0 0.0
    %4626 = vmatprep.subr.mxu0 0.0
    %4627 = vmatpush1.msra.mxu0 0.0
    %4628 = vmatprep.subr.mxu0 0.0
    %4629 = vmatpush1.msra.mxu0 0.0
    %4630 = vmatprep.subr.mxu0 0.0
    %4631 = vmatpush1.msra.mxu0 0.0
    %4632 = vmatprep.subr.mxu0 0.0
    %4633 = vmatpush1.msra.mxu0 0.0
    %4634 = vmatprep.subr.mxu0 0.0
    %4635 = vmatpush1.msra.mxu0 0.0
    %4636 = vmatprep.subr.mxu0 0.0
    %4637 = vmatpush1.msra.mxu0 0.0
    %4638 = vmatprep.subr.mxu0 0.0
    %4639 = vmatpush1.msra.mxu0 0.0
    %4640 = vmatprep.subr.mxu0 0.0
    %4641 = vmatpush1.msra.mxu0 0.0
    %4642 = vmatprep.subr.mxu0 0.0
    %4643 = vmatpush1.msra.mxu0 0.0
    %4644 = vmatprep.subr.mxu0 0.0
    %4645 = vmatpush1.msra.mxu0 0.0
    %4646 = vmatprep.subr.mxu0 0.0
    %4647 = vmatpush1.msra.mxu0 0.0
    %4648 = vmatprep.subr.mxu0 0.0
    %4649 = vmatpush1.msra.mxu0 0.0
    %4650 = vmatprep.subr.mxu0 0.0
    %4651 = vmatpush1.msra.mxu0 0.0
    %4652 = vmatprep.mubr.f32.mxu0 0.0
    %4653 = vmatmul.mubr.f32.gmra.mrb[0].mxu0 %v4557
    %v4654 = vpop.f32.mrb[0].mxu0
    %v4655 = vadd.f32 %v4586, %v4654
    %v4656 = vpop.f32.mrb[0].mxu0
    %4657 = vmatprep.mubr.f32.mxu0 0.0
    %4658 = vmatmul.mubr.f32.gmra.mrb[0].mxu0 %v4558
    %v4659 = vpop.f32.mrb[0].mxu0
    %v4660 = vadd.f32 %v4586, %v4659
    %v4661 = vpop.f32.mrb[0].mxu0
    %4662 = vmatprep.mubr.f32.mxu0 0.0
    %4663 = vmatmul.mubr.f32.gmra.mrb[0].mxu0 %v4559
    %v4664 = vpop.f32.mrb[0].mxu0
    %v4665 = vadd.f32 %v4586, %v4664
    %v4666 = vpop.f32.mrb[0].mxu0
    %4667 = vmatprep.mubr.f32.mxu0 0.0
    %4668 = vmatmul.mubr.f32.gmra.mrb[0].mxu0 %v4560
    %v4669 = vpop.f32.mrb[0].mxu0
    %v4670 = vadd.f32 %v4586, %v4669
    %v4671 = vpop.f32.mrb[0].mxu0
    %4672 = vmatprep.mubr.f32.mxu0 0.0
    %4673 = vmatmul.mubr.f32.gmra.mrb[0].mxu0 %v4561
    %v4674 = vpop.f32.mrb[0].mxu0
    %v4675 = vadd.f32 %v4586, %v4674
    %v4676 = vpop.f32.mrb[0].mxu0
    %4677 = vmatprep.mubr.f32.mxu0 0.0
    %4678 = vmatmul.mubr.f32.gmra.mrb[0].mxu0 %v4562
    %v4679 = vpop.f32.mrb[0].mxu0
    %v4680 = vadd.f32 %v4586, %v4679
    %v4681 = vpop.f32.mrb[0].mxu0
    %4682 = vmatprep.mubr.f32.mxu0 0.0
    %4683 = vmatmul.mubr.f32.gmra.mrb[0].mxu0 %v4563
    %v4684 = vpop.f32.mrb[0].mxu0
    %v4685 = vadd.f32 %v4586, %v4684
    %v4686 = vpop.f32.mrb[0].mxu0
    %4687 = vmatprep.mubr.f32.mxu0 0.0
    %4688 = vmatmul.mubr.f32.gmra.mrb[0].mxu0 %v4564
    %v4689 = vpop.f32.mrb[0].mxu0
    %v4690 = vadd.f32 %v4586, %v4689
    %v4691 = vpop.f32.mrb[0].mxu0
    %4692 = vdwg.mxu0
    %4693 = vst [vmem:[#allocation12] sm:$0xff] %v4655
    %4694 = vst [vmem:[#allocation12 + $0x8] sm:$0xff] %v4660
    %4695 = vst [vmem:[#allocation12 + $0x10] sm:$0xff] %v4665
    %4696 = vst [vmem:[#allocation12 + $0x18] sm:$0xff] %v4670
    %4697 = vst [vmem:[#allocation12 + $0x20] sm:$0xff] %v4675
    %4698 = vst [vmem:[#allocation12 + $0x28] sm:$0xff] %v4680
    %4699 = vst [vmem:[#allocation12 + $0x30] sm:$0xff] %v4685
    %4700 = vst [vmem:[#allocation12 + $0x38] sm:$0xff] %v4690
    // Predicated region
    $region54: #{tpu_custom_call.1} parent=1 // pred_check
      _
    $region55: #{tpu_custom_call.1} parent=1 // pred_check_branch
      %4702 = sbr.rel (0) target = $region57
    $region56: #{tpu_custom_call.1} parent=1 // pred_region
      %s4704 = ssub.s32 1024, 1024
      %4705 = vsyncadd [#allocation6], %s4704
      %s4706 = sshll.u32 [#allocation12], 4
      %s4707 = int_to_ptr.vmem [resolvable:$true] %s4706
      %4712 = dma.vmem_to_hbm [thread:$0]  %s4707, 1024, %s9, [#allocation6], 128, 128, 8
    $region57: #{tpu_custom_call.1} parent=1 // pred_fallthru
      _
    // Predicated region
    $region58: #{tpu_custom_call.1} parent=1 // pred_check
      _
    $region59: #{tpu_custom_call.1} parent=1 // pred_check_branch
      %4714 = sbr.rel (0) target = $region61
    $region60: #{tpu_custom_call.1} parent=1 // pred_region
      %4715 = dma.done [#allocation6], 1024
    $region61: #{tpu_custom_call.1} parent=1 // pred_fallthru
      _
    %4716 = vsyncpa [#allocation5], 1
    %4717 = vsyncpa [#allocation8], 1
    %4718 = vsyncpa [#allocation11], 1
    %4719 = vsyncpa [#allocation6], 1

</llo_original>
